<compile_context>
chip_gen: v7x
topology: tpu7x:2x2x1
jax: 0.10.0
libtpu: 0.0.40
codegen_flags: <defaults>
</compile_context>

<pallas_src>
import functools

import jax
import jax.numpy as jnp
from jax.experimental import pallas as pl
from jax.experimental.pallas import tpu as pltpu

EPS = 1e-5
NEG_SLOPE = 0.2
LANE = 128


def _round_up(x, m):
    return (x + m - 1) // m * m


def _leaky(x):
    return jnp.where(x >= 0, x, NEG_SLOPE * x)


def _compiler_params():
    return pltpu.CompilerParams(
        dimension_semantics=("parallel", "parallel"),
        vmem_limit_bytes=48 * 1024 * 1024,
    )


# ------------------------------ Pallas kernels ------------------------------

def _conv_stats_kernel(x_ref, w_ref, b_ref, y_ref, st_ref, *, kh, kw):
    """kh x kw conv (stride 1) + bias on one (TILE_H x W) row panel, plus
    per-channel partial sum / sum-of-squares for the BatchNorm fold.

    x_ref : (1, H+kh-1, W+kw-1, CinP) f32  whole padded image (DMA'd once per
                                           image; revisited across row tiles)
    w_ref : (kh*kw, CinP, CoutP)      bf16 per-tap weight matrices
    b_ref : (1, CoutP)                f32
    y_ref : (1, TILE_H, W, CoutP)     f32  raw conv output (pre-BN)
    st_ref: (1, 1, 2, CoutP)          f32  [sum, sum of squares] partials
    """
    _, tile_h, out_w, coutp = y_ref.shape
    r = pl.program_id(1)
    row0 = pl.multiple_of(r * tile_h, tile_h)

    acc = jnp.zeros((tile_h * out_w, coutp), jnp.float32)
    for dy in range(kh):                      # 9-tap (or 1-tap) accumulation
        for dx in range(kw):
            xs = x_ref[0, pl.ds(row0 + dy, tile_h), pl.ds(dx, out_w), :]
            xs = xs.reshape(tile_h * out_w, xs.shape[-1]).astype(jnp.bfloat16)
            acc = acc + jnp.dot(xs, w_ref[dy * kw + dx],
                                preferred_element_type=jnp.float32)
    acc = acc + b_ref[...]                    # (1, CoutP) broadcast, fp32

    y_ref[...] = acc.reshape(1, tile_h, out_w, coutp)
    st_ref[0, 0, 0:1, :] = jnp.sum(acc, axis=0, keepdims=True)
    st_ref[0, 0, 1:2, :] = jnp.sum(acc * acc, axis=0, keepdims=True)


def _bn_act_kernel(y_ref, sc_ref, sh_ref, o_ref):
    """Folded BatchNorm apply (y*scale + shift) + LeakyReLU(0.2), tiled."""
    y = y_ref[0]                                        # (TILE_H, W, C) f32
    sc = sc_ref[...].reshape(1, 1, -1)
    sh = sh_ref[...].reshape(1, 1, -1)
    o_ref[0] = _leaky(y * sc + sh)


def _fused_epilogue_kernel(y2_ref, ys_ref, s2_ref, t2_ref, ss_ref, ts_ref,
                           o_ref, z_scr, zh_scr):
    """BN-apply(conv2) + BN-apply(skip) + add + LeakyReLU + 2x2 avg pool."""
    th_o = o_ref.shape[1]                               # pooled rows in tile
    w_o = o_ref.shape[2]                                # pooled cols = W // 2

    s2 = s2_ref[...].reshape(1, 1, -1)
    t2 = t2_ref[...].reshape(1, 1, -1)
    ss = ss_ref[...].reshape(1, 1, -1)
    ts = ts_ref[...].reshape(1, 1, -1)

    z = (y2_ref[0] * s2 + t2) + (ys_ref[0] * ss + ts)   # (2*th_o, W, C) f32
    z_scr[...] = _leaky(z)

    # 2x2 average pool: pair adjacent rows, then pair adjacent columns using
    # strided VMEM reads (pl.ds with stride) — no layout gather through HBM.
    zh_scr[...] = z_scr[pl.ds(0, th_o, 2)] + z_scr[pl.ds(1, th_o, 2)]
    o_ref[0] = 0.25 * (zh_scr[:, pl.ds(0, w_o, 2), :] +
                       zh_scr[:, pl.ds(1, w_o, 2), :])


# --------------------------- pallas_call wrappers ----------------------------

def conv_bn_stats(x_pad, w_taps, bias, *, kh, kw, tile_h):
    """Tiled conv(+bias); returns raw output and per-tile BN stat partials."""
    n, hp, wp, cinp = x_pad.shape
    H, W = hp - (kh - 1), wp - (kw - 1)
    coutp = w_taps.shape[-1]
    assert H % tile_h == 0
    R = H // tile_h
    kern = functools.partial(_conv_stats_kernel, kh=kh, kw=kw)
    y, st = pl.pallas_call(
        kern,
        grid=(n, R),
        in_specs=[
            pl.BlockSpec((1, hp, wp, cinp), lambda i, r: (i, 0, 0, 0)),
            pl.BlockSpec((kh * kw, cinp, coutp), lambda i, r: (0, 0, 0)),
            pl.BlockSpec((1, coutp), lambda i, r: (0, 0)),
        ],
        out_specs=[
            pl.BlockSpec((1, tile_h, W, coutp), lambda i, r: (i, r, 0, 0)),
            pl.BlockSpec((1, 1, 2, coutp), lambda i, r: (i, r, 0, 0)),
        ],
        out_shape=[
            jax.ShapeDtypeStruct((n, H, W, coutp), jnp.float32),
            jax.ShapeDtypeStruct((n, R, 2, coutp), jnp.float32),
        ],
        compiler_params=_compiler_params(),
    )(x_pad, w_taps, bias)
    return y, st


def bn_act(y_raw, scale, shift, *, tile_h):
    n, H, W, c = y_raw.shape
    R = H // tile_h
    return pl.pallas_call(
        _bn_act_kernel,
        grid=(n, R),
        in_specs=[
            pl.BlockSpec((1, tile_h, W, c), lambda i, r: (i, r, 0, 0)),
            pl.BlockSpec((1, c), lambda i, r: (0, 0)),
            pl.BlockSpec((1, c), lambda i, r: (0, 0)),
        ],
        out_specs=pl.BlockSpec((1, tile_h, W, c), lambda i, r: (i, r, 0, 0)),
        out_shape=jax.ShapeDtypeStruct((n, H, W, c), jnp.float32),
        compiler_params=_compiler_params(),
    )(y_raw, scale, shift)


def fused_epilogue(y2_raw, ys_raw, s2, t2, ss, ts, *, tile_ho):
    n, H, W, c = y2_raw.shape
    Ho, Wo = H // 2, W // 2
    assert Ho % tile_ho == 0
    R = Ho // tile_ho
    return pl.pallas_call(
        _fused_epilogue_kernel,
        grid=(n, R),
        in_specs=[
            pl.BlockSpec((1, 2 * tile_ho, W, c), lambda i, r: (i, r, 0, 0)),
            pl.BlockSpec((1, 2 * tile_ho, W, c), lambda i, r: (i, r, 0, 0)),
            pl.BlockSpec((1, c), lambda i, r: (0, 0)),
            pl.BlockSpec((1, c), lambda i, r: (0, 0)),
            pl.BlockSpec((1, c), lambda i, r: (0, 0)),
            pl.BlockSpec((1, c), lambda i, r: (0, 0)),
        ],
        out_specs=pl.BlockSpec((1, tile_ho, Wo, c), lambda i, r: (i, r, 0, 0)),
        out_shape=jax.ShapeDtypeStruct((n, Ho, Wo, c), jnp.float32),
        scratch_shapes=[
            pltpu.VMEM((2 * tile_ho, W, c), jnp.float32),
            pltpu.VMEM((tile_ho, W, c), jnp.float32),
        ],
        compiler_params=_compiler_params(),
    )(y2_raw, ys_raw, s2, t2, ss, ts)


# ------------------------------ glue (plain JAX) -----------------------------

def _bn_fold(stats, gamma, beta, count, coutp):
    """Reduce per-tile [sum, sumsq] partials -> fused (scale, shift) vectors."""
    s = jnp.sum(stats, axis=(0, 1))                     # (2, CoutP) fp32
    mean = s[0] / count
    var = jnp.maximum(s[1] / count - mean * mean, 0.0)
    g = jnp.zeros((coutp,), jnp.float32).at[:gamma.shape[0]].set(gamma)
    b = jnp.zeros((coutp,), jnp.float32).at[:beta.shape[0]].set(beta)
    scale = g * jax.lax.rsqrt(var + EPS)
    shift = b - mean * scale
    return scale.reshape(1, coutp), shift.reshape(1, coutp)


def residual_block_pallas(x_nchw, p, *, tile_h=8):
    N, cin, H, W = x_nchw.shape
    cout = p["w2"].shape[0]
    cinp = _round_up(cin, LANE)                 # lane-dense channel padding
    coutp = _round_up(cout, LANE)
    assert tile_h % 2 == 0 and H % tile_h == 0 and W % 8 == 0
    count = float(N * H * W)

    x = jnp.transpose(x_nchw, (0, 2, 3, 1)).astype(jnp.float32)    # NHWC
    x = jnp.pad(x, ((0, 0), (0, 0), (0, 0), (0, cinp - cin)))      # pad C

    def prep_w(w, co_p):                        # OIHW -> (kh*kw, CinP, CoutP)
        co, ci, kh, kw = w.shape
        wt = jnp.transpose(w, (2, 3, 1, 0)).reshape(kh * kw, ci, co)
        wt = jnp.pad(wt, ((0, 0), (0, cinp - ci), (0, co_p - co)))
        return wt.astype(jnp.bfloat16)          # MXU operands in bf16

    def prep_b(b, co_p):
        return jnp.pad(b, (0, co_p - b.shape[0])).astype(jnp.float32) \
                  .reshape(1, co_p)

    # skip_block: 1x1 conv + BN (no activation) — pad = 0
    ys_raw, st_s = conv_bn_stats(x, prep_w(p["ws"], coutp),
                                 prep_b(p["bs"], coutp),
                                 kh=1, kw=1, tile_h=tile_h)
    sc_s, sh_s = _bn_fold(st_s, p["gs"], p["betas"], count, coutp)

    # conv_block1: 3x3 conv + BN + LeakyReLU(0.2)
    x_sp = jnp.pad(x, ((0, 0), (1, 1), (1, 1), (0, 0)))
    y1_raw, st_1 = conv_bn_stats(x_sp, prep_w(p["w1"], cinp),
                                 prep_b(p["b1"], cinp),
                                 kh=3, kw=3, tile_h=tile_h)
    sc_1, sh_1 = _bn_fold(st_1, p["g1"], p["beta1"], count, cinp)
    a1 = bn_act(y1_raw, sc_1, sh_1, tile_h=tile_h)       # (N, H, W, CinP)

    # conv_block2: 3x3 conv + BN (activation fused into the epilogue)
    a1_sp = jnp.pad(a1, ((0, 0), (1, 1), (1, 1), (0, 0)))
    y2_raw, st_2 = conv_bn_stats(a1_sp, prep_w(p["w2"], coutp),
                                 prep_b(p["b2"], coutp),
                                 kh=3, kw=3, tile_h=tile_h)
    sc_2, sh_2 = _bn_fold(st_2, p["g2"], p["beta2"], count, coutp)

    # fused: BN-apply(y2) + BN-apply(skip) + add + LeakyReLU + AvgPool2d(2)
    out = fused_epilogue(y2_raw, ys_raw, sc_2, sh_2, sc_s, sh_s,
                         tile_ho=tile_h // 2)
    out = out[..., :cout]                                # drop channel padding
    return jnp.transpose(out, (0, 3, 1, 2))              # NCHW


# ----------------------------- pure-JAX reference ----------------------------

def _ref_conv_bn(x, w, b, g, beta, pad, apply_act):
    y = jax.lax.conv_general_dilated(
        x, w, window_strides=(1, 1), padding=[(pad, pad), (pad, pad)],
        dimension_numbers=("NCHW", "OIHW", "NCHW"))
    y = y + b.reshape(1, -1, 1, 1)
    mean = jnp.mean(y, axis=(0, 2, 3), keepdims=True)
    var = jnp.mean((y - mean) ** 2, axis=(0, 2, 3), keepdims=True)
    y = (y - mean) * jax.lax.rsqrt(var + EPS)
    y = y * g.reshape(1, -1, 1, 1) + beta.reshape(1, -1, 1, 1)
    if apply_act:
        y = jnp.where(y >= 0, y, NEG_SLOPE * y)
    return y


def residual_block_ref(x, p):
    res = _ref_conv_bn(x, p["ws"], p["bs"], p["gs"], p["betas"], 0, False)
    y = _ref_conv_bn(x, p["w1"], p["b1"], p["g1"], p["beta1"], 1, True)
    y = _ref_conv_bn(y, p["w2"], p["b2"], p["g2"], p["beta2"], 1, False)
    y = y + res
    y = jnp.where(y >= 0, y, NEG_SLOPE * y)
    N, C, H, W = y.shape
    return y.reshape(N, C, H // 2, 2, W // 2, 2).mean(axis=(3, 5))


# ----------------------------- parameters & main -----------------------------

def make_params(key, cin, cout):
    ks = jax.random.split(key, 8)
    f32 = jnp.float32
    return {
        # conv_block1: Conv2d(cin, cin, 3, pad=1) + BatchNorm2d(cin) + LeakyReLU
        "w1": 0.02 * jax.random.normal(ks[0], (cin, cin, 3, 3), f32),
        "b1": 0.02 * jax.random.normal(ks[1], (cin,), f32),
        "g1": 1.0 + 0.02 * jax.random.normal(ks[2], (cin,), f32),
        "beta1": jnp.zeros((cin,), f32),
        # conv_block2: Conv2d(cin, cout, 3, pad=1) + BatchNorm2d(cout)
        "w2": 0.02 * jax.random.normal(ks[3], (cout, cin, 3, 3), f32),
        "b2": 0.02 * jax.random.normal(ks[4], (cout,), f32),
        "g2": 1.0 + 0.02 * jax.random.normal(ks[5], (cout,), f32),
        "beta2": jnp.zeros((cout,), f32),
        # skip_block: Conv2d(cin, cout, 1) + BatchNorm2d(cout)
        "ws": 0.02 * jax.random.normal(ks[6], (cout, cin, 1, 1), f32),
        "bs": 0.02 * jax.random.normal(ks[7], (cout,), f32),
        "gs": jnp.ones((cout,), f32),
        "betas": jnp.zeros((cout,), f32),
    }


if __name__ == "__main__":
    N, Cin, Cout, H, W = 2, 4, 8, 16, 16
    key = jax.random.PRNGKey(0)
    kx, kp = jax.random.split(key)
    x = jax.random.normal(kx, (N, Cin, H, W), jnp.float32)
    params = make_params(kp, Cin, Cout)

    out = jax.block_until_ready(jax.jit(residual_block_pallas)(x, params))
    assert out.shape == (N, Cout, H // 2, W // 2), out.shape

    ref = residual_block_ref(x, params)
    err = float(jnp.max(jnp.abs(out - ref)))
    assert bool(jnp.isfinite(out).all()) and err < 5e-2, f"max abs err = {err}"
    print("KERNEL_OK")
</pallas_src>

<mosaic_0001>
module attributes {stable_mosaic.version = 11 : i64} {
  func.func @_conv_stats_kernel(%arg0: i32, %arg1: i32, %arg2: memref<1x18x18x128xf32, #tpu.memory_space<vmem>>, %arg3: memref<9x128x128xbf16, #tpu.memory_space<vmem>>, %arg4: memref<1x128xf32, #tpu.memory_space<vmem>>, %arg5: memref<1x8x16x128xf32, #tpu.memory_space<vmem>>, %arg6: memref<1x1x2x128xf32, #tpu.memory_space<vmem>>) attributes {dimension_semantics = [#tpu.dimension_semantics<parallel>, #tpu.dimension_semantics<parallel>], iteration_bounds = array<i64: 2, 2>, scalar_prefetch = 0 : i64, scratch_operands = 0 : i64, tpu.core_type = #tpu.core_type<tc>, window_params = [{transform_indices = @transform_0, window_bounds = array<i64: 1, 18, 18, 128>}, {pipeline_mode = #tpu.pipeline_mode<synchronous>, transform_indices = @transform_1, window_bounds = array<i64: 9, 128, 128>}, {pipeline_mode = #tpu.pipeline_mode<synchronous>, transform_indices = @transform_2, window_bounds = array<i64: 1, 128>}, {transform_indices = @transform_3, window_bounds = array<i64: 1, 8, 16, 128>}, {transform_indices = @transform_4, window_bounds = array<i64: 1, 1, 2, 128>}]} {
    %c8_i32 = arith.constant 8 : i32
    %0 = arith.muli %arg1, %c8_i32 : i32
    %1 = tpu.assume_multiple %0, 8 : i32
    %cst = arith.constant 0.000000e+00 : f32
    %2 = vector.broadcast %cst : f32 to vector<128x128xf32>
    %c0_i32 = arith.constant 0 : i32
    %3 = arith.addi %1, %c0_i32 : i32
    %c0 = arith.constant 0 : index
    %4 = arith.index_cast %3 : i32 to index
    %c0_0 = arith.constant 0 : index
    %c0_1 = arith.constant 0 : index
    %5 = vector.load %arg2[%c0, %4, %c0_0, %c0_1] : memref<1x18x18x128xf32, #tpu.memory_space<vmem>>, vector<1x8x16x128xf32>
    %6 = vector.shape_cast %5 : vector<1x8x16x128xf32> to vector<8x16x128xf32>
    %7 = vector.shape_cast %6 : vector<8x16x128xf32> to vector<128x128xf32>
    %8 = arith.truncf %7 : vector<128x128xf32> to vector<128x128xbf16>
    %c0_2 = arith.constant 0 : index
    %c0_3 = arith.constant 0 : index
    %c0_4 = arith.constant 0 : index
    %9 = vector.load %arg3[%c0_2, %c0_3, %c0_4] : memref<9x128x128xbf16, #tpu.memory_space<vmem>>, vector<1x128x128xbf16>
    %10 = vector.shape_cast %9 : vector<1x128x128xbf16> to vector<128x128xbf16>
    %cst_5 = arith.constant dense<0.000000e+00> : vector<128x128xf32>
    %11 = tpu.matmul %8, %10, %cst_5 {dimension_numbers = #tpu.dot_dimension_numbers<[1], [0], [0], [1], [0, 0, 1, 1], [], []>} : vector<128x128xbf16>, vector<128x128xbf16>, vector<128x128xf32> -> vector<128x128xf32>
    %12 = arith.addf %2, %11 : vector<128x128xf32>
    %c0_i32_6 = arith.constant 0 : i32
    %13 = arith.addi %1, %c0_i32_6 : i32
    %c0_7 = arith.constant 0 : index
    %14 = arith.index_cast %13 : i32 to index
    %c1 = arith.constant 1 : index
    %c0_8 = arith.constant 0 : index
    %15 = vector.load %arg2[%c0_7, %14, %c1, %c0_8] : memref<1x18x18x128xf32, #tpu.memory_space<vmem>>, vector<1x8x16x128xf32>
    %16 = vector.shape_cast %15 : vector<1x8x16x128xf32> to vector<8x16x128xf32>
    %17 = vector.shape_cast %16 : vector<8x16x128xf32> to vector<128x128xf32>
    %18 = arith.truncf %17 : vector<128x128xf32> to vector<128x128xbf16>
    %c1_9 = arith.constant 1 : index
    %c0_10 = arith.constant 0 : index
    %c0_11 = arith.constant 0 : index
    %19 = vector.load %arg3[%c1_9, %c0_10, %c0_11] : memref<9x128x128xbf16, #tpu.memory_space<vmem>>, vector<1x128x128xbf16>
    %20 = vector.shape_cast %19 : vector<1x128x128xbf16> to vector<128x128xbf16>
    %cst_12 = arith.constant dense<0.000000e+00> : vector<128x128xf32>
    %21 = tpu.matmul %18, %20, %cst_12 {dimension_numbers = #tpu.dot_dimension_numbers<[1], [0], [0], [1], [0, 0, 1, 1], [], []>} : vector<128x128xbf16>, vector<128x128xbf16>, vector<128x128xf32> -> vector<128x128xf32>
    %22 = arith.addf %12, %21 : vector<128x128xf32>
    %c0_i32_13 = arith.constant 0 : i32
    %23 = arith.addi %1, %c0_i32_13 : i32
    %c0_14 = arith.constant 0 : index
    %24 = arith.index_cast %23 : i32 to index
    %c2 = arith.constant 2 : index
    %c0_15 = arith.constant 0 : index
    %25 = vector.load %arg2[%c0_14, %24, %c2, %c0_15] : memref<1x18x18x128xf32, #tpu.memory_space<vmem>>, vector<1x8x16x128xf32>
    %26 = vector.shape_cast %25 : vector<1x8x16x128xf32> to vector<8x16x128xf32>
    %27 = vector.shape_cast %26 : vector<8x16x128xf32> to vector<128x128xf32>
    %28 = arith.truncf %27 : vector<128x128xf32> to vector<128x128xbf16>
    %c2_16 = arith.constant 2 : index
    %c0_17 = arith.constant 0 : index
    %c0_18 = arith.constant 0 : index
    %29 = vector.load %arg3[%c2_16, %c0_17, %c0_18] : memref<9x128x128xbf16, #tpu.memory_space<vmem>>, vector<1x128x128xbf16>
    %30 = vector.shape_cast %29 : vector<1x128x128xbf16> to vector<128x128xbf16>
    %cst_19 = arith.constant dense<0.000000e+00> : vector<128x128xf32>
    %31 = tpu.matmul %28, %30, %cst_19 {dimension_numbers = #tpu.dot_dimension_numbers<[1], [0], [0], [1], [0, 0, 1, 1], [], []>} : vector<128x128xbf16>, vector<128x128xbf16>, vector<128x128xf32> -> vector<128x128xf32>
    %32 = arith.addf %22, %31 : vector<128x128xf32>
    %c1_i32 = arith.constant 1 : i32
    %33 = arith.addi %1, %c1_i32 : i32
    %c0_20 = arith.constant 0 : index
    %34 = arith.index_cast %33 : i32 to index
    %c0_21 = arith.constant 0 : index
    %c0_22 = arith.constant 0 : index
    %35 = vector.load %arg2[%c0_20, %34, %c0_21, %c0_22] : memref<1x18x18x128xf32, #tpu.memory_space<vmem>>, vector<1x8x16x128xf32>
    %36 = vector.shape_cast %35 : vector<1x8x16x128xf32> to vector<8x16x128xf32>
    %37 = vector.shape_cast %36 : vector<8x16x128xf32> to vector<128x128xf32>
    %38 = arith.truncf %37 : vector<128x128xf32> to vector<128x128xbf16>
    %c3 = arith.constant 3 : index
    %c0_23 = arith.constant 0 : index
    %c0_24 = arith.constant 0 : index
    %39 = vector.load %arg3[%c3, %c0_23, %c0_24] : memref<9x128x128xbf16, #tpu.memory_space<vmem>>, vector<1x128x128xbf16>
    %40 = vector.shape_cast %39 : vector<1x128x128xbf16> to vector<128x128xbf16>
    %cst_25 = arith.constant dense<0.000000e+00> : vector<128x128xf32>
    %41 = tpu.matmul %38, %40, %cst_25 {dimension_numbers = #tpu.dot_dimension_numbers<[1], [0], [0], [1], [0, 0, 1, 1], [], []>} : vector<128x128xbf16>, vector<128x128xbf16>, vector<128x128xf32> -> vector<128x128xf32>
    %42 = arith.addf %32, %41 : vector<128x128xf32>
    %c1_i32_26 = arith.constant 1 : i32
    %43 = arith.addi %1, %c1_i32_26 : i32
    %c0_27 = arith.constant 0 : index
    %44 = arith.index_cast %43 : i32 to index
    %c1_28 = arith.constant 1 : index
    %c0_29 = arith.constant 0 : index
    %45 = vector.load %arg2[%c0_27, %44, %c1_28, %c0_29] : memref<1x18x18x128xf32, #tpu.memory_space<vmem>>, vector<1x8x16x128xf32>
    %46 = vector.shape_cast %45 : vector<1x8x16x128xf32> to vector<8x16x128xf32>
    %47 = vector.shape_cast %46 : vector<8x16x128xf32> to vector<128x128xf32>
    %48 = arith.truncf %47 : vector<128x128xf32> to vector<128x128xbf16>
    %c4 = arith.constant 4 : index
    %c0_30 = arith.constant 0 : index
    %c0_31 = arith.constant 0 : index
    %49 = vector.load %arg3[%c4, %c0_30, %c0_31] : memref<9x128x128xbf16, #tpu.memory_space<vmem>>, vector<1x128x128xbf16>
    %50 = vector.shape_cast %49 : vector<1x128x128xbf16> to vector<128x128xbf16>
    %cst_32 = arith.constant dense<0.000000e+00> : vector<128x128xf32>
    %51 = tpu.matmul %48, %50, %cst_32 {dimension_numbers = #tpu.dot_dimension_numbers<[1], [0], [0], [1], [0, 0, 1, 1], [], []>} : vector<128x128xbf16>, vector<128x128xbf16>, vector<128x128xf32> -> vector<128x128xf32>
    %52 = arith.addf %42, %51 : vector<128x128xf32>
    %c1_i32_33 = arith.constant 1 : i32
    %53 = arith.addi %1, %c1_i32_33 : i32
    %c0_34 = arith.constant 0 : index
    %54 = arith.index_cast %53 : i32 to index
    %c2_35 = arith.constant 2 : index
    %c0_36 = arith.constant 0 : index
    %55 = vector.load %arg2[%c0_34, %54, %c2_35, %c0_36] : memref<1x18x18x128xf32, #tpu.memory_space<vmem>>, vector<1x8x16x128xf32>
    %56 = vector.shape_cast %55 : vector<1x8x16x128xf32> to vector<8x16x128xf32>
    %57 = vector.shape_cast %56 : vector<8x16x128xf32> to vector<128x128xf32>
    %58 = arith.truncf %57 : vector<128x128xf32> to vector<128x128xbf16>
    %c5 = arith.constant 5 : index
    %c0_37 = arith.constant 0 : index
    %c0_38 = arith.constant 0 : index
    %59 = vector.load %arg3[%c5, %c0_37, %c0_38] : memref<9x128x128xbf16, #tpu.memory_space<vmem>>, vector<1x128x128xbf16>
    %60 = vector.shape_cast %59 : vector<1x128x128xbf16> to vector<128x128xbf16>
    %cst_39 = arith.constant dense<0.000000e+00> : vector<128x128xf32>
    %61 = tpu.matmul %58, %60, %cst_39 {dimension_numbers = #tpu.dot_dimension_numbers<[1], [0], [0], [1], [0, 0, 1, 1], [], []>} : vector<128x128xbf16>, vector<128x128xbf16>, vector<128x128xf32> -> vector<128x128xf32>
    %62 = arith.addf %52, %61 : vector<128x128xf32>
    %c2_i32 = arith.constant 2 : i32
    %63 = arith.addi %1, %c2_i32 : i32
    %c0_40 = arith.constant 0 : index
    %64 = arith.index_cast %63 : i32 to index
    %c0_41 = arith.constant 0 : index
    %c0_42 = arith.constant 0 : index
    %65 = vector.load %arg2[%c0_40, %64, %c0_41, %c0_42] : memref<1x18x18x128xf32, #tpu.memory_space<vmem>>, vector<1x8x16x128xf32>
    %66 = vector.shape_cast %65 : vector<1x8x16x128xf32> to vector<8x16x128xf32>
    %67 = vector.shape_cast %66 : vector<8x16x128xf32> to vector<128x128xf32>
    %68 = arith.truncf %67 : vector<128x128xf32> to vector<128x128xbf16>
    %c6 = arith.constant 6 : index
    %c0_43 = arith.constant 0 : index
    %c0_44 = arith.constant 0 : index
    %69 = vector.load %arg3[%c6, %c0_43, %c0_44] : memref<9x128x128xbf16, #tpu.memory_space<vmem>>, vector<1x128x128xbf16>
    %70 = vector.shape_cast %69 : vector<1x128x128xbf16> to vector<128x128xbf16>
    %cst_45 = arith.constant dense<0.000000e+00> : vector<128x128xf32>
    %71 = tpu.matmul %68, %70, %cst_45 {dimension_numbers = #tpu.dot_dimension_numbers<[1], [0], [0], [1], [0, 0, 1, 1], [], []>} : vector<128x128xbf16>, vector<128x128xbf16>, vector<128x128xf32> -> vector<128x128xf32>
    %72 = arith.addf %62, %71 : vector<128x128xf32>
    %c2_i32_46 = arith.constant 2 : i32
    %73 = arith.addi %1, %c2_i32_46 : i32
    %c0_47 = arith.constant 0 : index
    %74 = arith.index_cast %73 : i32 to index
    %c1_48 = arith.constant 1 : index
    %c0_49 = arith.constant 0 : index
    %75 = vector.load %arg2[%c0_47, %74, %c1_48, %c0_49] : memref<1x18x18x128xf32, #tpu.memory_space<vmem>>, vector<1x8x16x128xf32>
    %76 = vector.shape_cast %75 : vector<1x8x16x128xf32> to vector<8x16x128xf32>
    %77 = vector.shape_cast %76 : vector<8x16x128xf32> to vector<128x128xf32>
    %78 = arith.truncf %77 : vector<128x128xf32> to vector<128x128xbf16>
    %c7 = arith.constant 7 : index
    %c0_50 = arith.constant 0 : index
    %c0_51 = arith.constant 0 : index
    %79 = vector.load %arg3[%c7, %c0_50, %c0_51] : memref<9x128x128xbf16, #tpu.memory_space<vmem>>, vector<1x128x128xbf16>
    %80 = vector.shape_cast %79 : vector<1x128x128xbf16> to vector<128x128xbf16>
    %cst_52 = arith.constant dense<0.000000e+00> : vector<128x128xf32>
    %81 = tpu.matmul %78, %80, %cst_52 {dimension_numbers = #tpu.dot_dimension_numbers<[1], [0], [0], [1], [0, 0, 1, 1], [], []>} : vector<128x128xbf16>, vector<128x128xbf16>, vector<128x128xf32> -> vector<128x128xf32>
    %82 = arith.addf %72, %81 : vector<128x128xf32>
    %c2_i32_53 = arith.constant 2 : i32
    %83 = arith.addi %1, %c2_i32_53 : i32
    %c0_54 = arith.constant 0 : index
    %84 = arith.index_cast %83 : i32 to index
    %c2_55 = arith.constant 2 : index
    %c0_56 = arith.constant 0 : index
    %85 = vector.load %arg2[%c0_54, %84, %c2_55, %c0_56] : memref<1x18x18x128xf32, #tpu.memory_space<vmem>>, vector<1x8x16x128xf32>
    %86 = vector.shape_cast %85 : vector<1x8x16x128xf32> to vector<8x16x128xf32>
    %87 = vector.shape_cast %86 : vector<8x16x128xf32> to vector<128x128xf32>
    %88 = arith.truncf %87 : vector<128x128xf32> to vector<128x128xbf16>
    %c8 = arith.constant 8 : index
    %c0_57 = arith.constant 0 : index
    %c0_58 = arith.constant 0 : index
    %89 = vector.load %arg3[%c8, %c0_57, %c0_58] : memref<9x128x128xbf16, #tpu.memory_space<vmem>>, vector<1x128x128xbf16>
    %90 = vector.shape_cast %89 : vector<1x128x128xbf16> to vector<128x128xbf16>
    %cst_59 = arith.constant dense<0.000000e+00> : vector<128x128xf32>
    %91 = tpu.matmul %88, %90, %cst_59 {dimension_numbers = #tpu.dot_dimension_numbers<[1], [0], [0], [1], [0, 0, 1, 1], [], []>} : vector<128x128xbf16>, vector<128x128xbf16>, vector<128x128xf32> -> vector<128x128xf32>
    %92 = arith.addf %82, %91 : vector<128x128xf32>
    %c0_60 = arith.constant 0 : index
    %c0_61 = arith.constant 0 : index
    %93 = vector.load %arg4[%c0_60, %c0_61] : memref<1x128xf32, #tpu.memory_space<vmem>>, vector<1x128xf32>
    %94 = vector.broadcast %93 : vector<1x128xf32> to vector<128x128xf32>
    %95 = arith.addf %92, %94 : vector<128x128xf32>
    %96 = vector.shape_cast %95 : vector<128x128xf32> to vector<1x8x16x128xf32>
    %c0_62 = arith.constant 0 : index
    %c0_63 = arith.constant 0 : index
    %c0_64 = arith.constant 0 : index
    %c0_65 = arith.constant 0 : index
    %97 = vector.load %arg5[%c0_62, %c0_63, %c0_64, %c0_65] : memref<1x8x16x128xf32, #tpu.memory_space<vmem>>, vector<1x8x16x128xf32>
    tpu.vector_store %arg5[%c0_62, %c0_63, %c0_64, %c0_65], %96 {strides = array<i32>} : memref<1x8x16x128xf32, #tpu.memory_space<vmem>>, vector<1x8x16x128xf32>,
    %cst_66 = arith.constant dense<0.000000e+00> : vector<128xf32>
    %98 = vector.multi_reduction <add>, %95, %cst_66 [0] : vector<128x128xf32> to vector<128xf32>
    %99 = vector.shape_cast %98 : vector<128xf32> to vector<1x128xf32>
    %c0_67 = arith.constant 0 : index
    %c0_68 = arith.constant 0 : index
    %c0_69 = arith.constant 0 : index
    %c0_70 = arith.constant 0 : index
    %100 = vector.load %arg6[%c0_67, %c0_68, %c0_69, %c0_70] : memref<1x1x2x128xf32, #tpu.memory_space<vmem>>, vector<1x1x1x128xf32>
    %101 = vector.shape_cast %100 : vector<1x1x1x128xf32> to vector<1x128xf32>
    %102 = vector.shape_cast %99 : vector<1x128xf32> to vector<1x1x1x128xf32>
    tpu.vector_store %arg6[%c0_67, %c0_68, %c0_69, %c0_70], %102 {strides = array<i32>} : memref<1x1x2x128xf32, #tpu.memory_space<vmem>>, vector<1x1x1x128xf32>,
    %103 = arith.mulf %95, %95 : vector<128x128xf32>
    %cst_71 = arith.constant dense<0.000000e+00> : vector<128xf32>
    %104 = vector.multi_reduction <add>, %103, %cst_71 [0] : vector<128x128xf32> to vector<128xf32>
    %105 = vector.shape_cast %104 : vector<128xf32> to vector<1x128xf32>
    %c0_72 = arith.constant 0 : index
    %c0_73 = arith.constant 0 : index
    %c1_74 = arith.constant 1 : index
    %c0_75 = arith.constant 0 : index
    %106 = vector.load %arg6[%c0_72, %c0_73, %c1_74, %c0_75] : memref<1x1x2x128xf32, #tpu.memory_space<vmem>>, vector<1x1x1x128xf32>
    %107 = vector.shape_cast %106 : vector<1x1x1x128xf32> to vector<1x128xf32>
    %108 = vector.shape_cast %105 : vector<1x128xf32> to vector<1x1x1x128xf32>
    tpu.vector_store %arg6[%c0_72, %c0_73, %c1_74, %c0_75], %108 {strides = array<i32>} : memref<1x1x2x128xf32, #tpu.memory_space<vmem>>, vector<1x1x1x128xf32>,
    return
  }
  func.func @transform_0(%arg0: i32, %arg1: i32) -> (i32, i32, i32, i32) {
    %c0_i32 = arith.constant 0 : i32
    %c0_i32_0 = arith.constant 0 : i32
    %c0_i32_1 = arith.constant 0 : i32
    %c0_i32_2 = arith.constant 0 : i32
    return %arg0, %c0_i32, %c0_i32_0, %c0_i32_1 : i32, i32, i32, i32
  }
  func.func @transform_1(%arg0: i32, %arg1: i32) -> (i32, i32, i32) {
    %c0_i32 = arith.constant 0 : i32
    %c0_i32_0 = arith.constant 0 : i32
    %c0_i32_1 = arith.constant 0 : i32
    %c0_i32_2 = arith.constant 0 : i32
    return %c0_i32, %c0_i32_0, %c0_i32_1 : i32, i32, i32
  }
  func.func @transform_2(%arg0: i32, %arg1: i32) -> (i32, i32) {
    %c0_i32 = arith.constant 0 : i32
    %c0_i32_0 = arith.constant 0 : i32
    %c0_i32_1 = arith.constant 0 : i32
    return %c0_i32, %c0_i32_0 : i32, i32
  }
  func.func @transform_3(%arg0: i32, %arg1: i32) -> (i32, i32, i32, i32) {
    %c0_i32 = arith.constant 0 : i32
    %c0_i32_0 = arith.constant 0 : i32
    %c0_i32_1 = arith.constant 0 : i32
    return %arg0, %arg1, %c0_i32, %c0_i32_0 : i32, i32, i32, i32
  }
  func.func @transform_4(%arg0: i32, %arg1: i32) -> (i32, i32, i32, i32) {
    %c0_i32 = arith.constant 0 : i32
    %c0_i32_0 = arith.constant 0 : i32
    %c0_i32_1 = arith.constant 0 : i32
    return %arg0, %arg1, %c0_i32, %c0_i32_0 : i32, i32, i32, i32
  }
}

module attributes {stable_mosaic.version = 11 : i64} {
  func.func @_bn_act_kernel(%arg0: i32, %arg1: i32, %arg2: memref<1x8x16x128xf32, #tpu.memory_space<vmem>>, %arg3: memref<1x128xf32, #tpu.memory_space<vmem>>, %arg4: memref<1x128xf32, #tpu.memory_space<vmem>>, %arg5: memref<1x8x16x128xf32, #tpu.memory_space<vmem>>) attributes {dimension_semantics = [#tpu.dimension_semantics<parallel>, #tpu.dimension_semantics<parallel>], iteration_bounds = array<i64: 2, 2>, scalar_prefetch = 0 : i64, scratch_operands = 0 : i64, tpu.core_type = #tpu.core_type<tc>, window_params = [{transform_indices = @transform_0, window_bounds = array<i64: 1, 8, 16, 128>}, {pipeline_mode = #tpu.pipeline_mode<synchronous>, transform_indices = @transform_1, window_bounds = array<i64: 1, 128>}, {pipeline_mode = #tpu.pipeline_mode<synchronous>, transform_indices = @transform_2, window_bounds = array<i64: 1, 128>}, {transform_indices = @transform_3, window_bounds = array<i64: 1, 8, 16, 128>}]} {
    %c0 = arith.constant 0 : index
    %c0_0 = arith.constant 0 : index
    %c0_1 = arith.constant 0 : index
    %c0_2 = arith.constant 0 : index
    %0 = vector.load %arg2[%c0, %c0_0, %c0_1, %c0_2] : memref<1x8x16x128xf32, #tpu.memory_space<vmem>>, vector<1x8x16x128xf32>
    %1 = vector.shape_cast %0 : vector<1x8x16x128xf32> to vector<8x16x128xf32>
    %c0_3 = arith.constant 0 : index
    %c0_4 = arith.constant 0 : index
    %2 = vector.load %arg3[%c0_3, %c0_4] : memref<1x128xf32, #tpu.memory_space<vmem>>, vector<1x128xf32>
    %3 = vector.shape_cast %2 : vector<1x128xf32> to vector<1x1x128xf32>
    %c0_5 = arith.constant 0 : index
    %c0_6 = arith.constant 0 : index
    %4 = vector.load %arg4[%c0_5, %c0_6] : memref<1x128xf32, #tpu.memory_space<vmem>>, vector<1x128xf32>
    %5 = vector.shape_cast %4 : vector<1x128xf32> to vector<1x1x128xf32>
    %6 = vector.broadcast %3 : vector<1x1x128xf32> to vector<8x16x128xf32>
    %7 = arith.mulf %1, %6 : vector<8x16x128xf32>
    %8 = vector.broadcast %5 : vector<1x1x128xf32> to vector<8x16x128xf32>
    %9 = arith.addf %7, %8 : vector<8x16x128xf32>
    %cst = arith.constant 0.000000e+00 : f32
    %10 = vector.broadcast %cst : f32 to vector<8x16x128xf32>
    %11 = arith.cmpf oge, %9, %10 : vector<8x16x128xf32>
    %cst_7 = arith.constant 2.000000e-01 : f32
    %12 = vector.broadcast %cst_7 : f32 to vector<8x16x128xf32>
    %13 = arith.mulf %12, %9 : vector<8x16x128xf32>
    %14 = arith.select %11, %9, %13 : vector<8x16x128xi1>, vector<8x16x128xf32>
    %c0_8 = arith.constant 0 : index
    %c0_9 = arith.constant 0 : index
    %c0_10 = arith.constant 0 : index
    %c0_11 = arith.constant 0 : index
    %15 = vector.load %arg5[%c0_8, %c0_9, %c0_10, %c0_11] : memref<1x8x16x128xf32, #tpu.memory_space<vmem>>, vector<1x8x16x128xf32>
    %16 = vector.shape_cast %15 : vector<1x8x16x128xf32> to vector<8x16x128xf32>
    %17 = vector.shape_cast %14 : vector<8x16x128xf32> to vector<1x8x16x128xf32>
    tpu.vector_store %arg5[%c0_8, %c0_9, %c0_10, %c0_11], %17 {strides = array<i32>} : memref<1x8x16x128xf32, #tpu.memory_space<vmem>>, vector<1x8x16x128xf32>,
    return
  }
  func.func @transform_0(%arg0: i32, %arg1: i32) -> (i32, i32, i32, i32) {
    %c0_i32 = arith.constant 0 : i32
    %c0_i32_0 = arith.constant 0 : i32
    %c0_i32_1 = arith.constant 0 : i32
    return %arg0, %arg1, %c0_i32, %c0_i32_0 : i32, i32, i32, i32
  }
  func.func @transform_1(%arg0: i32, %arg1: i32) -> (i32, i32) {
    %c0_i32 = arith.constant 0 : i32
    %c0_i32_0 = arith.constant 0 : i32
    %c0_i32_1 = arith.constant 0 : i32
    return %c0_i32, %c0_i32_0 : i32, i32
  }
  func.func @transform_2(%arg0: i32, %arg1: i32) -> (i32, i32) {
    %c0_i32 = arith.constant 0 : i32
    %c0_i32_0 = arith.constant 0 : i32
    %c0_i32_1 = arith.constant 0 : i32
    return %c0_i32, %c0_i32_0 : i32, i32
  }
  func.func @transform_3(%arg0: i32, %arg1: i32) -> (i32, i32, i32, i32) {
    %c0_i32 = arith.constant 0 : i32
    %c0_i32_0 = arith.constant 0 : i32
    %c0_i32_1 = arith.constant 0 : i32
    return %arg0, %arg1, %c0_i32, %c0_i32_0 : i32, i32, i32, i32
  }
}

module attributes {stable_mosaic.version = 11 : i64} {
  func.func @_conv_stats_kernel(%arg0: i32, %arg1: i32, %arg2: memref<1x16x16x128xf32, #tpu.memory_space<vmem>>, %arg3: memref<1x128x128xbf16, #tpu.memory_space<vmem>>, %arg4: memref<1x128xf32, #tpu.memory_space<vmem>>, %arg5: memref<1x8x16x128xf32, #tpu.memory_space<vmem>>, %arg6: memref<1x1x2x128xf32, #tpu.memory_space<vmem>>) attributes {dimension_semantics = [#tpu.dimension_semantics<parallel>, #tpu.dimension_semantics<parallel>], iteration_bounds = array<i64: 2, 2>, scalar_prefetch = 0 : i64, scratch_operands = 0 : i64, tpu.core_type = #tpu.core_type<tc>, window_params = [{transform_indices = @transform_0, window_bounds = array<i64: 1, 16, 16, 128>}, {pipeline_mode = #tpu.pipeline_mode<synchronous>, transform_indices = @transform_1, window_bounds = array<i64: 1, 128, 128>}, {pipeline_mode = #tpu.pipeline_mode<synchronous>, transform_indices = @transform_2, window_bounds = array<i64: 1, 128>}, {transform_indices = @transform_3, window_bounds = array<i64: 1, 8, 16, 128>}, {transform_indices = @transform_4, window_bounds = array<i64: 1, 1, 2, 128>}]} {
    %c8_i32 = arith.constant 8 : i32
    %0 = arith.muli %arg1, %c8_i32 : i32
    %1 = tpu.assume_multiple %0, 8 : i32
    %cst = arith.constant 0.000000e+00 : f32
    %2 = vector.broadcast %cst : f32 to vector<128x128xf32>
    %c0_i32 = arith.constant 0 : i32
    %3 = arith.addi %1, %c0_i32 : i32
    %c0 = arith.constant 0 : index
    %4 = arith.index_cast %3 : i32 to index
    %c0_0 = arith.constant 0 : index
    %c0_1 = arith.constant 0 : index
    %5 = vector.load %arg2[%c0, %4, %c0_0, %c0_1] : memref<1x16x16x128xf32, #tpu.memory_space<vmem>>, vector<1x8x16x128xf32>
    %6 = vector.shape_cast %5 : vector<1x8x16x128xf32> to vector<8x16x128xf32>
    %7 = vector.shape_cast %6 : vector<8x16x128xf32> to vector<128x128xf32>
    %8 = arith.truncf %7 : vector<128x128xf32> to vector<128x128xbf16>
    %c0_2 = arith.constant 0 : index
    %c0_3 = arith.constant 0 : index
    %c0_4 = arith.constant 0 : index
    %9 = vector.load %arg3[%c0_2, %c0_3, %c0_4] : memref<1x128x128xbf16, #tpu.memory_space<vmem>>, vector<1x128x128xbf16>
    %10 = vector.shape_cast %9 : vector<1x128x128xbf16> to vector<128x128xbf16>
    %cst_5 = arith.constant dense<0.000000e+00> : vector<128x128xf32>
    %11 = tpu.matmul %8, %10, %cst_5 {dimension_numbers = #tpu.dot_dimension_numbers<[1], [0], [0], [1], [0, 0, 1, 1], [], []>} : vector<128x128xbf16>, vector<128x128xbf16>, vector<128x128xf32> -> vector<128x128xf32>
    %12 = arith.addf %2, %11 : vector<128x128xf32>
    %c0_6 = arith.constant 0 : index
    %c0_7 = arith.constant 0 : index
    %13 = vector.load %arg4[%c0_6, %c0_7] : memref<1x128xf32, #tpu.memory_space<vmem>>, vector<1x128xf32>
    %14 = vector.broadcast %13 : vector<1x128xf32> to vector<128x128xf32>
    %15 = arith.addf %12, %14 : vector<128x128xf32>
    %16 = vector.shape_cast %15 : vector<128x128xf32> to vector<1x8x16x128xf32>
    %c0_8 = arith.constant 0 : index
    %c0_9 = arith.constant 0 : index
    %c0_10 = arith.constant 0 : index
    %c0_11 = arith.constant 0 : index
    %17 = vector.load %arg5[%c0_8, %c0_9, %c0_10, %c0_11] : memref<1x8x16x128xf32, #tpu.memory_space<vmem>>, vector<1x8x16x128xf32>
    tpu.vector_store %arg5[%c0_8, %c0_9, %c0_10, %c0_11], %16 {strides = array<i32>} : memref<1x8x16x128xf32, #tpu.memory_space<vmem>>, vector<1x8x16x128xf32>,
    %cst_12 = arith.constant dense<0.000000e+00> : vector<128xf32>
    %18 = vector.multi_reduction <add>, %15, %cst_12 [0] : vector<128x128xf32> to vector<128xf32>
    %19 = vector.shape_cast %18 : vector<128xf32> to vector<1x128xf32>
    %c0_13 = arith.constant 0 : index
    %c0_14 = arith.constant 0 : index
    %c0_15 = arith.constant 0 : index
    %c0_16 = arith.constant 0 : index
    %20 = vector.load %arg6[%c0_13, %c0_14, %c0_15, %c0_16] : memref<1x1x2x128xf32, #tpu.memory_space<vmem>>, vector<1x1x1x128xf32>
    %21 = vector.shape_cast %20 : vector<1x1x1x128xf32> to vector<1x128xf32>
    %22 = vector.shape_cast %19 : vector<1x128xf32> to vector<1x1x1x128xf32>
    tpu.vector_store %arg6[%c0_13, %c0_14, %c0_15, %c0_16], %22 {strides = array<i32>} : memref<1x1x2x128xf32, #tpu.memory_space<vmem>>, vector<1x1x1x128xf32>,
    %23 = arith.mulf %15, %15 : vector<128x128xf32>
    %cst_17 = arith.constant dense<0.000000e+00> : vector<128xf32>
    %24 = vector.multi_reduction <add>, %23, %cst_17 [0] : vector<128x128xf32> to vector<128xf32>
    %25 = vector.shape_cast %24 : vector<128xf32> to vector<1x128xf32>
    %c0_18 = arith.constant 0 : index
    %c0_19 = arith.constant 0 : index
    %c1 = arith.constant 1 : index
    %c0_20 = arith.constant 0 : index
    %26 = vector.load %arg6[%c0_18, %c0_19, %c1, %c0_20] : memref<1x1x2x128xf32, #tpu.memory_space<vmem>>, vector<1x1x1x128xf32>
    %27 = vector.shape_cast %26 : vector<1x1x1x128xf32> to vector<1x128xf32>
    %28 = vector.shape_cast %25 : vector<1x128xf32> to vector<1x1x1x128xf32>
    tpu.vector_store %arg6[%c0_18, %c0_19, %c1, %c0_20], %28 {strides = array<i32>} : memref<1x1x2x128xf32, #tpu.memory_space<vmem>>, vector<1x1x1x128xf32>,
    return
  }
  func.func @transform_0(%arg0: i32, %arg1: i32) -> (i32, i32, i32, i32) {
    %c0_i32 = arith.constant 0 : i32
    %c0_i32_0 = arith.constant 0 : i32
    %c0_i32_1 = arith.constant 0 : i32
    %c0_i32_2 = arith.constant 0 : i32
    return %arg0, %c0_i32, %c0_i32_0, %c0_i32_1 : i32, i32, i32, i32
  }
  func.func @transform_1(%arg0: i32, %arg1: i32) -> (i32, i32, i32) {
    %c0_i32 = arith.constant 0 : i32
    %c0_i32_0 = arith.constant 0 : i32
    %c0_i32_1 = arith.constant 0 : i32
    %c0_i32_2 = arith.constant 0 : i32
    return %c0_i32, %c0_i32_0, %c0_i32_1 : i32, i32, i32
  }
  func.func @transform_2(%arg0: i32, %arg1: i32) -> (i32, i32) {
    %c0_i32 = arith.constant 0 : i32
    %c0_i32_0 = arith.constant 0 : i32
    %c0_i32_1 = arith.constant 0 : i32
    return %c0_i32, %c0_i32_0 : i32, i32
  }
  func.func @transform_3(%arg0: i32, %arg1: i32) -> (i32, i32, i32, i32) {
    %c0_i32 = arith.constant 0 : i32
    %c0_i32_0 = arith.constant 0 : i32
    %c0_i32_1 = arith.constant 0 : i32
    return %arg0, %arg1, %c0_i32, %c0_i32_0 : i32, i32, i32, i32
  }
  func.func @transform_4(%arg0: i32, %arg1: i32) -> (i32, i32, i32, i32) {
    %c0_i32 = arith.constant 0 : i32
    %c0_i32_0 = arith.constant 0 : i32
    %c0_i32_1 = arith.constant 0 : i32
    return %arg0, %arg1, %c0_i32, %c0_i32_0 : i32, i32, i32, i32
  }
}

module attributes {stable_mosaic.version = 11 : i64} {
  func.func @_fused_epilogue_kernel(%arg0: i32, %arg1: i32, %arg2: memref<1x8x16x128xf32, #tpu.memory_space<vmem>>, %arg3: memref<1x8x16x128xf32, #tpu.memory_space<vmem>>, %arg4: memref<1x128xf32, #tpu.memory_space<vmem>>, %arg5: memref<1x128xf32, #tpu.memory_space<vmem>>, %arg6: memref<1x128xf32, #tpu.memory_space<vmem>>, %arg7: memref<1x128xf32, #tpu.memory_space<vmem>>, %arg8: memref<1x4x8x128xf32, #tpu.memory_space<vmem>>, %arg9: memref<8x16x128xf32, #tpu.memory_space<vmem>>, %arg10: memref<4x16x128xf32, #tpu.memory_space<vmem>>) attributes {dimension_semantics = [#tpu.dimension_semantics<parallel>, #tpu.dimension_semantics<parallel>], iteration_bounds = array<i64: 2, 2>, scalar_prefetch = 0 : i64, scratch_operands = 2 : i64, tpu.core_type = #tpu.core_type<tc>, window_params = [{transform_indices = @transform_0, window_bounds = array<i64: 1, 8, 16, 128>}, {transform_indices = @transform_1, window_bounds = array<i64: 1, 8, 16, 128>}, {pipeline_mode = #tpu.pipeline_mode<synchronous>, transform_indices = @transform_2, window_bounds = array<i64: 1, 128>}, {pipeline_mode = #tpu.pipeline_mode<synchronous>, transform_indices = @transform_3, window_bounds = array<i64: 1, 128>}, {pipeline_mode = #tpu.pipeline_mode<synchronous>, transform_indices = @transform_4, window_bounds = array<i64: 1, 128>}, {pipeline_mode = #tpu.pipeline_mode<synchronous>, transform_indices = @transform_5, window_bounds = array<i64: 1, 128>}, {transform_indices = @transform_6, window_bounds = array<i64: 1, 4, 8, 128>}]} {
    %c0 = arith.constant 0 : index
    %c0_0 = arith.constant 0 : index
    %0 = vector.load %arg4[%c0, %c0_0] : memref<1x128xf32, #tpu.memory_space<vmem>>, vector<1x128xf32>
    %1 = vector.shape_cast %0 : vector<1x128xf32> to vector<1x1x128xf32>
    %c0_1 = arith.constant 0 : index
    %c0_2 = arith.constant 0 : index
    %2 = vector.load %arg5[%c0_1, %c0_2] : memref<1x128xf32, #tpu.memory_space<vmem>>, vector<1x128xf32>
    %3 = vector.shape_cast %2 : vector<1x128xf32> to vector<1x1x128xf32>
    %c0_3 = arith.constant 0 : index
    %c0_4 = arith.constant 0 : index
    %4 = vector.load %arg6[%c0_3, %c0_4] : memref<1x128xf32, #tpu.memory_space<vmem>>, vector<1x128xf32>
    %5 = vector.shape_cast %4 : vector<1x128xf32> to vector<1x1x128xf32>
    %c0_5 = arith.constant 0 : index
    %c0_6 = arith.constant 0 : index
    %6 = vector.load %arg7[%c0_5, %c0_6] : memref<1x128xf32, #tpu.memory_space<vmem>>, vector<1x128xf32>
    %7 = vector.shape_cast %6 : vector<1x128xf32> to vector<1x1x128xf32>
    %c0_7 = arith.constant 0 : index
    %c0_8 = arith.constant 0 : index
    %c0_9 = arith.constant 0 : index
    %c0_10 = arith.constant 0 : index
    %8 = vector.load %arg2[%c0_7, %c0_8, %c0_9, %c0_10] : memref<1x8x16x128xf32, #tpu.memory_space<vmem>>, vector<1x8x16x128xf32>
    %9 = vector.shape_cast %8 : vector<1x8x16x128xf32> to vector<8x16x128xf32>
    %10 = vector.broadcast %1 : vector<1x1x128xf32> to vector<8x16x128xf32>
    %11 = arith.mulf %9, %10 : vector<8x16x128xf32>
    %12 = vector.broadcast %3 : vector<1x1x128xf32> to vector<8x16x128xf32>
    %13 = arith.addf %11, %12 : vector<8x16x128xf32>
    %c0_11 = arith.constant 0 : index
    %c0_12 = arith.constant 0 : index
    %c0_13 = arith.constant 0 : index
    %c0_14 = arith.constant 0 : index
    %14 = vector.load %arg3[%c0_11, %c0_12, %c0_13, %c0_14] : memref<1x8x16x128xf32, #tpu.memory_space<vmem>>, vector<1x8x16x128xf32>
    %15 = vector.shape_cast %14 : vector<1x8x16x128xf32> to vector<8x16x128xf32>
    %16 = vector.broadcast %5 : vector<1x1x128xf32> to vector<8x16x128xf32>
    %17 = arith.mulf %15, %16 : vector<8x16x128xf32>
    %18 = vector.broadcast %7 : vector<1x1x128xf32> to vector<8x16x128xf32>
    %19 = arith.addf %17, %18 : vector<8x16x128xf32>
    %20 = arith.addf %13, %19 : vector<8x16x128xf32>
    %cst = arith.constant 0.000000e+00 : f32
    %21 = vector.broadcast %cst : f32 to vector<8x16x128xf32>
    %22 = arith.cmpf oge, %20, %21 : vector<8x16x128xf32>
    %cst_15 = arith.constant 2.000000e-01 : f32
    %23 = vector.broadcast %cst_15 : f32 to vector<8x16x128xf32>
    %24 = arith.mulf %23, %20 : vector<8x16x128xf32>
    %25 = arith.select %22, %20, %24 : vector<8x16x128xi1>, vector<8x16x128xf32>
    %c0_16 = arith.constant 0 : index
    %c0_17 = arith.constant 0 : index
    %c0_18 = arith.constant 0 : index
    %26 = vector.load %arg9[%c0_16, %c0_17, %c0_18] : memref<8x16x128xf32, #tpu.memory_space<vmem>>, vector<8x16x128xf32>
    tpu.vector_store %arg9[%c0_16, %c0_17, %c0_18], %25 {strides = array<i32>} : memref<8x16x128xf32, #tpu.memory_space<vmem>>, vector<8x16x128xf32>,
    %c0_19 = arith.constant 0 : index
    %c0_20 = arith.constant 0 : index
    %c0_21 = arith.constant 0 : index
    %27 = tpu.strided_load %arg9[%c0_19, %c0_20, %c0_21] {strides = array<i32: 2, 1, 1>} : memref<8x16x128xf32, #tpu.memory_space<vmem>>, vector<4x16x128xf32>
    %c1 = arith.constant 1 : index
    %c0_22 = arith.constant 0 : index
    %c0_23 = arith.constant 0 : index
    %28 = tpu.strided_load %arg9[%c1, %c0_22, %c0_23] {strides = array<i32: 2, 1, 1>} : memref<8x16x128xf32, #tpu.memory_space<vmem>>, vector<4x16x128xf32>
    %29 = arith.addf %27, %28 : vector<4x16x128xf32>
    %c0_24 = arith.constant 0 : index
    %c0_25 = arith.constant 0 : index
    %c0_26 = arith.constant 0 : index
    %30 = vector.load %arg10[%c0_24, %c0_25, %c0_26] : memref<4x16x128xf32, #tpu.memory_space<vmem>>, vector<4x16x128xf32>
    tpu.vector_store %arg10[%c0_24, %c0_25, %c0_26], %29 {strides = array<i32>} : memref<4x16x128xf32, #tpu.memory_space<vmem>>, vector<4x16x128xf32>,
    %c0_27 = arith.constant 0 : index
    %c0_28 = arith.constant 0 : index
    %c0_29 = arith.constant 0 : index
    %31 = tpu.strided_load %arg10[%c0_27, %c0_28, %c0_29] {strides = array<i32: 1, 2, 1>} : memref<4x16x128xf32, #tpu.memory_space<vmem>>, vector<4x8x128xf32>
    %c0_30 = arith.constant 0 : index
    %c1_31 = arith.constant 1 : index
    %c0_32 = arith.constant 0 : index
    %32 = tpu.strided_load %arg10[%c0_30, %c1_31, %c0_32] {strides = array<i32: 1, 2, 1>} : memref<4x16x128xf32, #tpu.memory_space<vmem>>, vector<4x8x128xf32>
    %33 = arith.addf %31, %32 : vector<4x8x128xf32>
    %cst_33 = arith.constant 2.500000e-01 : f32
    %34 = vector.broadcast %cst_33 : f32 to vector<4x8x128xf32>
    %35 = arith.mulf %34, %33 : vector<4x8x128xf32>
    %c0_34 = arith.constant 0 : index
    %c0_35 = arith.constant 0 : index
    %c0_36 = arith.constant 0 : index
    %c0_37 = arith.constant 0 : index
    %36 = vector.load %arg8[%c0_34, %c0_35, %c0_36, %c0_37] : memref<1x4x8x128xf32, #tpu.memory_space<vmem>>, vector<1x4x8x128xf32>
    %37 = vector.shape_cast %36 : vector<1x4x8x128xf32> to vector<4x8x128xf32>
    %38 = vector.shape_cast %35 : vector<4x8x128xf32> to vector<1x4x8x128xf32>
    tpu.vector_store %arg8[%c0_34, %c0_35, %c0_36, %c0_37], %38 {strides = array<i32>} : memref<1x4x8x128xf32, #tpu.memory_space<vmem>>, vector<1x4x8x128xf32>,
    return
  }
  func.func @transform_0(%arg0: i32, %arg1: i32) -> (i32, i32, i32, i32) {
    %c0_i32 = arith.constant 0 : i32
    %c0_i32_0 = arith.constant 0 : i32
    %c0_i32_1 = arith.constant 0 : i32
    return %arg0, %arg1, %c0_i32, %c0_i32_0 : i32, i32, i32, i32
  }
  func.func @transform_1(%arg0: i32, %arg1: i32) -> (i32, i32, i32, i32) {
    %c0_i32 = arith.constant 0 : i32
    %c0_i32_0 = arith.constant 0 : i32
    %c0_i32_1 = arith.constant 0 : i32
    return %arg0, %arg1, %c0_i32, %c0_i32_0 : i32, i32, i32, i32
  }
  func.func @transform_2(%arg0: i32, %arg1: i32) -> (i32, i32) {
    %c0_i32 = arith.constant 0 : i32
    %c0_i32_0 = arith.constant 0 : i32
    %c0_i32_1 = arith.constant 0 : i32
    return %c0_i32, %c0_i32_0 : i32, i32
  }
  func.func @transform_3(%arg0: i32, %arg1: i32) -> (i32, i32) {
    %c0_i32 = arith.constant 0 : i32
    %c0_i32_0 = arith.constant 0 : i32
    %c0_i32_1 = arith.constant 0 : i32
    return %c0_i32, %c0_i32_0 : i32, i32
  }
  func.func @transform_4(%arg0: i32, %arg1: i32) -> (i32, i32) {
    %c0_i32 = arith.constant 0 : i32
    %c0_i32_0 = arith.constant 0 : i32
    %c0_i32_1 = arith.constant 0 : i32
    return %c0_i32, %c0_i32_0 : i32, i32
  }
  func.func @transform_5(%arg0: i32, %arg1: i32) -> (i32, i32) {
    %c0_i32 = arith.constant 0 : i32
    %c0_i32_0 = arith.constant 0 : i32
    %c0_i32_1 = arith.constant 0 : i32
    return %c0_i32, %c0_i32_0 : i32, i32
  }
  func.func @transform_6(%arg0: i32, %arg1: i32) -> (i32, i32, i32, i32) {
    %c0_i32 = arith.constant 0 : i32
    %c0_i32_0 = arith.constant 0 : i32
    %c0_i32_1 = arith.constant 0 : i32
    return %arg0, %arg1, %c0_i32, %c0_i32_0 : i32, i32, i32, i32
  }
}

</mosaic_0001>

<llo_original>
// kernel: residual_block_pallas.7
$region0: #{residual_block_pallas.7}
  #allocation0 [shape = 'u32[]', space=smem, size = 0x4, offset = 0x4, fixed_abs, tag = 'smem constant byte address 0x4 - core index']
  #allocation1 [shape = 'u32[144,128]{1,0:T(1,128)}', space=vmem, size = 0x12000, scoped, tag = 'internal scratch']
  %s0 = inlined_call_operand.vmem [shape: f32[2,16,16,128], index: 0, kind: input, shape index: {}]
  %s1 = inlined_call_operand.vmem [shape: f32[1,128], index: 1, kind: input, shape index: {}]
  %s2 = inlined_call_operand.vmem [shape: f32[1,128], index: 2, kind: input, shape index: {}]
  %s3 = inlined_call_operand.vmem [shape: f32[2,16,16,128], index: 3, kind: output, shape index: {}]
  %s4 = sld [smem:[#allocation0]]
  $region45: #{residual_block_pallas.7} parent=0
    _
  %s6 = ssub.s32 1, %s4
  %s7 = scalar_select 0, %s6, %s4
  loop: start=0, step=1, limit=6
  $region2: #{residual_block_pallas.7} parent=0 // loop_pre_header
    _
  $region3: #{residual_block_pallas.7} parent=0 // loop_header
    %s9 = sphi 0, %s13
    %p10 = scmp.ge.s32.totalorder %s9, 6
    %s16 = sphi 0, %s28
    %s17 = sphi 0, %s24
    %s18 = sphi 0, %s16
    %s19 = sphi 0, %s17
    %s20 = sphi 0, %s18
    %s21 = sphi 0, %s19
    %s33 = sphi 0, %s35
    %s36 = sphi 0, %s33
    %s37 = sphi 0, %s36
    %s53 = sphi 0, %s37
    %s57 = sphi 0, %s57
    %s59 = sphi 0, %s57
    %s60 = sphi 0, %s59
    %s74 = sphi 0, %s60
    %s78 = sphi 0, %s78
    %s80 = sphi 0, %s78
    %s81 = sphi 0, %s80
    %s95 = sphi 0, %s81
    %s103 = sphi 0, %s105
    %s106 = sphi 0, %s103
    %s107 = sphi 0, %s106
    %s123 = sphi 0, %s107
  $region4: #{residual_block_pallas.7} parent=0 // loop_header_branch
    %12 = sbr.rel (%p10) target = $region8
  $region5: #{residual_block_pallas.7} parent=0 // loop_body
    %s14 = ssub.s32 %s9, 1
    %s15 = ssub.s32 %s9, 2
    %s22 = sadd.s32 1, %s17
    %p23 = scmp.ge.s32.totalorder %s22, 2
    %s24 = scalar_select %p23, 0, %s22
    %s25 = sadd.s32 1, %s16
    %s26 = scalar_select %p23, %s25, %s16
    %p27 = scmp.ge.s32.totalorder %s26, 2
    %s28 = scalar_select %p27, 0, %s26
    %s29 = ssub.s32 %s16, %s28
    %s30 = ssub.s32 %s17, %s24
    %s31 = sor.u32 %s29, %s30
    %p32 = scmp.eq.s32.totalorder %s31, 0
    %s34 = sadd.s32 %s33, 1
    %s35 = scalar_select %p32, %s33, %s34
    %p38 = pneg %p32
    %p39 = scmp.eq.s32.totalorder %s9, 3
    %p40 = por %p38, %p39
    %p41 = scmp.ne.s32.totalorder %s33, %s36
    %p42 = scmp.eq.s32.totalorder %s9, 0
    %p43 = por %p41, %p42
    %p44 = scmp.ne.s32.totalorder %s33, %s36
    %p45 = scmp.eq.s32.totalorder %s14, 3
    %p46 = por %p44, %p45
    %p47 = scmp.ne.s32.totalorder %s36, %s37
    %p48 = scmp.eq.s32.totalorder %s14, 0
    %p49 = por %p47, %p48
    %p50 = scmp.ne.s32.totalorder %s36, %s37
    %p51 = scmp.eq.s32.totalorder %s15, 3
    %p52 = por %p50, %p51
    %p54 = scmp.ne.s32.totalorder %s37, %s53
    %p55 = scmp.eq.s32.totalorder %s15, 0
    %p56 = por %p54, %p55
    %s58 = sadd.s32 %s57, 1
    %p61 = scmp.eq.s32.totalorder %s9, 3
    %p62 = scmp.ne.s32.totalorder %s57, %s59
    %p63 = scmp.eq.s32.totalorder %s9, 0
    %p64 = por %p62, %p63
    %p65 = scmp.ne.s32.totalorder %s57, %s59
    %p66 = scmp.eq.s32.totalorder %s14, 3
    %p67 = por %p65, %p66
    %p68 = scmp.ne.s32.totalorder %s59, %s60
    %p69 = scmp.eq.s32.totalorder %s14, 0
    %p70 = por %p68, %p69
    %p71 = scmp.ne.s32.totalorder %s59, %s60
    %p72 = scmp.eq.s32.totalorder %s15, 3
    %p73 = por %p71, %p72
    %p75 = scmp.ne.s32.totalorder %s60, %s74
    %p76 = scmp.eq.s32.totalorder %s15, 0
    %p77 = por %p75, %p76
    %s79 = sadd.s32 %s78, 1
    %p82 = scmp.eq.s32.totalorder %s9, 3
    %p83 = scmp.ne.s32.totalorder %s78, %s80
    %p84 = scmp.eq.s32.totalorder %s9, 0
    %p85 = por %p83, %p84
    %p86 = scmp.ne.s32.totalorder %s78, %s80
    %p87 = scmp.eq.s32.totalorder %s14, 3
    %p88 = por %p86, %p87
    %p89 = scmp.ne.s32.totalorder %s80, %s81
    %p90 = scmp.eq.s32.totalorder %s14, 0
    %p91 = por %p89, %p90
    %p92 = scmp.ne.s32.totalorder %s80, %s81
    %p93 = scmp.eq.s32.totalorder %s15, 3
    %p94 = por %p92, %p93
    %p96 = scmp.ne.s32.totalorder %s81, %s95
    %p97 = scmp.eq.s32.totalorder %s15, 0
    %p98 = por %p96, %p97
    %s99 = ssub.s32 %s16, %s28
    %s100 = ssub.s32 %s17, %s24
    %s101 = sor.u32 %s99, %s100
    %p102 = scmp.eq.s32.totalorder %s101, 0
    %s104 = sadd.s32 %s103, 1
    %s105 = scalar_select %p102, %s103, %s104
    %p108 = pneg %p102
    %p109 = scmp.eq.s32.totalorder %s9, 3
    %p110 = por %p108, %p109
    %p111 = scmp.ne.s32.totalorder %s103, %s106
    %p112 = scmp.eq.s32.totalorder %s9, 0
    %p113 = por %p111, %p112
    %p114 = scmp.ne.s32.totalorder %s103, %s106
    %p115 = scmp.eq.s32.totalorder %s14, 3
    %p116 = por %p114, %p115
    %p117 = scmp.ne.s32.totalorder %s106, %s107
    %p118 = scmp.eq.s32.totalorder %s14, 0
    %p119 = por %p117, %p118
    %p120 = scmp.ne.s32.totalorder %s106, %s107
    %p121 = scmp.eq.s32.totalorder %s15, 3
    %p122 = por %p120, %p121
    %p124 = scmp.ne.s32.totalorder %s107, %s123
    %p125 = scmp.eq.s32.totalorder %s15, 0
    %p126 = por %p124, %p125
    %p127 = scmp.le.s32.totalorder 1, %s9
    %p128 = scmp.lt.s32.totalorder %s9, 5
    %p129 = pnand %p127, %p128
    %p130 = pneg %p129
    // Predicated region
    $region9: #{residual_block_pallas.7} parent=5 // pred_check
      _
    $region10: #{residual_block_pallas.7} parent=5 // pred_check_branch
      %132 = sbr.rel (%p129) target = $region12
    $region11: #{residual_block_pallas.7} parent=5 // pred_region
      %s133 = ssub.s32 %s9, 1
      // Predicated region
      $region13: #{residual_block_pallas.7} parent=11 // pred_check
        %p134 = pneg %p70
      $region14: #{residual_block_pallas.7} parent=11 // pred_check_branch
        %136 = sbr.rel (%p134) target = $region16
      $region15: #{residual_block_pallas.7} parent=11 // pred_region
        _
      $region16: #{residual_block_pallas.7} parent=11 // pred_fallthru
        _
      // Predicated region
      $region17: #{residual_block_pallas.7} parent=11 // pred_check
        %p137 = pneg %p91
      $region18: #{residual_block_pallas.7} parent=11 // pred_check_branch
        %139 = sbr.rel (%p137) target = $region20
      $region19: #{residual_block_pallas.7} parent=11 // pred_region
        _
      $region20: #{residual_block_pallas.7} parent=11 // pred_fallthru
        _
    $region12: #{residual_block_pallas.7} parent=5 // pred_fallthru
      _
    %p140 = scmp.lt.s32.totalorder %s9, 4
    // Predicated region
    $region21: #{residual_block_pallas.7} parent=5 // pred_check
      %p141 = pneg %p140
    $region22: #{residual_block_pallas.7} parent=5 // pred_check_branch
      %143 = sbr.rel (%p141) target = $region24
    $region23: #{residual_block_pallas.7} parent=5 // pred_region
      // Predicated region
      $region25: #{residual_block_pallas.7} parent=23 // pred_check
        %p144 = pneg %p43
      $region26: #{residual_block_pallas.7} parent=23 // pred_check_branch
        %146 = sbr.rel (%p144) target = $region28
      $region27: #{residual_block_pallas.7} parent=23 // pred_region
        %s147 = smul.u32 8, %s17
        %p148 = scmp.lt.s32.totalorder %s16, 1
        %s149 = scalar_select %p148, %s16, 1
        %p150 = scmp.lt.s32.totalorder %s147, 15
        %s151 = scalar_select %p150, %s147, 15
        %s152 = smul.addr %s151, 2
        %s153 = smul.addr %s149, 32
        %s154 = sadd.s32 %s152, %s153
        %s155 = smul.addr %s154, 8
        %s156 = scalar_lea.vmem %s0, %s155
        %s157 = smul.u32 8, %s17
      $region28: #{residual_block_pallas.7} parent=23 // pred_fallthru
        _
    $region24: #{residual_block_pallas.7} parent=5 // pred_fallthru
      _
    %p158 = scmp.le.s32.totalorder 1, %s9
    %p159 = scmp.lt.s32.totalorder %s9, 5
    %p160 = pnand %p158, %p159
    %p161 = pneg %p160
    // Predicated region
    $region29: #{residual_block_pallas.7} parent=5 // pred_check
      _
    $region30: #{residual_block_pallas.7} parent=5 // pred_check_branch
      %163 = sbr.rel (%p160) target = $region32
    $region31: #{residual_block_pallas.7} parent=5 // pred_region
      %s164 = ssub.s32 %s9, 1
      %s165 = smul.u32 8, %s19
      %p166 = scmp.lt.s32.totalorder %s18, 1
      %s167 = scalar_select %p166, %s18, 1
      %p168 = scmp.lt.s32.totalorder %s165, 15
      %s169 = scalar_select %p168, %s165, 15
      %s170 = smul.addr %s169, 2
      %s171 = smul.addr %s167, 32
      %s172 = sadd.s32 %s170, %s171
      %s173 = smul.addr %s172, 8
      %s174 = scalar_lea.vmem %s0, %s173
      %p175 = pneg %p49
      %p176 = pneg %p46
      %p177 = pneg %p70
      %p178 = pneg %p67
      %p179 = pneg %p91
      %p180 = pneg %p88
      %p181 = pneg %p119
      %p182 = pneg %p116
      %s183 = smul.u32 8, %s19
      %p184 = scmp.lt.s32.totalorder %s18, 1
      %s185 = scalar_select %p184, %s18, 1
      %p186 = scmp.lt.s32.totalorder %s183, 15
      %s187 = scalar_select %p186, %s183, 15
      %s188 = smul.addr %s187, 2
      %s189 = smul.addr %s185, 32
      %s190 = sadd.s32 %s188, %s189
      %s191 = smul.addr %s190, 8
      %s192 = scalar_lea.vmem %s3, %s191
      %s193 = smul.u32 8, %s19
      %p194 = scmp.lt.s32.totalorder %s18, 1
      %s195 = scalar_select %p194, %s18, 1
      %p196 = scmp.lt.s32.totalorder %s193, 15
      %s197 = scalar_select %p196, %s193, 15
      %s198 = smul.addr %s197, 2
      %s199 = smul.addr %s195, 32
      %s200 = sadd.s32 %s198, %s199
      %s201 = smul.addr %s200, 8
      %s202 = scalar_lea.vmem %s0, %s201
      %s203 = smul.u32 8, %s19
      %s204 = smul.u32 8, %s19
      %p205 = scmp.lt.s32.totalorder %s18, 1
      %s206 = scalar_select %p205, %s18, 1
      %p207 = scmp.lt.s32.totalorder %s204, 15
      %s208 = scalar_select %p207, %s204, 15
      %s209 = smul.addr %s208, 2
      %s210 = smul.addr %s206, 32
      %s211 = sadd.s32 %s209, %s210
      %s212 = smul.addr %s211, 8
      %s213 = scalar_lea.vmem %s3, %s212
      %s214 = smul.u32 8, %s19
      %v215 = vld [vmem:[%s202] sm:$0xff]
      %v216 = vld [vmem:[%s202 + $0x8] sm:$0xff]
      %v217 = vld [vmem:[%s202 + $0x10] sm:$0xff]
      %v218 = vld [vmem:[%s202 + $0x18] sm:$0xff]
      %v219 = vld [vmem:[%s202 + $0x20] sm:$0xff]
      %v220 = vld [vmem:[%s202 + $0x28] sm:$0xff]
      %v221 = vld [vmem:[%s202 + $0x30] sm:$0xff]
      %v222 = vld [vmem:[%s202 + $0x38] sm:$0xff]
      %v223 = vld [vmem:[%s202 + $0x40] sm:$0xff]
      %v224 = vld [vmem:[%s202 + $0x48] sm:$0xff]
      %v225 = vld [vmem:[%s202 + $0x50] sm:$0xff]
      %v226 = vld [vmem:[%s202 + $0x58] sm:$0xff]
      %v227 = vld [vmem:[%s202 + $0x60] sm:$0xff]
      %v228 = vld [vmem:[%s202 + $0x68] sm:$0xff]
      %v229 = vld [vmem:[%s202 + $0x70] sm:$0xff]
      %v230 = vld [vmem:[%s202 + $0x78] sm:$0xff]
      %v231 = vld [vmem:[%s1] sm:$0x1]
      %v232 = vld [vmem:[%s2] sm:$0x1]
      %v234 = vlaneseq
      %v235 = vshrl.u32 %v234, 7
      %v236 = vsub.s32 0, %v235
      %v237 = vrot.slane %v231, %v236
      %v239 = vmul.f32 %v215, %v237
      %v240 = vmul.f32 %v216, %v237
      %v241 = vmul.f32 %v217, %v237
      %v242 = vmul.f32 %v218, %v237
      %v243 = vmul.f32 %v219, %v237
      %v244 = vmul.f32 %v220, %v237
      %v245 = vmul.f32 %v221, %v237
      %v246 = vmul.f32 %v222, %v237
      %v247 = vmul.f32 %v223, %v237
      %v248 = vmul.f32 %v224, %v237
      %v249 = vmul.f32 %v225, %v237
      %v250 = vmul.f32 %v226, %v237
      %v251 = vmul.f32 %v227, %v237
      %v252 = vmul.f32 %v228, %v237
      %v253 = vmul.f32 %v229, %v237
      %v254 = vmul.f32 %v230, %v237
      %v256 = vlaneseq
      %v257 = vshrl.u32 %v256, 7
      %v258 = vsub.s32 0, %v257
      %v259 = vrot.slane %v232, %v258
      %v261 = vadd.f32 %v239, %v259
      %v262 = vadd.f32 %v240, %v259
      %v263 = vadd.f32 %v241, %v259
      %v264 = vadd.f32 %v242, %v259
      %v265 = vadd.f32 %v243, %v259
      %v266 = vadd.f32 %v244, %v259
      %v267 = vadd.f32 %v245, %v259
      %v268 = vadd.f32 %v246, %v259
      %v269 = vadd.f32 %v247, %v259
      %v270 = vadd.f32 %v248, %v259
      %v271 = vadd.f32 %v249, %v259
      %v272 = vadd.f32 %v250, %v259
      %v273 = vadd.f32 %v251, %v259
      %v274 = vadd.f32 %v252, %v259
      %v275 = vadd.f32 %v253, %v259
      %v276 = vadd.f32 %v254, %v259
      %vm277 = vcmp.ge.f32.partialorder %v261, 0.0
      %vm278 = vcmp.ge.f32.partialorder %v262, 0.0
      %vm279 = vcmp.ge.f32.partialorder %v263, 0.0
      %vm280 = vcmp.ge.f32.partialorder %v264, 0.0
      %vm281 = vcmp.ge.f32.partialorder %v265, 0.0
      %vm282 = vcmp.ge.f32.partialorder %v266, 0.0
      %vm283 = vcmp.ge.f32.partialorder %v267, 0.0
      %vm284 = vcmp.ge.f32.partialorder %v268, 0.0
      %vm285 = vcmp.ge.f32.partialorder %v269, 0.0
      %vm286 = vcmp.ge.f32.partialorder %v270, 0.0
      %vm287 = vcmp.ge.f32.partialorder %v271, 0.0
      %vm288 = vcmp.ge.f32.partialorder %v272, 0.0
      %vm289 = vcmp.ge.f32.partialorder %v273, 0.0
      %vm290 = vcmp.ge.f32.partialorder %v274, 0.0
      %vm291 = vcmp.ge.f32.partialorder %v275, 0.0
      %vm292 = vcmp.ge.f32.partialorder %v276, 0.0
      %v293 = vmul.f32 %v261, 0.2
      %v294 = vmul.f32 %v262, 0.2
      %v295 = vmul.f32 %v263, 0.2
      %v296 = vmul.f32 %v264, 0.2
      %v297 = vmul.f32 %v265, 0.2
      %v298 = vmul.f32 %v266, 0.2
      %v299 = vmul.f32 %v267, 0.2
      %v300 = vmul.f32 %v268, 0.2
      %v301 = vmul.f32 %v269, 0.2
      %v302 = vmul.f32 %v270, 0.2
      %v303 = vmul.f32 %v271, 0.2
      %v304 = vmul.f32 %v272, 0.2
      %v305 = vmul.f32 %v273, 0.2
      %v306 = vmul.f32 %v274, 0.2
      %v307 = vmul.f32 %v275, 0.2
      %v308 = vmul.f32 %v276, 0.2
      %v309 = vsel %vm277, %v261, %v293
      %v310 = vsel %vm278, %v262, %v294
      %v311 = vsel %vm279, %v263, %v295
      %v312 = vsel %vm280, %v264, %v296
      %v313 = vsel %vm281, %v265, %v297
      %v314 = vsel %vm282, %v266, %v298
      %v315 = vsel %vm283, %v267, %v299
      %v316 = vsel %vm284, %v268, %v300
      %v317 = vsel %vm285, %v269, %v301
      %v318 = vsel %vm286, %v270, %v302
      %v319 = vsel %vm287, %v271, %v303
      %v320 = vsel %vm288, %v272, %v304
      %v321 = vsel %vm289, %v273, %v305
      %v322 = vsel %vm290, %v274, %v306
      %v323 = vsel %vm291, %v275, %v307
      %v324 = vsel %vm292, %v276, %v308
      %325 = vst [vmem:[%s213] sm:$0xff] %v309
      %326 = vst [vmem:[%s213 + $0x8] sm:$0xff] %v310
      %327 = vst [vmem:[%s213 + $0x10] sm:$0xff] %v311
      %328 = vst [vmem:[%s213 + $0x18] sm:$0xff] %v312
      %329 = vst [vmem:[%s213 + $0x20] sm:$0xff] %v313
      %330 = vst [vmem:[%s213 + $0x28] sm:$0xff] %v314
      %331 = vst [vmem:[%s213 + $0x30] sm:$0xff] %v315
      %332 = vst [vmem:[%s213 + $0x38] sm:$0xff] %v316
      %333 = vst [vmem:[%s213 + $0x40] sm:$0xff] %v317
      %334 = vst [vmem:[%s213 + $0x48] sm:$0xff] %v318
      %335 = vst [vmem:[%s213 + $0x50] sm:$0xff] %v319
      %336 = vst [vmem:[%s213 + $0x58] sm:$0xff] %v320
      %337 = vst [vmem:[%s213 + $0x60] sm:$0xff] %v321
      %338 = vst [vmem:[%s213 + $0x68] sm:$0xff] %v322
      %339 = vst [vmem:[%s213 + $0x70] sm:$0xff] %v323
      %340 = vst [vmem:[%s213 + $0x78] sm:$0xff] %v324
      %s341 = smul.u32 8, %s19
      %p342 = scmp.lt.s32.totalorder %s18, 1
      %s343 = scalar_select %p342, %s18, 1
      %p344 = scmp.lt.s32.totalorder %s341, 15
      %s345 = scalar_select %p344, %s341, 15
      %s346 = smul.addr %s345, 2
      %s347 = smul.addr %s343, 32
      %s348 = sadd.s32 %s346, %s347
      %s349 = smul.addr %s348, 8
      %s350 = scalar_lea.vmem %s3, %s349
      // Predicated region
      $region33: #{residual_block_pallas.7} parent=31 // pred_check
        %p351 = pneg %p116
      $region34: #{residual_block_pallas.7} parent=31 // pred_check_branch
        %353 = sbr.rel (%p351) target = $region36
      $region35: #{residual_block_pallas.7} parent=31 // pred_region
        %s354 = smul.u32 8, %s19
      $region36: #{residual_block_pallas.7} parent=31 // pred_fallthru
        _
    $region32: #{residual_block_pallas.7} parent=5 // pred_fallthru
      _
    %p355 = scmp.le.s32.totalorder 2, %s9
    // Predicated region
    $region37: #{residual_block_pallas.7} parent=5 // pred_check
      %p356 = pneg %p355
    $region38: #{residual_block_pallas.7} parent=5 // pred_check_branch
      %358 = sbr.rel (%p356) target = $region40
    $region39: #{residual_block_pallas.7} parent=5 // pred_region
      %s359 = ssub.s32 %s9, 2
      // Predicated region
      $region41: #{residual_block_pallas.7} parent=39 // pred_check
        %p360 = pneg %p122
      $region42: #{residual_block_pallas.7} parent=39 // pred_check_branch
        %362 = sbr.rel (%p360) target = $region44
      $region43: #{residual_block_pallas.7} parent=39 // pred_region
        %s363 = smul.u32 8, %s21
        %p364 = scmp.lt.s32.totalorder %s20, 1
        %s365 = scalar_select %p364, %s20, 1
        %p366 = scmp.lt.s32.totalorder %s363, 15
        %s367 = scalar_select %p366, %s363, 15
        %s368 = smul.addr %s367, 2
        %s369 = smul.addr %s365, 32
        %s370 = sadd.s32 %s368, %s369
        %s371 = smul.addr %s370, 8
        %s372 = scalar_lea.vmem %s3, %s371
      $region44: #{residual_block_pallas.7} parent=39 // pred_fallthru
        _
    $region40: #{residual_block_pallas.7} parent=5 // pred_fallthru
      _
  $region6: #{residual_block_pallas.7} parent=0 // loop_footer
    %s13 = sadd.s32 1, %s9
  $region7: #{residual_block_pallas.7} parent=0 // loop_footer_branch
    %8 = sbr.rel target = $region3
  $region8: #{residual_block_pallas.7} parent=0 // loop_exit
    _

// kernel: residual_block_pallas.5
$region0: #{residual_block_pallas.5}
  #allocation0 [shape = 'u32[]', space=smem, size = 0x4, offset = 0x4, fixed_abs, tag = 'smem constant byte address 0x4 - core index']
  #allocation1 [shape = 'u32[144,128]{1,0:T(1,128)}', space=vmem, size = 0x12000, scoped, tag = 'internal scratch']
  %s0 = inlined_call_operand.vmem [shape: f32[2,16,16,128], index: 0, kind: input, shape index: {}]
  %s1 = inlined_call_operand.vmem [shape: bf16[1,128,128], index: 1, kind: input, shape index: {}]
  %s2 = inlined_call_operand.vmem [shape: f32[1,128], index: 2, kind: input, shape index: {}]
  %s3 = inlined_call_operand.vmem [shape: f32[2,16,16,128], index: 3, kind: output, shape index: {0}]
  %s4 = inlined_call_operand.vmem [shape: f32[2,2,2,128], index: 4, kind: output, shape index: {1}]
  %5 = xla_tuple %s3, %s4
  %s6 = sld [smem:[#allocation0]]
  $region53: #{residual_block_pallas.5} parent=0
    _
  %s8 = ssub.s32 1, %s6
  %s9 = scalar_select 0, %s8, %s6
  loop: start=0, step=1, limit=6
  $region2: #{residual_block_pallas.5} parent=0 // loop_pre_header
    _
  $region3: #{residual_block_pallas.5} parent=0 // loop_header
    %s11 = sphi 0, %s15
    %p12 = scmp.ge.s32.totalorder %s11, 6
    %s18 = sphi 0, %s30
    %s19 = sphi 0, %s26
    %s20 = sphi 0, %s18
    %s21 = sphi 0, %s19
    %s22 = sphi 0, %s20
    %s23 = sphi 0, %s21
    %s33 = sphi 0, %s35
    %s36 = sphi 0, %s33
    %s37 = sphi 0, %s36
    %s53 = sphi 0, %s37
    %s57 = sphi 0, %s57
    %s59 = sphi 0, %s57
    %s60 = sphi 0, %s59
    %s74 = sphi 0, %s60
    %s78 = sphi 0, %s78
    %s80 = sphi 0, %s78
    %s81 = sphi 0, %s80
    %s95 = sphi 0, %s81
    %s103 = sphi 0, %s105
    %s106 = sphi 0, %s103
    %s107 = sphi 0, %s106
    %s123 = sphi 0, %s107
    %s131 = sphi 0, %s133
    %s134 = sphi 0, %s131
    %s135 = sphi 0, %s134
    %s151 = sphi 0, %s135
  $region4: #{residual_block_pallas.5} parent=0 // loop_header_branch
    %14 = sbr.rel (%p12) target = $region8
  $region5: #{residual_block_pallas.5} parent=0 // loop_body
    %s16 = ssub.s32 %s11, 1
    %s17 = ssub.s32 %s11, 2
    %s24 = sadd.s32 1, %s19
    %p25 = scmp.ge.s32.totalorder %s24, 2
    %s26 = scalar_select %p25, 0, %s24
    %s27 = sadd.s32 1, %s18
    %s28 = scalar_select %p25, %s27, %s18
    %p29 = scmp.ge.s32.totalorder %s28, 2
    %s30 = scalar_select %p29, 0, %s28
    %s31 = ssub.s32 %s18, %s30
    %p32 = scmp.eq.s32.totalorder %s31, 0
    %s34 = sadd.s32 %s33, 1
    %s35 = scalar_select %p32, %s33, %s34
    %p38 = pneg %p32
    %p39 = scmp.eq.s32.totalorder %s11, 3
    %p40 = por %p38, %p39
    %p41 = scmp.ne.s32.totalorder %s33, %s36
    %p42 = scmp.eq.s32.totalorder %s11, 0
    %p43 = por %p41, %p42
    %p44 = scmp.ne.s32.totalorder %s33, %s36
    %p45 = scmp.eq.s32.totalorder %s16, 3
    %p46 = por %p44, %p45
    %p47 = scmp.ne.s32.totalorder %s36, %s37
    %p48 = scmp.eq.s32.totalorder %s16, 0
    %p49 = por %p47, %p48
    %p50 = scmp.ne.s32.totalorder %s36, %s37
    %p51 = scmp.eq.s32.totalorder %s17, 3
    %p52 = por %p50, %p51
    %p54 = scmp.ne.s32.totalorder %s37, %s53
    %p55 = scmp.eq.s32.totalorder %s17, 0
    %p56 = por %p54, %p55
    %s58 = sadd.s32 %s57, 1
    %p61 = scmp.eq.s32.totalorder %s11, 3
    %p62 = scmp.ne.s32.totalorder %s57, %s59
    %p63 = scmp.eq.s32.totalorder %s11, 0
    %p64 = por %p62, %p63
    %p65 = scmp.ne.s32.totalorder %s57, %s59
    %p66 = scmp.eq.s32.totalorder %s16, 3
    %p67 = por %p65, %p66
    %p68 = scmp.ne.s32.totalorder %s59, %s60
    %p69 = scmp.eq.s32.totalorder %s16, 0
    %p70 = por %p68, %p69
    %p71 = scmp.ne.s32.totalorder %s59, %s60
    %p72 = scmp.eq.s32.totalorder %s17, 3
    %p73 = por %p71, %p72
    %p75 = scmp.ne.s32.totalorder %s60, %s74
    %p76 = scmp.eq.s32.totalorder %s17, 0
    %p77 = por %p75, %p76
    %s79 = sadd.s32 %s78, 1
    %p82 = scmp.eq.s32.totalorder %s11, 3
    %p83 = scmp.ne.s32.totalorder %s78, %s80
    %p84 = scmp.eq.s32.totalorder %s11, 0
    %p85 = por %p83, %p84
    %p86 = scmp.ne.s32.totalorder %s78, %s80
    %p87 = scmp.eq.s32.totalorder %s16, 3
    %p88 = por %p86, %p87
    %p89 = scmp.ne.s32.totalorder %s80, %s81
    %p90 = scmp.eq.s32.totalorder %s16, 0
    %p91 = por %p89, %p90
    %p92 = scmp.ne.s32.totalorder %s80, %s81
    %p93 = scmp.eq.s32.totalorder %s17, 3
    %p94 = por %p92, %p93
    %p96 = scmp.ne.s32.totalorder %s81, %s95
    %p97 = scmp.eq.s32.totalorder %s17, 0
    %p98 = por %p96, %p97
    %s99 = ssub.s32 %s18, %s30
    %s100 = ssub.s32 %s19, %s26
    %s101 = sor.u32 %s99, %s100
    %p102 = scmp.eq.s32.totalorder %s101, 0
    %s104 = sadd.s32 %s103, 1
    %s105 = scalar_select %p102, %s103, %s104
    %p108 = pneg %p102
    %p109 = scmp.eq.s32.totalorder %s11, 3
    %p110 = por %p108, %p109
    %p111 = scmp.ne.s32.totalorder %s103, %s106
    %p112 = scmp.eq.s32.totalorder %s11, 0
    %p113 = por %p111, %p112
    %p114 = scmp.ne.s32.totalorder %s103, %s106
    %p115 = scmp.eq.s32.totalorder %s16, 3
    %p116 = por %p114, %p115
    %p117 = scmp.ne.s32.totalorder %s106, %s107
    %p118 = scmp.eq.s32.totalorder %s16, 0
    %p119 = por %p117, %p118
    %p120 = scmp.ne.s32.totalorder %s106, %s107
    %p121 = scmp.eq.s32.totalorder %s17, 3
    %p122 = por %p120, %p121
    %p124 = scmp.ne.s32.totalorder %s107, %s123
    %p125 = scmp.eq.s32.totalorder %s17, 0
    %p126 = por %p124, %p125
    %s127 = ssub.s32 %s18, %s30
    %s128 = ssub.s32 %s19, %s26
    %s129 = sor.u32 %s127, %s128
    %p130 = scmp.eq.s32.totalorder %s129, 0
    %s132 = sadd.s32 %s131, 1
    %s133 = scalar_select %p130, %s131, %s132
    %p136 = pneg %p130
    %p137 = scmp.eq.s32.totalorder %s11, 3
    %p138 = por %p136, %p137
    %p139 = scmp.ne.s32.totalorder %s131, %s134
    %p140 = scmp.eq.s32.totalorder %s11, 0
    %p141 = por %p139, %p140
    %p142 = scmp.ne.s32.totalorder %s131, %s134
    %p143 = scmp.eq.s32.totalorder %s16, 3
    %p144 = por %p142, %p143
    %p145 = scmp.ne.s32.totalorder %s134, %s135
    %p146 = scmp.eq.s32.totalorder %s16, 0
    %p147 = por %p145, %p146
    %p148 = scmp.ne.s32.totalorder %s134, %s135
    %p149 = scmp.eq.s32.totalorder %s17, 3
    %p150 = por %p148, %p149
    %p152 = scmp.ne.s32.totalorder %s135, %s151
    %p153 = scmp.eq.s32.totalorder %s17, 0
    %p154 = por %p152, %p153
    %p155 = scmp.le.s32.totalorder 1, %s11
    %p156 = scmp.lt.s32.totalorder %s11, 5
    %p157 = pnand %p155, %p156
    %p158 = pneg %p157
    // Predicated region
    $region9: #{residual_block_pallas.5} parent=5 // pred_check
      _
    $region10: #{residual_block_pallas.5} parent=5 // pred_check_branch
      %160 = sbr.rel (%p157) target = $region12
    $region11: #{residual_block_pallas.5} parent=5 // pred_region
      %s161 = ssub.s32 %s11, 1
      // Predicated region
      $region13: #{residual_block_pallas.5} parent=11 // pred_check
        %p162 = pneg %p70
      $region14: #{residual_block_pallas.5} parent=11 // pred_check_branch
        %164 = sbr.rel (%p162) target = $region16
      $region15: #{residual_block_pallas.5} parent=11 // pred_region
        _
      $region16: #{residual_block_pallas.5} parent=11 // pred_fallthru
        _
      // Predicated region
      $region17: #{residual_block_pallas.5} parent=11 // pred_check
        %p165 = pneg %p91
      $region18: #{residual_block_pallas.5} parent=11 // pred_check_branch
        %167 = sbr.rel (%p165) target = $region20
      $region19: #{residual_block_pallas.5} parent=11 // pred_region
        _
      $region20: #{residual_block_pallas.5} parent=11 // pred_fallthru
        _
    $region12: #{residual_block_pallas.5} parent=5 // pred_fallthru
      _
    %p168 = scmp.lt.s32.totalorder %s11, 4
    // Predicated region
    $region21: #{residual_block_pallas.5} parent=5 // pred_check
      %p169 = pneg %p168
    $region22: #{residual_block_pallas.5} parent=5 // pred_check_branch
      %171 = sbr.rel (%p169) target = $region24
    $region23: #{residual_block_pallas.5} parent=5 // pred_region
      // Predicated region
      $region25: #{residual_block_pallas.5} parent=23 // pred_check
        %p172 = pneg %p43
      $region26: #{residual_block_pallas.5} parent=23 // pred_check_branch
        %174 = sbr.rel (%p172) target = $region28
      $region27: #{residual_block_pallas.5} parent=23 // pred_region
        %p175 = scmp.lt.s32.totalorder %s18, 1
        %s176 = scalar_select %p175, %s18, 1
        %s177 = smul.addr %s176, 32
        %s178 = smul.addr %s177, 8
        %s179 = scalar_lea.vmem %s0, %s178
      $region28: #{residual_block_pallas.5} parent=23 // pred_fallthru
        _
    $region24: #{residual_block_pallas.5} parent=5 // pred_fallthru
      _
    %p180 = scmp.le.s32.totalorder 1, %s11
    %p181 = scmp.lt.s32.totalorder %s11, 5
    %p182 = pnand %p180, %p181
    %p183 = pneg %p182
    // Predicated region
    $region29: #{residual_block_pallas.5} parent=5 // pred_check
      _
    $region30: #{residual_block_pallas.5} parent=5 // pred_check_branch
      %185 = sbr.rel (%p182) target = $region32
    $region31: #{residual_block_pallas.5} parent=5 // pred_region
      %s186 = ssub.s32 %s11, 1
      %p187 = scmp.lt.s32.totalorder %s20, 1
      %s188 = scalar_select %p187, %s20, 1
      %s189 = smul.addr %s188, 32
      %s190 = smul.addr %s189, 8
      %s191 = scalar_lea.vmem %s0, %s190
      %p192 = pneg %p49
      %p193 = pneg %p46
      %p194 = pneg %p70
      %p195 = pneg %p67
      %p196 = pneg %p91
      %p197 = pneg %p88
      %p198 = pneg %p119
      %p199 = pneg %p116
      %s200 = smul.u32 8, %s21
      %p201 = scmp.lt.s32.totalorder %s20, 1
      %s202 = scalar_select %p201, %s20, 1
      %p203 = scmp.lt.s32.totalorder %s200, 15
      %s204 = scalar_select %p203, %s200, 15
      %s205 = smul.addr %s204, 2
      %s206 = smul.addr %s202, 32
      %s207 = sadd.s32 %s205, %s206
      %s208 = smul.addr %s207, 8
      %s209 = scalar_lea.vmem %s3, %s208
      %p210 = pneg %p147
      %p211 = pneg %p144
      %p212 = scmp.lt.s32.totalorder %s20, 1
      %s213 = scalar_select %p212, %s20, 1
      %p214 = scmp.lt.s32.totalorder %s21, 1
      %s215 = scalar_select %p214, %s21, 1
      %s216 = smul.addr %s213, 2
      %s217 = sadd.s32 %s215, %s216
      %s218 = smul.addr %s217, 2
      %s219 = scalar_lea.vmem %s4, %s218
      %p220 = scmp.lt.s32.totalorder %s20, 1
      %s221 = scalar_select %p220, %s20, 1
      %s222 = smul.addr %s221, 32
      %s223 = smul.addr %s222, 8
      %s224 = scalar_lea.vmem %s0, %s223
      %s225 = smul.u32 8, %s21
      %p226 = scmp.lt.s32.totalorder %s20, 1
      %s227 = scalar_select %p226, %s20, 1
      %p228 = scmp.lt.s32.totalorder %s225, 15
      %s229 = scalar_select %p228, %s225, 15
      %s230 = smul.addr %s229, 2
      %s231 = smul.addr %s227, 32
      %s232 = sadd.s32 %s230, %s231
      %s233 = smul.addr %s232, 8
      %s234 = scalar_lea.vmem %s3, %s233
      %s235 = smul.u32 8, %s21
      %p236 = scmp.lt.s32.totalorder %s20, 1
      %s237 = scalar_select %p236, %s20, 1
      %p238 = scmp.lt.s32.totalorder %s21, 1
      %s239 = scalar_select %p238, %s21, 1
      %s240 = smul.addr %s237, 2
      %s241 = sadd.s32 %s239, %s240
      %s242 = smul.addr %s241, 2
      %s243 = scalar_lea.vmem %s4, %s242
      %s245 = smul.u32 %s21, 8
      %s246 = smul.u32 %s245, 16
      %s247 = scalar_lea.vmem %s224, %s246
      %v248 = vld [vmem:[%s247] sm:$0xff]
      %v249 = vld [vmem:[%s247 + $0x8] sm:$0xff]
      %v250 = vld [vmem:[%s247 + $0x10] sm:$0xff]
      %v251 = vld [vmem:[%s247 + $0x18] sm:$0xff]
      %v252 = vld [vmem:[%s247 + $0x20] sm:$0xff]
      %v253 = vld [vmem:[%s247 + $0x28] sm:$0xff]
      %v254 = vld [vmem:[%s247 + $0x30] sm:$0xff]
      %v255 = vld [vmem:[%s247 + $0x38] sm:$0xff]
      %v256 = vld [vmem:[%s247 + $0x40] sm:$0xff]
      %v257 = vld [vmem:[%s247 + $0x48] sm:$0xff]
      %v258 = vld [vmem:[%s247 + $0x50] sm:$0xff]
      %v259 = vld [vmem:[%s247 + $0x58] sm:$0xff]
      %v260 = vld [vmem:[%s247 + $0x60] sm:$0xff]
      %v261 = vld [vmem:[%s247 + $0x68] sm:$0xff]
      %v262 = vld [vmem:[%s247 + $0x70] sm:$0xff]
      %v263 = vld [vmem:[%s247 + $0x78] sm:$0xff]
      %v264 = vpack.c.bf16 %v249, %v248
      %v265 = vpack.c.bf16 %v251, %v250
      %v266 = vpack.c.bf16 %v253, %v252
      %v267 = vpack.c.bf16 %v255, %v254
      %v268 = vpack.c.bf16 %v257, %v256
      %v269 = vpack.c.bf16 %v259, %v258
      %v270 = vpack.c.bf16 %v261, %v260
      %v271 = vpack.c.bf16 %v263, %v262
      %v272 = vld [vmem:[%s1] sm:$0xf]
      %v273 = vld [vmem:[%s1 + $0x4] sm:$0xf]
      %v274 = vld [vmem:[%s1 + $0x8] sm:$0xf]
      %v275 = vld [vmem:[%s1 + $0xc] sm:$0xf]
      %v276 = vld [vmem:[%s1 + $0x10] sm:$0xf]
      %v277 = vld [vmem:[%s1 + $0x14] sm:$0xf]
      %v278 = vld [vmem:[%s1 + $0x18] sm:$0xf]
      %v279 = vld [vmem:[%s1 + $0x1c] sm:$0xf]
      %v280 = vld [vmem:[%s1 + $0x20] sm:$0xf]
      %v281 = vld [vmem:[%s1 + $0x24] sm:$0xf]
      %v282 = vld [vmem:[%s1 + $0x28] sm:$0xf]
      %v283 = vld [vmem:[%s1 + $0x2c] sm:$0xf]
      %v284 = vld [vmem:[%s1 + $0x30] sm:$0xf]
      %v285 = vld [vmem:[%s1 + $0x34] sm:$0xf]
      %v286 = vld [vmem:[%s1 + $0x38] sm:$0xf]
      %v287 = vld [vmem:[%s1 + $0x3c] sm:$0xf]
      %v288 = vld [vmem:[%s2] sm:$0x1]
      %v290 = vlaneseq
      %v291 = vshrl.u32 %v290, 7
      %v292 = vsub.s32 0, %v291
      %v293 = vrot.slane %v288, %v292
      %v311 = vunpack.c.l.b16 %v272
      %v312 = vunpack.c.l.b16 %v273
      %v313 = vunpack.c.l.b16 %v274
      %v314 = vunpack.c.l.b16 %v275
      %v315 = vunpack.c.l.b16 %v276
      %v316 = vunpack.c.l.b16 %v277
      %v317 = vunpack.c.l.b16 %v278
      %v318 = vunpack.c.l.b16 %v279
      %v319 = vunpack.c.l.b16 %v280
      %v320 = vunpack.c.l.b16 %v281
      %v321 = vunpack.c.l.b16 %v282
      %v322 = vunpack.c.l.b16 %v283
      %v323 = vunpack.c.l.b16 %v284
      %v324 = vunpack.c.l.b16 %v285
      %v325 = vunpack.c.l.b16 %v286
      %v326 = vunpack.c.l.b16 %v287
      %v327 = vpack.c.b16 %v312, %v311
      %v328 = vpack.c.b16 %v314, %v313
      %v329 = vpack.c.b16 %v316, %v315
      %v330 = vpack.c.b16 %v318, %v317
      %v331 = vpack.c.b16 %v320, %v319
      %v332 = vpack.c.b16 %v322, %v321
      %v333 = vpack.c.b16 %v324, %v323
      %v334 = vpack.c.b16 %v326, %v325
      %343 = vmatprep.subr.bf16.mxu0 0
      %344 = vmatpush1.bf16.msra.mxu0 %v327
      %345 = vmatprep.subr.bf16.mxu0 0
      %346 = vmatpush1.bf16.msra.mxu0 %v328
      %347 = vmatprep.subr.bf16.mxu0 0
      %348 = vmatpush1.bf16.msra.mxu0 %v329
      %349 = vmatprep.subr.bf16.mxu0 0
      %350 = vmatpush1.bf16.msra.mxu0 %v330
      %351 = vmatprep.subr.bf16.mxu0 0
      %352 = vmatpush1.bf16.msra.mxu0 %v331
      %353 = vmatprep.subr.bf16.mxu0 0
      %354 = vmatpush1.bf16.msra.mxu0 %v332
      %355 = vmatprep.subr.bf16.mxu0 0
      %356 = vmatpush1.bf16.msra.mxu0 %v333
      %357 = vmatprep.subr.bf16.mxu0 0
      %358 = vmatpush1.bf16.msra.mxu0 %v334
      %359 = vmatprep.subr.bf16.mxu0 0
      %360 = vmatpush1.bf16.msra.mxu0 0
      %361 = vmatprep.subr.bf16.mxu0 0
      %362 = vmatpush1.bf16.msra.mxu0 0
      %363 = vmatprep.subr.bf16.mxu0 0
      %364 = vmatpush1.bf16.msra.mxu0 0
      %365 = vmatprep.subr.bf16.mxu0 0
      %366 = vmatpush1.bf16.msra.mxu0 0
      %367 = vmatprep.subr.bf16.mxu0 0
      %368 = vmatpush1.bf16.msra.mxu0 0
      %369 = vmatprep.subr.bf16.mxu0 0
      %370 = vmatpush1.bf16.msra.mxu0 0
      %371 = vmatprep.subr.bf16.mxu0 0
      %372 = vmatpush1.bf16.msra.mxu0 0
      %373 = vmatprep.subr.bf16.mxu0 0
      %374 = vmatpush1.bf16.msra.mxu0 0
      %375 = vmatprep.mubr.bf16.mxu0 0
      %376 = vmatmul.mubr.bf16.gmra.mrb[0].mxu0 %v264
      %v377 = vpop.f32.mrb[0].mxu0
      %v378 = vadd.f32 %v293, %v377
      %v379 = vpop.f32.mrb[0].mxu0
      %v380 = vpop.f32.mrb[0].mxu0
      %v381 = vadd.f32 %v293, %v380
      %v382 = vpop.f32.mrb[0].mxu0
      %383 = vmatprep.mubr.bf16.mxu0 0
      %384 = vmatmul.mubr.bf16.gmra.mrb[0].mxu0 %v265
      %v385 = vpop.f32.mrb[0].mxu0
      %v386 = vadd.f32 %v293, %v385
      %v387 = vpop.f32.mrb[0].mxu0
      %v388 = vpop.f32.mrb[0].mxu0
      %v389 = vadd.f32 %v293, %v388
      %v390 = vpop.f32.mrb[0].mxu0
      %391 = vmatprep.mubr.bf16.mxu0 0
      %392 = vmatmul.mubr.bf16.gmra.mrb[0].mxu0 %v266
      %v393 = vpop.f32.mrb[0].mxu0
      %v394 = vadd.f32 %v293, %v393
      %v395 = vpop.f32.mrb[0].mxu0
      %v396 = vpop.f32.mrb[0].mxu0
      %v397 = vadd.f32 %v293, %v396
      %v398 = vpop.f32.mrb[0].mxu0
      %399 = vmatprep.mubr.bf16.mxu0 0
      %400 = vmatmul.mubr.bf16.gmra.mrb[0].mxu0 %v267
      %v401 = vpop.f32.mrb[0].mxu0
      %v402 = vadd.f32 %v293, %v401
      %v403 = vpop.f32.mrb[0].mxu0
      %v404 = vpop.f32.mrb[0].mxu0
      %v405 = vadd.f32 %v293, %v404
      %v406 = vpop.f32.mrb[0].mxu0
      %407 = vmatprep.mubr.bf16.mxu0 0
      %408 = vmatmul.mubr.bf16.gmra.mrb[0].mxu0 %v268
      %v409 = vpop.f32.mrb[0].mxu0
      %v410 = vadd.f32 %v293, %v409
      %v411 = vpop.f32.mrb[0].mxu0
      %v412 = vpop.f32.mrb[0].mxu0
      %v413 = vadd.f32 %v293, %v412
      %v414 = vpop.f32.mrb[0].mxu0
      %415 = vmatprep.mubr.bf16.mxu0 0
      %416 = vmatmul.mubr.bf16.gmra.mrb[0].mxu0 %v269
      %v417 = vpop.f32.mrb[0].mxu0
      %v418 = vadd.f32 %v293, %v417
      %v419 = vpop.f32.mrb[0].mxu0
      %v420 = vpop.f32.mrb[0].mxu0
      %v421 = vadd.f32 %v293, %v420
      %v422 = vpop.f32.mrb[0].mxu0
      %423 = vmatprep.mubr.bf16.mxu0 0
      %424 = vmatmul.mubr.bf16.gmra.mrb[0].mxu0 %v270
      %v425 = vpop.f32.mrb[0].mxu0
      %v426 = vadd.f32 %v293, %v425
      %v427 = vpop.f32.mrb[0].mxu0
      %v428 = vpop.f32.mrb[0].mxu0
      %v429 = vadd.f32 %v293, %v428
      %v430 = vpop.f32.mrb[0].mxu0
      %431 = vmatprep.mubr.bf16.mxu0 0
      %432 = vmatmul.mubr.bf16.gmra.mrb[0].mxu0 %v271
      %v433 = vpop.f32.mrb[0].mxu0
      %v434 = vadd.f32 %v293, %v433
      %v435 = vpop.f32.mrb[0].mxu0
      %v436 = vpop.f32.mrb[0].mxu0
      %v437 = vadd.f32 %v293, %v436
      %v438 = vpop.f32.mrb[0].mxu0
      %439 = vdwg.mxu0
      %440 = vst [vmem:[%s234] sm:$0xff] %v378
      %441 = vst [vmem:[%s234 + $0x8] sm:$0xff] %v381
      %442 = vst [vmem:[%s234 + $0x10] sm:$0xff] %v386
      %443 = vst [vmem:[%s234 + $0x18] sm:$0xff] %v389
      %444 = vst [vmem:[%s234 + $0x20] sm:$0xff] %v394
      %445 = vst [vmem:[%s234 + $0x28] sm:$0xff] %v397
      %446 = vst [vmem:[%s234 + $0x30] sm:$0xff] %v402
      %447 = vst [vmem:[%s234 + $0x38] sm:$0xff] %v405
      %448 = vst [vmem:[%s234 + $0x40] sm:$0xff] %v410
      %449 = vst [vmem:[%s234 + $0x48] sm:$0xff] %v413
      %450 = vst [vmem:[%s234 + $0x50] sm:$0xff] %v418
      %451 = vst [vmem:[%s234 + $0x58] sm:$0xff] %v421
      %452 = vst [vmem:[%s234 + $0x60] sm:$0xff] %v426
      %453 = vst [vmem:[%s234 + $0x68] sm:$0xff] %v429
      %454 = vst [vmem:[%s234 + $0x70] sm:$0xff] %v434
      %455 = vst [vmem:[%s234 + $0x78] sm:$0xff] %v437
      %v456 = vadd.f32 %v378, %v381
      %v457 = vadd.f32 %v456, %v386
      %v458 = vadd.f32 %v457, %v389
      %v459 = vadd.f32 %v458, %v394
      %v460 = vadd.f32 %v459, %v397
      %v461 = vadd.f32 %v460, %v402
      %v462 = vadd.f32 %v461, %v405
      %v463 = vadd.f32 %v462, %v410
      %v464 = vadd.f32 %v463, %v413
      %v465 = vadd.f32 %v464, %v418
      %v466 = vadd.f32 %v465, %v421
      %v467 = vadd.f32 %v466, %v426
      %v468 = vadd.f32 %v467, %v429
      %v469 = vadd.f32 %v468, %v434
      %v470 = vadd.f32 %v469, %v437
      %v471 = vrot.slane %v470, 4
      %v472 = vadd.f32 %v470, %v471
      %v473 = vrot.slane %v472, 2
      %v474 = vadd.f32 %v472, %v473
      %v475 = vrot.slane %v474, 1
      %v476 = vadd.f32 %v474, %v475
      %477 = vst [vmem:[%s243] sm:$0x1] %v476
      %v478 = vmul.f32 %v378, %v378
      %v479 = vmul.f32 %v381, %v381
      %v480 = vmul.f32 %v386, %v386
      %v481 = vmul.f32 %v389, %v389
      %v482 = vmul.f32 %v394, %v394
      %v483 = vmul.f32 %v397, %v397
      %v484 = vmul.f32 %v402, %v402
      %v485 = vmul.f32 %v405, %v405
      %v486 = vmul.f32 %v410, %v410
      %v487 = vmul.f32 %v413, %v413
      %v488 = vmul.f32 %v418, %v418
      %v489 = vmul.f32 %v421, %v421
      %v490 = vmul.f32 %v426, %v426
      %v491 = vmul.f32 %v429, %v429
      %v492 = vmul.f32 %v434, %v434
      %v493 = vmul.f32 %v437, %v437
      %v494 = vadd.f32 %v478, %v479
      %v495 = vadd.f32 %v494, %v480
      %v496 = vadd.f32 %v495, %v481
      %v497 = vadd.f32 %v496, %v482
      %v498 = vadd.f32 %v497, %v483
      %v499 = vadd.f32 %v498, %v484
      %v500 = vadd.f32 %v499, %v485
      %v501 = vadd.f32 %v500, %v486
      %v502 = vadd.f32 %v501, %v487
      %v503 = vadd.f32 %v502, %v488
      %v504 = vadd.f32 %v503, %v489
      %v505 = vadd.f32 %v504, %v490
      %v506 = vadd.f32 %v505, %v491
      %v507 = vadd.f32 %v506, %v492
      %v508 = vadd.f32 %v507, %v493
      %v509 = vrot.slane %v508, 4
      %v510 = vadd.f32 %v508, %v509
      %v511 = vrot.slane %v510, 2
      %v512 = vadd.f32 %v510, %v511
      %v513 = vrot.slane %v512, 1
      %v514 = vadd.f32 %v512, %v513
      %515 = vst [vmem:[%s243 + $0x1] sm:$0x1] %v514
      %s516 = smul.u32 8, %s21
      %p517 = scmp.lt.s32.totalorder %s20, 1
      %s518 = scalar_select %p517, %s20, 1
      %p519 = scmp.lt.s32.totalorder %s516, 15
      %s520 = scalar_select %p519, %s516, 15
      %s521 = smul.addr %s520, 2
      %s522 = smul.addr %s518, 32
      %s523 = sadd.s32 %s521, %s522
      %s524 = smul.addr %s523, 8
      %s525 = scalar_lea.vmem %s3, %s524
      %p526 = scmp.lt.s32.totalorder %s20, 1
      %s527 = scalar_select %p526, %s20, 1
      %p528 = scmp.lt.s32.totalorder %s21, 1
      %s529 = scalar_select %p528, %s21, 1
      %s530 = smul.addr %s527, 2
      %s531 = sadd.s32 %s529, %s530
      %s532 = smul.addr %s531, 2
      %s533 = scalar_lea.vmem %s4, %s532
      // Predicated region
      $region33: #{residual_block_pallas.5} parent=31 // pred_check
        %p534 = pneg %p116
      $region34: #{residual_block_pallas.5} parent=31 // pred_check_branch
        %536 = sbr.rel (%p534) target = $region36
      $region35: #{residual_block_pallas.5} parent=31 // pred_region
        %s537 = smul.u32 8, %s21
      $region36: #{residual_block_pallas.5} parent=31 // pred_fallthru
        _
      // Predicated region
      $region37: #{residual_block_pallas.5} parent=31 // pred_check
        %p538 = pneg %p144
      $region38: #{residual_block_pallas.5} parent=31 // pred_check_branch
        %540 = sbr.rel (%p538) target = $region40
      $region39: #{residual_block_pallas.5} parent=31 // pred_region
        _
      $region40: #{residual_block_pallas.5} parent=31 // pred_fallthru
        _
    $region32: #{residual_block_pallas.5} parent=5 // pred_fallthru
      _
    %p541 = scmp.le.s32.totalorder 2, %s11
    // Predicated region
    $region41: #{residual_block_pallas.5} parent=5 // pred_check
      %p542 = pneg %p541
    $region42: #{residual_block_pallas.5} parent=5 // pred_check_branch
      %544 = sbr.rel (%p542) target = $region44
    $region43: #{residual_block_pallas.5} parent=5 // pred_region
      %s545 = ssub.s32 %s11, 2
      // Predicated region
      $region45: #{residual_block_pallas.5} parent=43 // pred_check
        %p546 = pneg %p122
      $region46: #{residual_block_pallas.5} parent=43 // pred_check_branch
        %548 = sbr.rel (%p546) target = $region48
      $region47: #{residual_block_pallas.5} parent=43 // pred_region
        %s549 = smul.u32 8, %s23
        %p550 = scmp.lt.s32.totalorder %s22, 1
        %s551 = scalar_select %p550, %s22, 1
        %p552 = scmp.lt.s32.totalorder %s549, 15
        %s553 = scalar_select %p552, %s549, 15
        %s554 = smul.addr %s553, 2
        %s555 = smul.addr %s551, 32
        %s556 = sadd.s32 %s554, %s555
        %s557 = smul.addr %s556, 8
        %s558 = scalar_lea.vmem %s3, %s557
      $region48: #{residual_block_pallas.5} parent=43 // pred_fallthru
        _
      // Predicated region
      $region49: #{residual_block_pallas.5} parent=43 // pred_check
        %p559 = pneg %p150
      $region50: #{residual_block_pallas.5} parent=43 // pred_check_branch
        %561 = sbr.rel (%p559) target = $region52
      $region51: #{residual_block_pallas.5} parent=43 // pred_region
        %p562 = scmp.lt.s32.totalorder %s22, 1
        %s563 = scalar_select %p562, %s22, 1
        %p564 = scmp.lt.s32.totalorder %s23, 1
        %s565 = scalar_select %p564, %s23, 1
        %s566 = smul.addr %s563, 2
        %s567 = sadd.s32 %s565, %s566
        %s568 = smul.addr %s567, 2
        %s569 = scalar_lea.vmem %s4, %s568
      $region52: #{residual_block_pallas.5} parent=43 // pred_fallthru
        _
    $region44: #{residual_block_pallas.5} parent=5 // pred_fallthru
      _
  $region6: #{residual_block_pallas.5} parent=0 // loop_footer
    %s15 = sadd.s32 1, %s11
  $region7: #{residual_block_pallas.5} parent=0 // loop_footer_branch
    %10 = sbr.rel target = $region3
  $region8: #{residual_block_pallas.5} parent=0 // loop_exit
    _

// kernel: residual_block_pallas.9
$region0: #{residual_block_pallas.9}
  #allocation0 [shape = 'u32[]', space=smem, size = 0x4, offset = 0x4, fixed_abs, tag = 'smem constant byte address 0x4 - core index']
  #allocation1 [shape = 'u32[144,128]{1,0:T(1,128)}', space=vmem, size = 0x12000, scoped, tag = 'internal scratch']
  #allocation2 [shape = 'f32[8,16,128]{2,1,0:T(8,128)}', space=vmem, size = 0x10000, scoped, tag = 'scratch operand']
  #allocation3 [shape = 'f32[4,16,128]{2,1,0:T(8,128)}', space=vmem, size = 0x8000, scoped, tag = 'scratch operand']
  %s0 = inlined_call_operand.vmem [shape: f32[2,16,16,128], index: 0, kind: input, shape index: {}]
  %s1 = inlined_call_operand.vmem [shape: f32[2,16,16,128], index: 1, kind: input, shape index: {}]
  %s2 = inlined_call_operand.vmem [shape: f32[1,128], index: 2, kind: input, shape index: {}]
  %s3 = inlined_call_operand.vmem [shape: f32[1,128], index: 3, kind: input, shape index: {}]
  %s4 = inlined_call_operand.vmem [shape: f32[1,128], index: 4, kind: input, shape index: {}]
  %s5 = inlined_call_operand.vmem [shape: f32[1,128], index: 5, kind: input, shape index: {}]
  %s6 = inlined_call_operand.vmem [shape: f32[2,8,8,128], index: 6, kind: output, shape index: {}]
  %s7 = sld [smem:[#allocation0]]
  $region57: #{residual_block_pallas.9} parent=0
    _
  %s9 = ssub.s32 1, %s7
  %s10 = scalar_select 0, %s9, %s7
  loop: start=0, step=1, limit=6
  $region2: #{residual_block_pallas.9} parent=0 // loop_pre_header
    _
  $region3: #{residual_block_pallas.9} parent=0 // loop_header
    %s12 = sphi 0, %s16
    %p13 = scmp.ge.s32.totalorder %s12, 6
    %s19 = sphi 0, %s31
    %s20 = sphi 0, %s27
    %s21 = sphi 0, %s19
    %s22 = sphi 0, %s20
    %s23 = sphi 0, %s21
    %s24 = sphi 0, %s22
    %s36 = sphi 0, %s38
    %s39 = sphi 0, %s36
    %s40 = sphi 0, %s39
    %s56 = sphi 0, %s40
    %s64 = sphi 0, %s66
    %s67 = sphi 0, %s64
    %s68 = sphi 0, %s67
    %s84 = sphi 0, %s68
    %s88 = sphi 0, %s88
    %s90 = sphi 0, %s88
    %s91 = sphi 0, %s90
    %s105 = sphi 0, %s91
    %s109 = sphi 0, %s109
    %s111 = sphi 0, %s109
    %s112 = sphi 0, %s111
    %s126 = sphi 0, %s112
    %s130 = sphi 0, %s130
    %s132 = sphi 0, %s130
    %s133 = sphi 0, %s132
    %s147 = sphi 0, %s133
    %s151 = sphi 0, %s151
    %s153 = sphi 0, %s151
    %s154 = sphi 0, %s153
    %s168 = sphi 0, %s154
    %s176 = sphi 0, %s178
    %s179 = sphi 0, %s176
    %s180 = sphi 0, %s179
    %s196 = sphi 0, %s180
  $region4: #{residual_block_pallas.9} parent=0 // loop_header_branch
    %15 = sbr.rel (%p13) target = $region8
  $region5: #{residual_block_pallas.9} parent=0 // loop_body
    %s17 = ssub.s32 %s12, 1
    %s18 = ssub.s32 %s12, 2
    %s25 = sadd.s32 1, %s20
    %p26 = scmp.ge.s32.totalorder %s25, 2
    %s27 = scalar_select %p26, 0, %s25
    %s28 = sadd.s32 1, %s19
    %s29 = scalar_select %p26, %s28, %s19
    %p30 = scmp.ge.s32.totalorder %s29, 2
    %s31 = scalar_select %p30, 0, %s29
    %s32 = ssub.s32 %s19, %s31
    %s33 = ssub.s32 %s20, %s27
    %s34 = sor.u32 %s32, %s33
    %p35 = scmp.eq.s32.totalorder %s34, 0
    %s37 = sadd.s32 %s36, 1
    %s38 = scalar_select %p35, %s36, %s37
    %p41 = pneg %p35
    %p42 = scmp.eq.s32.totalorder %s12, 3
    %p43 = por %p41, %p42
    %p44 = scmp.ne.s32.totalorder %s36, %s39
    %p45 = scmp.eq.s32.totalorder %s12, 0
    %p46 = por %p44, %p45
    %p47 = scmp.ne.s32.totalorder %s36, %s39
    %p48 = scmp.eq.s32.totalorder %s17, 3
    %p49 = por %p47, %p48
    %p50 = scmp.ne.s32.totalorder %s39, %s40
    %p51 = scmp.eq.s32.totalorder %s17, 0
    %p52 = por %p50, %p51
    %p53 = scmp.ne.s32.totalorder %s39, %s40
    %p54 = scmp.eq.s32.totalorder %s18, 3
    %p55 = por %p53, %p54
    %p57 = scmp.ne.s32.totalorder %s40, %s56
    %p58 = scmp.eq.s32.totalorder %s18, 0
    %p59 = por %p57, %p58
    %s60 = ssub.s32 %s19, %s31
    %s61 = ssub.s32 %s20, %s27
    %s62 = sor.u32 %s60, %s61
    %p63 = scmp.eq.s32.totalorder %s62, 0
    %s65 = sadd.s32 %s64, 1
    %s66 = scalar_select %p63, %s64, %s65
    %p69 = pneg %p63
    %p70 = scmp.eq.s32.totalorder %s12, 3
    %p71 = por %p69, %p70
    %p72 = scmp.ne.s32.totalorder %s64, %s67
    %p73 = scmp.eq.s32.totalorder %s12, 0
    %p74 = por %p72, %p73
    %p75 = scmp.ne.s32.totalorder %s64, %s67
    %p76 = scmp.eq.s32.totalorder %s17, 3
    %p77 = por %p75, %p76
    %p78 = scmp.ne.s32.totalorder %s67, %s68
    %p79 = scmp.eq.s32.totalorder %s17, 0
    %p80 = por %p78, %p79
    %p81 = scmp.ne.s32.totalorder %s67, %s68
    %p82 = scmp.eq.s32.totalorder %s18, 3
    %p83 = por %p81, %p82
    %p85 = scmp.ne.s32.totalorder %s68, %s84
    %p86 = scmp.eq.s32.totalorder %s18, 0
    %p87 = por %p85, %p86
    %s89 = sadd.s32 %s88, 1
    %p92 = scmp.eq.s32.totalorder %s12, 3
    %p93 = scmp.ne.s32.totalorder %s88, %s90
    %p94 = scmp.eq.s32.totalorder %s12, 0
    %p95 = por %p93, %p94
    %p96 = scmp.ne.s32.totalorder %s88, %s90
    %p97 = scmp.eq.s32.totalorder %s17, 3
    %p98 = por %p96, %p97
    %p99 = scmp.ne.s32.totalorder %s90, %s91
    %p100 = scmp.eq.s32.totalorder %s17, 0
    %p101 = por %p99, %p100
    %p102 = scmp.ne.s32.totalorder %s90, %s91
    %p103 = scmp.eq.s32.totalorder %s18, 3
    %p104 = por %p102, %p103
    %p106 = scmp.ne.s32.totalorder %s91, %s105
    %p107 = scmp.eq.s32.totalorder %s18, 0
    %p108 = por %p106, %p107
    %s110 = sadd.s32 %s109, 1
    %p113 = scmp.eq.s32.totalorder %s12, 3
    %p114 = scmp.ne.s32.totalorder %s109, %s111
    %p115 = scmp.eq.s32.totalorder %s12, 0
    %p116 = por %p114, %p115
    %p117 = scmp.ne.s32.totalorder %s109, %s111
    %p118 = scmp.eq.s32.totalorder %s17, 3
    %p119 = por %p117, %p118
    %p120 = scmp.ne.s32.totalorder %s111, %s112
    %p121 = scmp.eq.s32.totalorder %s17, 0
    %p122 = por %p120, %p121
    %p123 = scmp.ne.s32.totalorder %s111, %s112
    %p124 = scmp.eq.s32.totalorder %s18, 3
    %p125 = por %p123, %p124
    %p127 = scmp.ne.s32.totalorder %s112, %s126
    %p128 = scmp.eq.s32.totalorder %s18, 0
    %p129 = por %p127, %p128
    %s131 = sadd.s32 %s130, 1
    %p134 = scmp.eq.s32.totalorder %s12, 3
    %p135 = scmp.ne.s32.totalorder %s130, %s132
    %p136 = scmp.eq.s32.totalorder %s12, 0
    %p137 = por %p135, %p136
    %p138 = scmp.ne.s32.totalorder %s130, %s132
    %p139 = scmp.eq.s32.totalorder %s17, 3
    %p140 = por %p138, %p139
    %p141 = scmp.ne.s32.totalorder %s132, %s133
    %p142 = scmp.eq.s32.totalorder %s17, 0
    %p143 = por %p141, %p142
    %p144 = scmp.ne.s32.totalorder %s132, %s133
    %p145 = scmp.eq.s32.totalorder %s18, 3
    %p146 = por %p144, %p145
    %p148 = scmp.ne.s32.totalorder %s133, %s147
    %p149 = scmp.eq.s32.totalorder %s18, 0
    %p150 = por %p148, %p149
    %s152 = sadd.s32 %s151, 1
    %p155 = scmp.eq.s32.totalorder %s12, 3
    %p156 = scmp.ne.s32.totalorder %s151, %s153
    %p157 = scmp.eq.s32.totalorder %s12, 0
    %p158 = por %p156, %p157
    %p159 = scmp.ne.s32.totalorder %s151, %s153
    %p160 = scmp.eq.s32.totalorder %s17, 3
    %p161 = por %p159, %p160
    %p162 = scmp.ne.s32.totalorder %s153, %s154
    %p163 = scmp.eq.s32.totalorder %s17, 0
    %p164 = por %p162, %p163
    %p165 = scmp.ne.s32.totalorder %s153, %s154
    %p166 = scmp.eq.s32.totalorder %s18, 3
    %p167 = por %p165, %p166
    %p169 = scmp.ne.s32.totalorder %s154, %s168
    %p170 = scmp.eq.s32.totalorder %s18, 0
    %p171 = por %p169, %p170
    %s172 = ssub.s32 %s19, %s31
    %s173 = ssub.s32 %s20, %s27
    %s174 = sor.u32 %s172, %s173
    %p175 = scmp.eq.s32.totalorder %s174, 0
    %s177 = sadd.s32 %s176, 1
    %s178 = scalar_select %p175, %s176, %s177
    %p181 = pneg %p175
    %p182 = scmp.eq.s32.totalorder %s12, 3
    %p183 = por %p181, %p182
    %p184 = scmp.ne.s32.totalorder %s176, %s179
    %p185 = scmp.eq.s32.totalorder %s12, 0
    %p186 = por %p184, %p185
    %p187 = scmp.ne.s32.totalorder %s176, %s179
    %p188 = scmp.eq.s32.totalorder %s17, 3
    %p189 = por %p187, %p188
    %p190 = scmp.ne.s32.totalorder %s179, %s180
    %p191 = scmp.eq.s32.totalorder %s17, 0
    %p192 = por %p190, %p191
    %p193 = scmp.ne.s32.totalorder %s179, %s180
    %p194 = scmp.eq.s32.totalorder %s18, 3
    %p195 = por %p193, %p194
    %p197 = scmp.ne.s32.totalorder %s180, %s196
    %p198 = scmp.eq.s32.totalorder %s18, 0
    %p199 = por %p197, %p198
    %p200 = scmp.le.s32.totalorder 1, %s12
    %p201 = scmp.lt.s32.totalorder %s12, 5
    %p202 = pnand %p200, %p201
    %p203 = pneg %p202
    // Predicated region
    $region9: #{residual_block_pallas.9} parent=5 // pred_check
      _
    $region10: #{residual_block_pallas.9} parent=5 // pred_check_branch
      %205 = sbr.rel (%p202) target = $region12
    $region11: #{residual_block_pallas.9} parent=5 // pred_region
      %s206 = ssub.s32 %s12, 1
      // Predicated region
      $region13: #{residual_block_pallas.9} parent=11 // pred_check
        %p207 = pneg %p101
      $region14: #{residual_block_pallas.9} parent=11 // pred_check_branch
        %209 = sbr.rel (%p207) target = $region16
      $region15: #{residual_block_pallas.9} parent=11 // pred_region
        _
      $region16: #{residual_block_pallas.9} parent=11 // pred_fallthru
        _
      // Predicated region
      $region17: #{residual_block_pallas.9} parent=11 // pred_check
        %p210 = pneg %p122
      $region18: #{residual_block_pallas.9} parent=11 // pred_check_branch
        %212 = sbr.rel (%p210) target = $region20
      $region19: #{residual_block_pallas.9} parent=11 // pred_region
        _
      $region20: #{residual_block_pallas.9} parent=11 // pred_fallthru
        _
      // Predicated region
      $region21: #{residual_block_pallas.9} parent=11 // pred_check
        %p213 = pneg %p143
      $region22: #{residual_block_pallas.9} parent=11 // pred_check_branch
        %215 = sbr.rel (%p213) target = $region24
      $region23: #{residual_block_pallas.9} parent=11 // pred_region
        _
      $region24: #{residual_block_pallas.9} parent=11 // pred_fallthru
        _
      // Predicated region
      $region25: #{residual_block_pallas.9} parent=11 // pred_check
        %p216 = pneg %p164
      $region26: #{residual_block_pallas.9} parent=11 // pred_check_branch
        %218 = sbr.rel (%p216) target = $region28
      $region27: #{residual_block_pallas.9} parent=11 // pred_region
        _
      $region28: #{residual_block_pallas.9} parent=11 // pred_fallthru
        _
    $region12: #{residual_block_pallas.9} parent=5 // pred_fallthru
      _
    %p219 = scmp.lt.s32.totalorder %s12, 4
    // Predicated region
    $region29: #{residual_block_pallas.9} parent=5 // pred_check
      %p220 = pneg %p219
    $region30: #{residual_block_pallas.9} parent=5 // pred_check_branch
      %222 = sbr.rel (%p220) target = $region32
    $region31: #{residual_block_pallas.9} parent=5 // pred_region
      // Predicated region
      $region33: #{residual_block_pallas.9} parent=31 // pred_check
        %p223 = pneg %p46
      $region34: #{residual_block_pallas.9} parent=31 // pred_check_branch
        %225 = sbr.rel (%p223) target = $region36
      $region35: #{residual_block_pallas.9} parent=31 // pred_region
        %s226 = smul.u32 8, %s20
        %p227 = scmp.lt.s32.totalorder %s19, 1
        %s228 = scalar_select %p227, %s19, 1
        %p229 = scmp.lt.s32.totalorder %s226, 15
        %s230 = scalar_select %p229, %s226, 15
        %s231 = smul.addr %s230, 2
        %s232 = smul.addr %s228, 32
        %s233 = sadd.s32 %s231, %s232
        %s234 = smul.addr %s233, 8
        %s235 = scalar_lea.vmem %s0, %s234
        %s236 = smul.u32 8, %s20
      $region36: #{residual_block_pallas.9} parent=31 // pred_fallthru
        _
      // Predicated region
      $region37: #{residual_block_pallas.9} parent=31 // pred_check
        %p237 = pneg %p74
      $region38: #{residual_block_pallas.9} parent=31 // pred_check_branch
        %239 = sbr.rel (%p237) target = $region40
      $region39: #{residual_block_pallas.9} parent=31 // pred_region
        %s240 = smul.u32 8, %s20
        %p241 = scmp.lt.s32.totalorder %s19, 1
        %s242 = scalar_select %p241, %s19, 1
        %p243 = scmp.lt.s32.totalorder %s240, 15
        %s244 = scalar_select %p243, %s240, 15
        %s245 = smul.addr %s244, 2
        %s246 = smul.addr %s242, 32
        %s247 = sadd.s32 %s245, %s246
        %s248 = smul.addr %s247, 8
        %s249 = scalar_lea.vmem %s1, %s248
        %s250 = smul.u32 8, %s20
      $region40: #{residual_block_pallas.9} parent=31 // pred_fallthru
        _
    $region32: #{residual_block_pallas.9} parent=5 // pred_fallthru
      _
    %p251 = scmp.le.s32.totalorder 1, %s12
    %p252 = scmp.lt.s32.totalorder %s12, 5
    %p253 = pnand %p251, %p252
    %p254 = pneg %p253
    // Predicated region
    $region41: #{residual_block_pallas.9} parent=5 // pred_check
      _
    $region42: #{residual_block_pallas.9} parent=5 // pred_check_branch
      %256 = sbr.rel (%p253) target = $region44
    $region43: #{residual_block_pallas.9} parent=5 // pred_region
      %s257 = ssub.s32 %s12, 1
      %s258 = smul.u32 8, %s22
      %p259 = scmp.lt.s32.totalorder %s21, 1
      %s260 = scalar_select %p259, %s21, 1
      %p261 = scmp.lt.s32.totalorder %s258, 15
      %s262 = scalar_select %p261, %s258, 15
      %s263 = smul.addr %s262, 2
      %s264 = smul.addr %s260, 32
      %s265 = sadd.s32 %s263, %s264
      %s266 = smul.addr %s265, 8
      %s267 = scalar_lea.vmem %s0, %s266
      %p268 = pneg %p52
      %p269 = pneg %p49
      %s270 = smul.u32 8, %s22
      %p271 = scmp.lt.s32.totalorder %s21, 1
      %s272 = scalar_select %p271, %s21, 1
      %p273 = scmp.lt.s32.totalorder %s270, 15
      %s274 = scalar_select %p273, %s270, 15
      %s275 = smul.addr %s274, 2
      %s276 = smul.addr %s272, 32
      %s277 = sadd.s32 %s275, %s276
      %s278 = smul.addr %s277, 8
      %s279 = scalar_lea.vmem %s1, %s278
      %p280 = pneg %p80
      %p281 = pneg %p77
      %p282 = pneg %p101
      %p283 = pneg %p98
      %p284 = pneg %p122
      %p285 = pneg %p119
      %p286 = pneg %p143
      %p287 = pneg %p140
      %p288 = pneg %p164
      %p289 = pneg %p161
      %p290 = pneg %p192
      %p291 = pneg %p189
      %s292 = smul.u32 4, %s22
      %p293 = scmp.lt.s32.totalorder %s21, 1
      %s294 = scalar_select %p293, %s21, 1
      %p295 = scmp.lt.s32.totalorder %s292, 7
      %s296 = scalar_select %p295, %s292, 7
      %s297 = smul.addr %s294, 8
      %s298 = sadd.s32 %s296, %s297
      %s299 = smul.addr %s298, 8
      %s300 = scalar_lea.vmem %s6, %s299
      %s301 = smul.u32 8, %s22
      %p302 = scmp.lt.s32.totalorder %s21, 1
      %s303 = scalar_select %p302, %s21, 1
      %p304 = scmp.lt.s32.totalorder %s301, 15
      %s305 = scalar_select %p304, %s301, 15
      %s306 = smul.addr %s305, 2
      %s307 = smul.addr %s303, 32
      %s308 = sadd.s32 %s306, %s307
      %s309 = smul.addr %s308, 8
      %s310 = scalar_lea.vmem %s0, %s309
      %s311 = smul.u32 8, %s22
      %s312 = smul.u32 8, %s22
      %p313 = scmp.lt.s32.totalorder %s21, 1
      %s314 = scalar_select %p313, %s21, 1
      %p315 = scmp.lt.s32.totalorder %s312, 15
      %s316 = scalar_select %p315, %s312, 15
      %s317 = smul.addr %s316, 2
      %s318 = smul.addr %s314, 32
      %s319 = sadd.s32 %s317, %s318
      %s320 = smul.addr %s319, 8
      %s321 = scalar_lea.vmem %s1, %s320
      %s322 = smul.u32 8, %s22
      %s323 = smul.u32 4, %s22
      %p324 = scmp.lt.s32.totalorder %s21, 1
      %s325 = scalar_select %p324, %s21, 1
      %p326 = scmp.lt.s32.totalorder %s323, 7
      %s327 = scalar_select %p326, %s323, 7
      %s328 = smul.addr %s325, 8
      %s329 = sadd.s32 %s327, %s328
      %s330 = smul.addr %s329, 8
      %s331 = scalar_lea.vmem %s6, %s330
      %s332 = smul.u32 4, %s22
      %v333 = vld [vmem:[%s2] sm:$0x1]
      %v334 = vld [vmem:[%s3] sm:$0x1]
      %v335 = vld [vmem:[%s4] sm:$0x1]
      %v336 = vld [vmem:[%s5] sm:$0x1]
      %v337 = vld [vmem:[%s310] sm:$0xff]
      %v338 = vld [vmem:[%s310 + $0x8] sm:$0xff]
      %v339 = vld [vmem:[%s310 + $0x10] sm:$0xff]
      %v340 = vld [vmem:[%s310 + $0x18] sm:$0xff]
      %v341 = vld [vmem:[%s310 + $0x20] sm:$0xff]
      %v342 = vld [vmem:[%s310 + $0x28] sm:$0xff]
      %v343 = vld [vmem:[%s310 + $0x30] sm:$0xff]
      %v344 = vld [vmem:[%s310 + $0x38] sm:$0xff]
      %v345 = vld [vmem:[%s310 + $0x40] sm:$0xff]
      %v346 = vld [vmem:[%s310 + $0x48] sm:$0xff]
      %v347 = vld [vmem:[%s310 + $0x50] sm:$0xff]
      %v348 = vld [vmem:[%s310 + $0x58] sm:$0xff]
      %v349 = vld [vmem:[%s310 + $0x60] sm:$0xff]
      %v350 = vld [vmem:[%s310 + $0x68] sm:$0xff]
      %v351 = vld [vmem:[%s310 + $0x70] sm:$0xff]
      %v352 = vld [vmem:[%s310 + $0x78] sm:$0xff]
      %v354 = vlaneseq
      %v355 = vshrl.u32 %v354, 7
      %v356 = vsub.s32 0, %v355
      %v357 = vrot.slane %v333, %v356
      %v359 = vmul.f32 %v337, %v357
      %v360 = vmul.f32 %v338, %v357
      %v361 = vmul.f32 %v339, %v357
      %v362 = vmul.f32 %v340, %v357
      %v363 = vmul.f32 %v341, %v357
      %v364 = vmul.f32 %v342, %v357
      %v365 = vmul.f32 %v343, %v357
      %v366 = vmul.f32 %v344, %v357
      %v367 = vmul.f32 %v345, %v357
      %v368 = vmul.f32 %v346, %v357
      %v369 = vmul.f32 %v347, %v357
      %v370 = vmul.f32 %v348, %v357
      %v371 = vmul.f32 %v349, %v357
      %v372 = vmul.f32 %v350, %v357
      %v373 = vmul.f32 %v351, %v357
      %v374 = vmul.f32 %v352, %v357
      %v376 = vlaneseq
      %v377 = vshrl.u32 %v376, 7
      %v378 = vsub.s32 0, %v377
      %v379 = vrot.slane %v334, %v378
      %v381 = vadd.f32 %v359, %v379
      %v382 = vadd.f32 %v360, %v379
      %v383 = vadd.f32 %v361, %v379
      %v384 = vadd.f32 %v362, %v379
      %v385 = vadd.f32 %v363, %v379
      %v386 = vadd.f32 %v364, %v379
      %v387 = vadd.f32 %v365, %v379
      %v388 = vadd.f32 %v366, %v379
      %v389 = vadd.f32 %v367, %v379
      %v390 = vadd.f32 %v368, %v379
      %v391 = vadd.f32 %v369, %v379
      %v392 = vadd.f32 %v370, %v379
      %v393 = vadd.f32 %v371, %v379
      %v394 = vadd.f32 %v372, %v379
      %v395 = vadd.f32 %v373, %v379
      %v396 = vadd.f32 %v374, %v379
      %v397 = vld [vmem:[%s321] sm:$0xff]
      %v398 = vld [vmem:[%s321 + $0x8] sm:$0xff]
      %v399 = vld [vmem:[%s321 + $0x10] sm:$0xff]
      %v400 = vld [vmem:[%s321 + $0x18] sm:$0xff]
      %v401 = vld [vmem:[%s321 + $0x20] sm:$0xff]
      %v402 = vld [vmem:[%s321 + $0x28] sm:$0xff]
      %v403 = vld [vmem:[%s321 + $0x30] sm:$0xff]
      %v404 = vld [vmem:[%s321 + $0x38] sm:$0xff]
      %v405 = vld [vmem:[%s321 + $0x40] sm:$0xff]
      %v406 = vld [vmem:[%s321 + $0x48] sm:$0xff]
      %v407 = vld [vmem:[%s321 + $0x50] sm:$0xff]
      %v408 = vld [vmem:[%s321 + $0x58] sm:$0xff]
      %v409 = vld [vmem:[%s321 + $0x60] sm:$0xff]
      %v410 = vld [vmem:[%s321 + $0x68] sm:$0xff]
      %v411 = vld [vmem:[%s321 + $0x70] sm:$0xff]
      %v412 = vld [vmem:[%s321 + $0x78] sm:$0xff]
      %v414 = vlaneseq
      %v415 = vshrl.u32 %v414, 7
      %v416 = vsub.s32 0, %v415
      %v417 = vrot.slane %v335, %v416
      %v419 = vmul.f32 %v397, %v417
      %v420 = vmul.f32 %v398, %v417
      %v421 = vmul.f32 %v399, %v417
      %v422 = vmul.f32 %v400, %v417
      %v423 = vmul.f32 %v401, %v417
      %v424 = vmul.f32 %v402, %v417
      %v425 = vmul.f32 %v403, %v417
      %v426 = vmul.f32 %v404, %v417
      %v427 = vmul.f32 %v405, %v417
      %v428 = vmul.f32 %v406, %v417
      %v429 = vmul.f32 %v407, %v417
      %v430 = vmul.f32 %v408, %v417
      %v431 = vmul.f32 %v409, %v417
      %v432 = vmul.f32 %v410, %v417
      %v433 = vmul.f32 %v411, %v417
      %v434 = vmul.f32 %v412, %v417
      %v436 = vlaneseq
      %v437 = vshrl.u32 %v436, 7
      %v438 = vsub.s32 0, %v437
      %v439 = vrot.slane %v336, %v438
      %v441 = vadd.f32 %v419, %v439
      %v442 = vadd.f32 %v420, %v439
      %v443 = vadd.f32 %v421, %v439
      %v444 = vadd.f32 %v422, %v439
      %v445 = vadd.f32 %v423, %v439
      %v446 = vadd.f32 %v424, %v439
      %v447 = vadd.f32 %v425, %v439
      %v448 = vadd.f32 %v426, %v439
      %v449 = vadd.f32 %v427, %v439
      %v450 = vadd.f32 %v428, %v439
      %v451 = vadd.f32 %v429, %v439
      %v452 = vadd.f32 %v430, %v439
      %v453 = vadd.f32 %v431, %v439
      %v454 = vadd.f32 %v432, %v439
      %v455 = vadd.f32 %v433, %v439
      %v456 = vadd.f32 %v434, %v439
      %v457 = vadd.f32 %v381, %v441
      %v458 = vadd.f32 %v382, %v442
      %v459 = vadd.f32 %v383, %v443
      %v460 = vadd.f32 %v384, %v444
      %v461 = vadd.f32 %v385, %v445
      %v462 = vadd.f32 %v386, %v446
      %v463 = vadd.f32 %v387, %v447
      %v464 = vadd.f32 %v388, %v448
      %v465 = vadd.f32 %v389, %v449
      %v466 = vadd.f32 %v390, %v450
      %v467 = vadd.f32 %v391, %v451
      %v468 = vadd.f32 %v392, %v452
      %v469 = vadd.f32 %v393, %v453
      %v470 = vadd.f32 %v394, %v454
      %v471 = vadd.f32 %v395, %v455
      %v472 = vadd.f32 %v396, %v456
      %vm473 = vcmp.ge.f32.partialorder %v457, 0.0
      %vm474 = vcmp.ge.f32.partialorder %v458, 0.0
      %vm475 = vcmp.ge.f32.partialorder %v459, 0.0
      %vm476 = vcmp.ge.f32.partialorder %v460, 0.0
      %vm477 = vcmp.ge.f32.partialorder %v461, 0.0
      %vm478 = vcmp.ge.f32.partialorder %v462, 0.0
      %vm479 = vcmp.ge.f32.partialorder %v463, 0.0
      %vm480 = vcmp.ge.f32.partialorder %v464, 0.0
      %vm481 = vcmp.ge.f32.partialorder %v465, 0.0
      %vm482 = vcmp.ge.f32.partialorder %v466, 0.0
      %vm483 = vcmp.ge.f32.partialorder %v467, 0.0
      %vm484 = vcmp.ge.f32.partialorder %v468, 0.0
      %vm485 = vcmp.ge.f32.partialorder %v469, 0.0
      %vm486 = vcmp.ge.f32.partialorder %v470, 0.0
      %vm487 = vcmp.ge.f32.partialorder %v471, 0.0
      %vm488 = vcmp.ge.f32.partialorder %v472, 0.0
      %v489 = vmul.f32 %v457, 0.2
      %v490 = vmul.f32 %v458, 0.2
      %v491 = vmul.f32 %v459, 0.2
      %v492 = vmul.f32 %v460, 0.2
      %v493 = vmul.f32 %v461, 0.2
      %v494 = vmul.f32 %v462, 0.2
      %v495 = vmul.f32 %v463, 0.2
      %v496 = vmul.f32 %v464, 0.2
      %v497 = vmul.f32 %v465, 0.2
      %v498 = vmul.f32 %v466, 0.2
      %v499 = vmul.f32 %v467, 0.2
      %v500 = vmul.f32 %v468, 0.2
      %v501 = vmul.f32 %v469, 0.2
      %v502 = vmul.f32 %v470, 0.2
      %v503 = vmul.f32 %v471, 0.2
      %v504 = vmul.f32 %v472, 0.2
      %v505 = vsel %vm473, %v457, %v489
      %v506 = vsel %vm474, %v458, %v490
      %v507 = vsel %vm475, %v459, %v491
      %v508 = vsel %vm476, %v460, %v492
      %v509 = vsel %vm477, %v461, %v493
      %v510 = vsel %vm478, %v462, %v494
      %v511 = vsel %vm479, %v463, %v495
      %v512 = vsel %vm480, %v464, %v496
      %v513 = vsel %vm481, %v465, %v497
      %v514 = vsel %vm482, %v466, %v498
      %v515 = vsel %vm483, %v467, %v499
      %v516 = vsel %vm484, %v468, %v500
      %v517 = vsel %vm485, %v469, %v501
      %v518 = vsel %vm486, %v470, %v502
      %v519 = vsel %vm487, %v471, %v503
      %v520 = vsel %vm488, %v472, %v504
      %521 = vst [vmem:[#allocation2] sm:$0xff] %v505
      %522 = vst [vmem:[#allocation2 + $0x8] sm:$0xff] %v506
      %523 = vst [vmem:[#allocation2 + $0x10] sm:$0xff] %v507
      %524 = vst [vmem:[#allocation2 + $0x18] sm:$0xff] %v508
      %525 = vst [vmem:[#allocation2 + $0x20] sm:$0xff] %v509
      %526 = vst [vmem:[#allocation2 + $0x28] sm:$0xff] %v510
      %527 = vst [vmem:[#allocation2 + $0x30] sm:$0xff] %v511
      %528 = vst [vmem:[#allocation2 + $0x38] sm:$0xff] %v512
      %529 = vst [vmem:[#allocation2 + $0x40] sm:$0xff] %v513
      %530 = vst [vmem:[#allocation2 + $0x48] sm:$0xff] %v514
      %531 = vst [vmem:[#allocation2 + $0x50] sm:$0xff] %v515
      %532 = vst [vmem:[#allocation2 + $0x58] sm:$0xff] %v516
      %533 = vst [vmem:[#allocation2 + $0x60] sm:$0xff] %v517
      %534 = vst [vmem:[#allocation2 + $0x68] sm:$0xff] %v518
      %535 = vst [vmem:[#allocation2 + $0x70] sm:$0xff] %v519
      %536 = vst [vmem:[#allocation2 + $0x78] sm:$0xff] %v520
      %v537 = vld [vmem:[#allocation2] sm:$0xff]
      %v538 = vld [vmem:[#allocation2 + $0x8] sm:$0xff]
      %v539 = vld [vmem:[#allocation2 + $0x20] sm:$0xff]
      %v540 = vld [vmem:[#allocation2 + $0x28] sm:$0xff]
      %v541 = vld [vmem:[#allocation2 + $0x40] sm:$0xff]
      %v542 = vld [vmem:[#allocation2 + $0x48] sm:$0xff]
      %v543 = vld [vmem:[#allocation2 + $0x60] sm:$0xff]
      %v544 = vld [vmem:[#allocation2 + $0x68] sm:$0xff]
      %s545 = scalar_lea.vmem [#allocation2], 16
      %v546 = vld [vmem:[%s545] sm:$0xff]
      %v547 = vld [vmem:[%s545 + $0x8] sm:$0xff]
      %v548 = vld [vmem:[%s545 + $0x20] sm:$0xff]
      %v549 = vld [vmem:[%s545 + $0x28] sm:$0xff]
      %v550 = vld [vmem:[%s545 + $0x40] sm:$0xff]
      %v551 = vld [vmem:[%s545 + $0x48] sm:$0xff]
      %v552 = vld [vmem:[%s545 + $0x60] sm:$0xff]
      %v553 = vld [vmem:[%s545 + $0x68] sm:$0xff]
      %v554 = vadd.f32 %v537, %v546
      %v555 = vadd.f32 %v538, %v547
      %v556 = vadd.f32 %v539, %v548
      %v557 = vadd.f32 %v540, %v549
      %v558 = vadd.f32 %v541, %v550
      %v559 = vadd.f32 %v542, %v551
      %v560 = vadd.f32 %v543, %v552
      %v561 = vadd.f32 %v544, %v553
      %562 = vst [vmem:[#allocation3] sm:$0xff] %v554
      %563 = vst [vmem:[#allocation3 + $0x8] sm:$0xff] %v555
      %564 = vst [vmem:[#allocation3 + $0x10] sm:$0xff] %v556
      %565 = vst [vmem:[#allocation3 + $0x18] sm:$0xff] %v557
      %566 = vst [vmem:[#allocation3 + $0x20] sm:$0xff] %v558
      %567 = vst [vmem:[#allocation3 + $0x28] sm:$0xff] %v559
      %568 = vst [vmem:[#allocation3 + $0x30] sm:$0xff] %v560
      %569 = vst [vmem:[#allocation3 + $0x38] sm:$0xff] %v561
      %v570 = vld [vmem:[#allocation3] ss:$2 sm:$0xff]
      %s571 = scalar_lea.vmem [#allocation3], 16
      %v572 = vld [vmem:[%s571] ss:$2 sm:$0xff]
      %s573 = scalar_lea.vmem [#allocation3], 32
      %v574 = vld [vmem:[%s573] ss:$2 sm:$0xff]
      %s575 = scalar_lea.vmem [#allocation3], 48
      %v576 = vld [vmem:[%s575] ss:$2 sm:$0xff]
      %s577 = scalar_lea.vmem [#allocation3], 1
      %v578 = vld [vmem:[%s577] ss:$2 sm:$0xff]
      %s579 = scalar_lea.vmem [#allocation3], 17
      %v580 = vld [vmem:[%s579] ss:$2 sm:$0xff]
      %s581 = scalar_lea.vmem [#allocation3], 33
      %v582 = vld [vmem:[%s581] ss:$2 sm:$0xff]
      %s583 = scalar_lea.vmem [#allocation3], 49
      %v584 = vld [vmem:[%s583] ss:$2 sm:$0xff]
      %v585 = vadd.f32 %v570, %v578
      %v586 = vadd.f32 %v572, %v580
      %v587 = vadd.f32 %v574, %v582
      %v588 = vadd.f32 %v576, %v584
      %v589 = vmul.f32 %v585, 0.25
      %v590 = vmul.f32 %v586, 0.25
      %v591 = vmul.f32 %v587, 0.25
      %v592 = vmul.f32 %v588, 0.25
      %593 = vst [vmem:[%s331] sm:$0xff] %v589
      %594 = vst [vmem:[%s331 + $0x8] sm:$0xff] %v590
      %595 = vst [vmem:[%s331 + $0x10] sm:$0xff] %v591
      %596 = vst [vmem:[%s331 + $0x18] sm:$0xff] %v592
      %s597 = smul.u32 4, %s22
      %p598 = scmp.lt.s32.totalorder %s21, 1
      %s599 = scalar_select %p598, %s21, 1
      %p600 = scmp.lt.s32.totalorder %s597, 7
      %s601 = scalar_select %p600, %s597, 7
      %s602 = smul.addr %s599, 8
      %s603 = sadd.s32 %s601, %s602
      %s604 = smul.addr %s603, 8
      %s605 = scalar_lea.vmem %s6, %s604
      // Predicated region
      $region45: #{residual_block_pallas.9} parent=43 // pred_check
        %p606 = pneg %p189
      $region46: #{residual_block_pallas.9} parent=43 // pred_check_branch
        %608 = sbr.rel (%p606) target = $region48
      $region47: #{residual_block_pallas.9} parent=43 // pred_region
        %s609 = smul.u32 4, %s22
      $region48: #{residual_block_pallas.9} parent=43 // pred_fallthru
        _
    $region44: #{residual_block_pallas.9} parent=5 // pred_fallthru
      _
    %p610 = scmp.le.s32.totalorder 2, %s12
    // Predicated region
    $region49: #{residual_block_pallas.9} parent=5 // pred_check
      %p611 = pneg %p610
    $region50: #{residual_block_pallas.9} parent=5 // pred_check_branch
      %613 = sbr.rel (%p611) target = $region52
    $region51: #{residual_block_pallas.9} parent=5 // pred_region
      %s614 = ssub.s32 %s12, 2
      // Predicated region
      $region53: #{residual_block_pallas.9} parent=51 // pred_check
        %p615 = pneg %p195
      $region54: #{residual_block_pallas.9} parent=51 // pred_check_branch
        %617 = sbr.rel (%p615) target = $region56
      $region55: #{residual_block_pallas.9} parent=51 // pred_region
        %s618 = smul.u32 4, %s24
        %p619 = scmp.lt.s32.totalorder %s23, 1
        %s620 = scalar_select %p619, %s23, 1
        %p621 = scmp.lt.s32.totalorder %s618, 7
        %s622 = scalar_select %p621, %s618, 7
        %s623 = smul.addr %s620, 8
        %s624 = sadd.s32 %s622, %s623
        %s625 = smul.addr %s624, 8
        %s626 = scalar_lea.vmem %s6, %s625
      $region56: #{residual_block_pallas.9} parent=51 // pred_fallthru
        _
    $region52: #{residual_block_pallas.9} parent=5 // pred_fallthru
      _
  $region6: #{residual_block_pallas.9} parent=0 // loop_footer
    %s16 = sadd.s32 1, %s12
  $region7: #{residual_block_pallas.9} parent=0 // loop_footer_branch
    %11 = sbr.rel target = $region3
  $region8: #{residual_block_pallas.9} parent=0 // loop_exit
    _

// kernel: residual_block_pallas.6
$region0: #{residual_block_pallas.6}
  #allocation0 [shape = 'u32[]', space=smem, size = 0x4, offset = 0x4, fixed_abs, tag = 'smem constant byte address 0x4 - core index']
  #allocation1 [shape = 'u32[144,128]{1,0:T(1,128)}', space=vmem, size = 0x12000, scoped, tag = 'internal scratch']
  %s0 = inlined_call_operand.vmem [shape: f32[2,18,18,128], index: 0, kind: input, shape index: {}]
  %s1 = inlined_call_operand.vmem [shape: bf16[9,128,128], index: 1, kind: input, shape index: {}]
  %s2 = inlined_call_operand.vmem [shape: f32[1,128], index: 2, kind: input, shape index: {}]
  %s3 = inlined_call_operand.vmem [shape: f32[2,16,16,128], index: 3, kind: output, shape index: {0}]
  %s4 = inlined_call_operand.vmem [shape: f32[2,2,2,128], index: 4, kind: output, shape index: {1}]
  %5 = xla_tuple %s3, %s4
  %s6 = sld [smem:[#allocation0]]
  $region53: #{residual_block_pallas.6} parent=0
    _
  %s8 = ssub.s32 1, %s6
  %s9 = scalar_select 0, %s8, %s6
  loop: start=0, step=1, limit=6
  $region2: #{residual_block_pallas.6} parent=0 // loop_pre_header
    _
  $region3: #{residual_block_pallas.6} parent=0 // loop_header
    %s11 = sphi 0, %s15
    %p12 = scmp.ge.s32.totalorder %s11, 6
    %s18 = sphi 0, %s30
    %s19 = sphi 0, %s26
    %s20 = sphi 0, %s18
    %s21 = sphi 0, %s19
    %s22 = sphi 0, %s20
    %s23 = sphi 0, %s21
    %s33 = sphi 0, %s35
    %s36 = sphi 0, %s33
    %s37 = sphi 0, %s36
    %s53 = sphi 0, %s37
    %s57 = sphi 0, %s57
    %s59 = sphi 0, %s57
    %s60 = sphi 0, %s59
    %s74 = sphi 0, %s60
    %s78 = sphi 0, %s78
    %s80 = sphi 0, %s78
    %s81 = sphi 0, %s80
    %s95 = sphi 0, %s81
    %s103 = sphi 0, %s105
    %s106 = sphi 0, %s103
    %s107 = sphi 0, %s106
    %s123 = sphi 0, %s107
    %s131 = sphi 0, %s133
    %s134 = sphi 0, %s131
    %s135 = sphi 0, %s134
    %s151 = sphi 0, %s135
  $region4: #{residual_block_pallas.6} parent=0 // loop_header_branch
    %14 = sbr.rel (%p12) target = $region8
  $region5: #{residual_block_pallas.6} parent=0 // loop_body
    %s16 = ssub.s32 %s11, 1
    %s17 = ssub.s32 %s11, 2
    %s24 = sadd.s32 1, %s19
    %p25 = scmp.ge.s32.totalorder %s24, 2
    %s26 = scalar_select %p25, 0, %s24
    %s27 = sadd.s32 1, %s18
    %s28 = scalar_select %p25, %s27, %s18
    %p29 = scmp.ge.s32.totalorder %s28, 2
    %s30 = scalar_select %p29, 0, %s28
    %s31 = ssub.s32 %s18, %s30
    %p32 = scmp.eq.s32.totalorder %s31, 0
    %s34 = sadd.s32 %s33, 1
    %s35 = scalar_select %p32, %s33, %s34
    %p38 = pneg %p32
    %p39 = scmp.eq.s32.totalorder %s11, 3
    %p40 = por %p38, %p39
    %p41 = scmp.ne.s32.totalorder %s33, %s36
    %p42 = scmp.eq.s32.totalorder %s11, 0
    %p43 = por %p41, %p42
    %p44 = scmp.ne.s32.totalorder %s33, %s36
    %p45 = scmp.eq.s32.totalorder %s16, 3
    %p46 = por %p44, %p45
    %p47 = scmp.ne.s32.totalorder %s36, %s37
    %p48 = scmp.eq.s32.totalorder %s16, 0
    %p49 = por %p47, %p48
    %p50 = scmp.ne.s32.totalorder %s36, %s37
    %p51 = scmp.eq.s32.totalorder %s17, 3
    %p52 = por %p50, %p51
    %p54 = scmp.ne.s32.totalorder %s37, %s53
    %p55 = scmp.eq.s32.totalorder %s17, 0
    %p56 = por %p54, %p55
    %s58 = sadd.s32 %s57, 1
    %p61 = scmp.eq.s32.totalorder %s11, 3
    %p62 = scmp.ne.s32.totalorder %s57, %s59
    %p63 = scmp.eq.s32.totalorder %s11, 0
    %p64 = por %p62, %p63
    %p65 = scmp.ne.s32.totalorder %s57, %s59
    %p66 = scmp.eq.s32.totalorder %s16, 3
    %p67 = por %p65, %p66
    %p68 = scmp.ne.s32.totalorder %s59, %s60
    %p69 = scmp.eq.s32.totalorder %s16, 0
    %p70 = por %p68, %p69
    %p71 = scmp.ne.s32.totalorder %s59, %s60
    %p72 = scmp.eq.s32.totalorder %s17, 3
    %p73 = por %p71, %p72
    %p75 = scmp.ne.s32.totalorder %s60, %s74
    %p76 = scmp.eq.s32.totalorder %s17, 0
    %p77 = por %p75, %p76
    %s79 = sadd.s32 %s78, 1
    %p82 = scmp.eq.s32.totalorder %s11, 3
    %p83 = scmp.ne.s32.totalorder %s78, %s80
    %p84 = scmp.eq.s32.totalorder %s11, 0
    %p85 = por %p83, %p84
    %p86 = scmp.ne.s32.totalorder %s78, %s80
    %p87 = scmp.eq.s32.totalorder %s16, 3
    %p88 = por %p86, %p87
    %p89 = scmp.ne.s32.totalorder %s80, %s81
    %p90 = scmp.eq.s32.totalorder %s16, 0
    %p91 = por %p89, %p90
    %p92 = scmp.ne.s32.totalorder %s80, %s81
    %p93 = scmp.eq.s32.totalorder %s17, 3
    %p94 = por %p92, %p93
    %p96 = scmp.ne.s32.totalorder %s81, %s95
    %p97 = scmp.eq.s32.totalorder %s17, 0
    %p98 = por %p96, %p97
    %s99 = ssub.s32 %s18, %s30
    %s100 = ssub.s32 %s19, %s26
    %s101 = sor.u32 %s99, %s100
    %p102 = scmp.eq.s32.totalorder %s101, 0
    %s104 = sadd.s32 %s103, 1
    %s105 = scalar_select %p102, %s103, %s104
    %p108 = pneg %p102
    %p109 = scmp.eq.s32.totalorder %s11, 3
    %p110 = por %p108, %p109
    %p111 = scmp.ne.s32.totalorder %s103, %s106
    %p112 = scmp.eq.s32.totalorder %s11, 0
    %p113 = por %p111, %p112
    %p114 = scmp.ne.s32.totalorder %s103, %s106
    %p115 = scmp.eq.s32.totalorder %s16, 3
    %p116 = por %p114, %p115
    %p117 = scmp.ne.s32.totalorder %s106, %s107
    %p118 = scmp.eq.s32.totalorder %s16, 0
    %p119 = por %p117, %p118
    %p120 = scmp.ne.s32.totalorder %s106, %s107
    %p121 = scmp.eq.s32.totalorder %s17, 3
    %p122 = por %p120, %p121
    %p124 = scmp.ne.s32.totalorder %s107, %s123
    %p125 = scmp.eq.s32.totalorder %s17, 0
    %p126 = por %p124, %p125
    %s127 = ssub.s32 %s18, %s30
    %s128 = ssub.s32 %s19, %s26
    %s129 = sor.u32 %s127, %s128
    %p130 = scmp.eq.s32.totalorder %s129, 0
    %s132 = sadd.s32 %s131, 1
    %s133 = scalar_select %p130, %s131, %s132
    %p136 = pneg %p130
    %p137 = scmp.eq.s32.totalorder %s11, 3
    %p138 = por %p136, %p137
    %p139 = scmp.ne.s32.totalorder %s131, %s134
    %p140 = scmp.eq.s32.totalorder %s11, 0
    %p141 = por %p139, %p140
    %p142 = scmp.ne.s32.totalorder %s131, %s134
    %p143 = scmp.eq.s32.totalorder %s16, 3
    %p144 = por %p142, %p143
    %p145 = scmp.ne.s32.totalorder %s134, %s135
    %p146 = scmp.eq.s32.totalorder %s16, 0
    %p147 = por %p145, %p146
    %p148 = scmp.ne.s32.totalorder %s134, %s135
    %p149 = scmp.eq.s32.totalorder %s17, 3
    %p150 = por %p148, %p149
    %p152 = scmp.ne.s32.totalorder %s135, %s151
    %p153 = scmp.eq.s32.totalorder %s17, 0
    %p154 = por %p152, %p153
    %p155 = scmp.le.s32.totalorder 1, %s11
    %p156 = scmp.lt.s32.totalorder %s11, 5
    %p157 = pnand %p155, %p156
    %p158 = pneg %p157
    // Predicated region
    $region9: #{residual_block_pallas.6} parent=5 // pred_check
      _
    $region10: #{residual_block_pallas.6} parent=5 // pred_check_branch
      %160 = sbr.rel (%p157) target = $region12
    $region11: #{residual_block_pallas.6} parent=5 // pred_region
      %s161 = ssub.s32 %s11, 1
      // Predicated region
      $region13: #{residual_block_pallas.6} parent=11 // pred_check
        %p162 = pneg %p70
      $region14: #{residual_block_pallas.6} parent=11 // pred_check_branch
        %164 = sbr.rel (%p162) target = $region16
      $region15: #{residual_block_pallas.6} parent=11 // pred_region
        _
      $region16: #{residual_block_pallas.6} parent=11 // pred_fallthru
        _
      // Predicated region
      $region17: #{residual_block_pallas.6} parent=11 // pred_check
        %p165 = pneg %p91
      $region18: #{residual_block_pallas.6} parent=11 // pred_check_branch
        %167 = sbr.rel (%p165) target = $region20
      $region19: #{residual_block_pallas.6} parent=11 // pred_region
        _
      $region20: #{residual_block_pallas.6} parent=11 // pred_fallthru
        _
    $region12: #{residual_block_pallas.6} parent=5 // pred_fallthru
      _
    %p168 = scmp.lt.s32.totalorder %s11, 4
    // Predicated region
    $region21: #{residual_block_pallas.6} parent=5 // pred_check
      %p169 = pneg %p168
    $region22: #{residual_block_pallas.6} parent=5 // pred_check_branch
      %171 = sbr.rel (%p169) target = $region24
    $region23: #{residual_block_pallas.6} parent=5 // pred_region
      // Predicated region
      $region25: #{residual_block_pallas.6} parent=23 // pred_check
        %p172 = pneg %p43
      $region26: #{residual_block_pallas.6} parent=23 // pred_check_branch
        %174 = sbr.rel (%p172) target = $region28
      $region27: #{residual_block_pallas.6} parent=23 // pred_region
        %p175 = scmp.lt.s32.totalorder %s18, 1
        %s176 = scalar_select %p175, %s18, 1
        %s177 = smul.addr %s176, 54
        %s178 = smul.addr %s177, 8
        %s179 = scalar_lea.vmem %s0, %s178
      $region28: #{residual_block_pallas.6} parent=23 // pred_fallthru
        _
    $region24: #{residual_block_pallas.6} parent=5 // pred_fallthru
      _
    %p180 = scmp.le.s32.totalorder 1, %s11
    %p181 = scmp.lt.s32.totalorder %s11, 5
    %p182 = pnand %p180, %p181
    %p183 = pneg %p182
    // Predicated region
    $region29: #{residual_block_pallas.6} parent=5 // pred_check
      _
    $region30: #{residual_block_pallas.6} parent=5 // pred_check_branch
      %185 = sbr.rel (%p182) target = $region32
    $region31: #{residual_block_pallas.6} parent=5 // pred_region
      %s186 = ssub.s32 %s11, 1
      %p187 = scmp.lt.s32.totalorder %s20, 1
      %s188 = scalar_select %p187, %s20, 1
      %s189 = smul.addr %s188, 54
      %s190 = smul.addr %s189, 8
      %s191 = scalar_lea.vmem %s0, %s190
      %p192 = pneg %p49
      %p193 = pneg %p46
      %p194 = pneg %p70
      %p195 = pneg %p67
      %p196 = pneg %p91
      %p197 = pneg %p88
      %p198 = pneg %p119
      %p199 = pneg %p116
      %s200 = smul.u32 8, %s21
      %p201 = scmp.lt.s32.totalorder %s20, 1
      %s202 = scalar_select %p201, %s20, 1
      %p203 = scmp.lt.s32.totalorder %s200, 15
      %s204 = scalar_select %p203, %s200, 15
      %s205 = smul.addr %s204, 2
      %s206 = smul.addr %s202, 32
      %s207 = sadd.s32 %s205, %s206
      %s208 = smul.addr %s207, 8
      %s209 = scalar_lea.vmem %s3, %s208
      %p210 = pneg %p147
      %p211 = pneg %p144
      %p212 = scmp.lt.s32.totalorder %s20, 1
      %s213 = scalar_select %p212, %s20, 1
      %p214 = scmp.lt.s32.totalorder %s21, 1
      %s215 = scalar_select %p214, %s21, 1
      %s216 = smul.addr %s213, 2
      %s217 = sadd.s32 %s215, %s216
      %s218 = smul.addr %s217, 2
      %s219 = scalar_lea.vmem %s4, %s218
      %p220 = scmp.lt.s32.totalorder %s20, 1
      %s221 = scalar_select %p220, %s20, 1
      %s222 = smul.addr %s221, 54
      %s223 = smul.addr %s222, 8
      %s224 = scalar_lea.vmem %s0, %s223
      %s225 = smul.u32 8, %s21
      %p226 = scmp.lt.s32.totalorder %s20, 1
      %s227 = scalar_select %p226, %s20, 1
      %p228 = scmp.lt.s32.totalorder %s225, 15
      %s229 = scalar_select %p228, %s225, 15
      %s230 = smul.addr %s229, 2
      %s231 = smul.addr %s227, 32
      %s232 = sadd.s32 %s230, %s231
      %s233 = smul.addr %s232, 8
      %s234 = scalar_lea.vmem %s3, %s233
      %s235 = smul.u32 8, %s21
      %p236 = scmp.lt.s32.totalorder %s20, 1
      %s237 = scalar_select %p236, %s20, 1
      %p238 = scmp.lt.s32.totalorder %s21, 1
      %s239 = scalar_select %p238, %s21, 1
      %s240 = smul.addr %s237, 2
      %s241 = sadd.s32 %s239, %s240
      %s242 = smul.addr %s241, 2
      %s243 = scalar_lea.vmem %s4, %s242
      %s245 = smul.u32 %s21, 8
      %s246 = smul.u32 %s245, 24
      %s247 = scalar_lea.vmem %s224, %s246
      %v248 = vld [vmem:[%s247] sm:$0xff]
      %v249 = vld [vmem:[%s247 + $0x8] sm:$0xff]
      %v250 = vld [vmem:[%s247 + $0x18] sm:$0xff]
      %v251 = vld [vmem:[%s247 + $0x20] sm:$0xff]
      %v252 = vld [vmem:[%s247 + $0x30] sm:$0xff]
      %v253 = vld [vmem:[%s247 + $0x38] sm:$0xff]
      %v254 = vld [vmem:[%s247 + $0x48] sm:$0xff]
      %v255 = vld [vmem:[%s247 + $0x50] sm:$0xff]
      %v256 = vld [vmem:[%s247 + $0x60] sm:$0xff]
      %v257 = vld [vmem:[%s247 + $0x68] sm:$0xff]
      %v258 = vld [vmem:[%s247 + $0x78] sm:$0xff]
      %v259 = vld [vmem:[%s247 + $0x80] sm:$0xff]
      %v260 = vld [vmem:[%s247 + $0x90] sm:$0xff]
      %v261 = vld [vmem:[%s247 + $0x98] sm:$0xff]
      %v262 = vld [vmem:[%s247 + $0xa8] sm:$0xff]
      %v263 = vld [vmem:[%s247 + $0xb0] sm:$0xff]
      %v264 = vpack.c.bf16 %v249, %v248
      %v265 = vpack.c.bf16 %v251, %v250
      %v266 = vpack.c.bf16 %v253, %v252
      %v267 = vpack.c.bf16 %v255, %v254
      %v268 = vpack.c.bf16 %v257, %v256
      %v269 = vpack.c.bf16 %v259, %v258
      %v270 = vpack.c.bf16 %v261, %v260
      %v271 = vpack.c.bf16 %v263, %v262
      %v272 = vld [vmem:[%s1] sm:$0xf]
      %v273 = vld [vmem:[%s1 + $0x4] sm:$0xf]
      %v274 = vld [vmem:[%s1 + $0x8] sm:$0xf]
      %v275 = vld [vmem:[%s1 + $0xc] sm:$0xf]
      %v276 = vld [vmem:[%s1 + $0x10] sm:$0xf]
      %v277 = vld [vmem:[%s1 + $0x14] sm:$0xf]
      %v278 = vld [vmem:[%s1 + $0x18] sm:$0xf]
      %v279 = vld [vmem:[%s1 + $0x1c] sm:$0xf]
      %v280 = vld [vmem:[%s1 + $0x20] sm:$0xf]
      %v281 = vld [vmem:[%s1 + $0x24] sm:$0xf]
      %v282 = vld [vmem:[%s1 + $0x28] sm:$0xf]
      %v283 = vld [vmem:[%s1 + $0x2c] sm:$0xf]
      %v284 = vld [vmem:[%s1 + $0x30] sm:$0xf]
      %v285 = vld [vmem:[%s1 + $0x34] sm:$0xf]
      %v286 = vld [vmem:[%s1 + $0x38] sm:$0xf]
      %v287 = vld [vmem:[%s1 + $0x3c] sm:$0xf]
      %v288 = vld [vmem:[%s247 + $0x1] sm:$0xff]
      %v289 = vld [vmem:[%s247 + $0x9] sm:$0xff]
      %v290 = vld [vmem:[%s247 + $0x19] sm:$0xff]
      %v291 = vld [vmem:[%s247 + $0x21] sm:$0xff]
      %v292 = vld [vmem:[%s247 + $0x31] sm:$0xff]
      %v293 = vld [vmem:[%s247 + $0x39] sm:$0xff]
      %v294 = vld [vmem:[%s247 + $0x49] sm:$0xff]
      %v295 = vld [vmem:[%s247 + $0x51] sm:$0xff]
      %v296 = vld [vmem:[%s247 + $0x61] sm:$0xff]
      %v297 = vld [vmem:[%s247 + $0x69] sm:$0xff]
      %v298 = vld [vmem:[%s247 + $0x79] sm:$0xff]
      %v299 = vld [vmem:[%s247 + $0x81] sm:$0xff]
      %v300 = vld [vmem:[%s247 + $0x91] sm:$0xff]
      %v301 = vld [vmem:[%s247 + $0x99] sm:$0xff]
      %v302 = vld [vmem:[%s247 + $0xa9] sm:$0xff]
      %v303 = vld [vmem:[%s247 + $0xb1] sm:$0xff]
      %v304 = vpack.c.bf16 %v289, %v288
      %v305 = vpack.c.bf16 %v291, %v290
      %v306 = vpack.c.bf16 %v293, %v292
      %v307 = vpack.c.bf16 %v295, %v294
      %v308 = vpack.c.bf16 %v297, %v296
      %v309 = vpack.c.bf16 %v299, %v298
      %v310 = vpack.c.bf16 %v301, %v300
      %v311 = vpack.c.bf16 %v303, %v302
      %s312 = scalar_lea.vmem %s1, 64
      %v313 = vld [vmem:[%s312] sm:$0xf]
      %v314 = vld [vmem:[%s312 + $0x4] sm:$0xf]
      %v315 = vld [vmem:[%s312 + $0x8] sm:$0xf]
      %v316 = vld [vmem:[%s312 + $0xc] sm:$0xf]
      %v317 = vld [vmem:[%s312 + $0x10] sm:$0xf]
      %v318 = vld [vmem:[%s312 + $0x14] sm:$0xf]
      %v319 = vld [vmem:[%s312 + $0x18] sm:$0xf]
      %v320 = vld [vmem:[%s312 + $0x1c] sm:$0xf]
      %v321 = vld [vmem:[%s312 + $0x20] sm:$0xf]
      %v322 = vld [vmem:[%s312 + $0x24] sm:$0xf]
      %v323 = vld [vmem:[%s312 + $0x28] sm:$0xf]
      %v324 = vld [vmem:[%s312 + $0x2c] sm:$0xf]
      %v325 = vld [vmem:[%s312 + $0x30] sm:$0xf]
      %v326 = vld [vmem:[%s312 + $0x34] sm:$0xf]
      %v327 = vld [vmem:[%s312 + $0x38] sm:$0xf]
      %v328 = vld [vmem:[%s312 + $0x3c] sm:$0xf]
      %v345 = vunpack.c.l.b16 %v313
      %v346 = vunpack.c.l.b16 %v314
      %v347 = vunpack.c.l.b16 %v315
      %v348 = vunpack.c.l.b16 %v316
      %v349 = vunpack.c.l.b16 %v317
      %v350 = vunpack.c.l.b16 %v318
      %v351 = vunpack.c.l.b16 %v319
      %v352 = vunpack.c.l.b16 %v320
      %v353 = vunpack.c.l.b16 %v321
      %v354 = vunpack.c.l.b16 %v322
      %v355 = vunpack.c.l.b16 %v323
      %v356 = vunpack.c.l.b16 %v324
      %v357 = vunpack.c.l.b16 %v325
      %v358 = vunpack.c.l.b16 %v326
      %v359 = vunpack.c.l.b16 %v327
      %v360 = vunpack.c.l.b16 %v328
      %v361 = vpack.c.b16 %v346, %v345
      %v362 = vpack.c.b16 %v348, %v347
      %v363 = vpack.c.b16 %v350, %v349
      %v364 = vpack.c.b16 %v352, %v351
      %v365 = vpack.c.b16 %v354, %v353
      %v366 = vpack.c.b16 %v356, %v355
      %v367 = vpack.c.b16 %v358, %v357
      %v368 = vpack.c.b16 %v360, %v359
      %377 = vmatprep.subr.bf16.mxu0 0
      %378 = vmatpush1.bf16.msra.mxu0 %v361
      %379 = vmatprep.subr.bf16.mxu0 0
      %380 = vmatpush1.bf16.msra.mxu0 %v362
      %381 = vmatprep.subr.bf16.mxu0 0
      %382 = vmatpush1.bf16.msra.mxu0 %v363
      %383 = vmatprep.subr.bf16.mxu0 0
      %384 = vmatpush1.bf16.msra.mxu0 %v364
      %385 = vmatprep.subr.bf16.mxu0 0
      %386 = vmatpush1.bf16.msra.mxu0 %v365
      %387 = vmatprep.subr.bf16.mxu0 0
      %388 = vmatpush1.bf16.msra.mxu0 %v366
      %389 = vmatprep.subr.bf16.mxu0 0
      %390 = vmatpush1.bf16.msra.mxu0 %v367
      %391 = vmatprep.subr.bf16.mxu0 0
      %392 = vmatpush1.bf16.msra.mxu0 %v368
      %393 = vmatprep.subr.bf16.mxu0 0
      %394 = vmatpush1.bf16.msra.mxu0 0
      %395 = vmatprep.subr.bf16.mxu0 0
      %396 = vmatpush1.bf16.msra.mxu0 0
      %397 = vmatprep.subr.bf16.mxu0 0
      %398 = vmatpush1.bf16.msra.mxu0 0
      %399 = vmatprep.subr.bf16.mxu0 0
      %400 = vmatpush1.bf16.msra.mxu0 0
      %401 = vmatprep.subr.bf16.mxu0 0
      %402 = vmatpush1.bf16.msra.mxu0 0
      %403 = vmatprep.subr.bf16.mxu0 0
      %404 = vmatpush1.bf16.msra.mxu0 0
      %405 = vmatprep.subr.bf16.mxu0 0
      %406 = vmatpush1.bf16.msra.mxu0 0
      %407 = vmatprep.subr.bf16.mxu0 0
      %408 = vmatpush1.bf16.msra.mxu0 0
      %409 = vmatprep.mubr.bf16.mxu0 0
      %410 = vmatmul.mubr.bf16.gmra.mrb[0].mxu0 %v304
      %v411 = vpop.f32.mrb[0].mxu0
      %v412 = vadd.f32 0.0, %v411
      %v413 = vpop.f32.mrb[0].mxu0
      %v414 = vpop.f32.mrb[0].mxu0
      %v415 = vadd.f32 0.0, %v414
      %v416 = vpop.f32.mrb[0].mxu0
      %417 = vmatprep.mubr.bf16.mxu0 0
      %418 = vmatmul.mubr.bf16.gmra.mrb[0].mxu0 %v305
      %v419 = vpop.f32.mrb[0].mxu0
      %v420 = vadd.f32 0.0, %v419
      %v421 = vpop.f32.mrb[0].mxu0
      %v422 = vpop.f32.mrb[0].mxu0
      %v423 = vadd.f32 0.0, %v422
      %v424 = vpop.f32.mrb[0].mxu0
      %425 = vmatprep.mubr.bf16.mxu0 0
      %426 = vmatmul.mubr.bf16.gmra.mrb[0].mxu0 %v306
      %v427 = vpop.f32.mrb[0].mxu0
      %v428 = vadd.f32 0.0, %v427
      %v429 = vpop.f32.mrb[0].mxu0
      %v430 = vpop.f32.mrb[0].mxu0
      %v431 = vadd.f32 0.0, %v430
      %v432 = vpop.f32.mrb[0].mxu0
      %433 = vmatprep.mubr.bf16.mxu0 0
      %434 = vmatmul.mubr.bf16.gmra.mrb[0].mxu0 %v307
      %v435 = vpop.f32.mrb[0].mxu0
      %v436 = vadd.f32 0.0, %v435
      %v437 = vpop.f32.mrb[0].mxu0
      %v438 = vpop.f32.mrb[0].mxu0
      %v439 = vadd.f32 0.0, %v438
      %v440 = vpop.f32.mrb[0].mxu0
      %441 = vmatprep.mubr.bf16.mxu0 0
      %442 = vmatmul.mubr.bf16.gmra.mrb[0].mxu0 %v308
      %v443 = vpop.f32.mrb[0].mxu0
      %v444 = vadd.f32 0.0, %v443
      %v445 = vpop.f32.mrb[0].mxu0
      %v446 = vpop.f32.mrb[0].mxu0
      %v447 = vadd.f32 0.0, %v446
      %v448 = vpop.f32.mrb[0].mxu0
      %449 = vmatprep.mubr.bf16.mxu0 0
      %450 = vmatmul.mubr.bf16.gmra.mrb[0].mxu0 %v309
      %v451 = vpop.f32.mrb[0].mxu0
      %v452 = vadd.f32 0.0, %v451
      %v453 = vpop.f32.mrb[0].mxu0
      %v454 = vpop.f32.mrb[0].mxu0
      %v455 = vadd.f32 0.0, %v454
      %v456 = vpop.f32.mrb[0].mxu0
      %457 = vmatprep.mubr.bf16.mxu0 0
      %458 = vmatmul.mubr.bf16.gmra.mrb[0].mxu0 %v310
      %v459 = vpop.f32.mrb[0].mxu0
      %v460 = vadd.f32 0.0, %v459
      %v461 = vpop.f32.mrb[0].mxu0
      %v462 = vpop.f32.mrb[0].mxu0
      %v463 = vadd.f32 0.0, %v462
      %v464 = vpop.f32.mrb[0].mxu0
      %465 = vmatprep.mubr.bf16.mxu0 0
      %466 = vmatmul.mubr.bf16.gmra.mrb[0].mxu0 %v311
      %v467 = vpop.f32.mrb[0].mxu0
      %v468 = vadd.f32 0.0, %v467
      %v469 = vpop.f32.mrb[0].mxu0
      %v470 = vpop.f32.mrb[0].mxu0
      %v471 = vadd.f32 0.0, %v470
      %v472 = vpop.f32.mrb[0].mxu0
      %473 = vdwg.mxu0
      %v490 = vunpack.c.l.b16 %v272
      %v491 = vunpack.c.l.b16 %v273
      %v492 = vunpack.c.l.b16 %v274
      %v493 = vunpack.c.l.b16 %v275
      %v494 = vunpack.c.l.b16 %v276
      %v495 = vunpack.c.l.b16 %v277
      %v496 = vunpack.c.l.b16 %v278
      %v497 = vunpack.c.l.b16 %v279
      %v498 = vunpack.c.l.b16 %v280
      %v499 = vunpack.c.l.b16 %v281
      %v500 = vunpack.c.l.b16 %v282
      %v501 = vunpack.c.l.b16 %v283
      %v502 = vunpack.c.l.b16 %v284
      %v503 = vunpack.c.l.b16 %v285
      %v504 = vunpack.c.l.b16 %v286
      %v505 = vunpack.c.l.b16 %v287
      %v506 = vpack.c.b16 %v491, %v490
      %v507 = vpack.c.b16 %v493, %v492
      %v508 = vpack.c.b16 %v495, %v494
      %v509 = vpack.c.b16 %v497, %v496
      %v510 = vpack.c.b16 %v499, %v498
      %v511 = vpack.c.b16 %v501, %v500
      %v512 = vpack.c.b16 %v503, %v502
      %v513 = vpack.c.b16 %v505, %v504
      %522 = vmatprep.subr.bf16.mxu0 0
      %523 = vmatpush1.bf16.msra.mxu0 %v506
      %524 = vmatprep.subr.bf16.mxu0 0
      %525 = vmatpush1.bf16.msra.mxu0 %v507
      %526 = vmatprep.subr.bf16.mxu0 0
      %527 = vmatpush1.bf16.msra.mxu0 %v508
      %528 = vmatprep.subr.bf16.mxu0 0
      %529 = vmatpush1.bf16.msra.mxu0 %v509
      %530 = vmatprep.subr.bf16.mxu0 0
      %531 = vmatpush1.bf16.msra.mxu0 %v510
      %532 = vmatprep.subr.bf16.mxu0 0
      %533 = vmatpush1.bf16.msra.mxu0 %v511
      %534 = vmatprep.subr.bf16.mxu0 0
      %535 = vmatpush1.bf16.msra.mxu0 %v512
      %536 = vmatprep.subr.bf16.mxu0 0
      %537 = vmatpush1.bf16.msra.mxu0 %v513
      %538 = vmatprep.subr.bf16.mxu0 0
      %539 = vmatpush1.bf16.msra.mxu0 0
      %540 = vmatprep.subr.bf16.mxu0 0
      %541 = vmatpush1.bf16.msra.mxu0 0
      %542 = vmatprep.subr.bf16.mxu0 0
      %543 = vmatpush1.bf16.msra.mxu0 0
      %544 = vmatprep.subr.bf16.mxu0 0
      %545 = vmatpush1.bf16.msra.mxu0 0
      %546 = vmatprep.subr.bf16.mxu0 0
      %547 = vmatpush1.bf16.msra.mxu0 0
      %548 = vmatprep.subr.bf16.mxu0 0
      %549 = vmatpush1.bf16.msra.mxu0 0
      %550 = vmatprep.subr.bf16.mxu0 0
      %551 = vmatpush1.bf16.msra.mxu0 0
      %552 = vmatprep.subr.bf16.mxu0 0
      %553 = vmatpush1.bf16.msra.mxu0 0
      %554 = vmatprep.mubr.bf16.mxu0 0
      %555 = vmatmul.mubr.bf16.gmra.mrb[0].mxu0 %v264
      %v556 = vpop.f32.mrb[0].mxu0
      %v557 = vadd.f32 %v412, %v556
      %v558 = vpop.f32.mrb[0].mxu0
      %v559 = vpop.f32.mrb[0].mxu0
      %v560 = vadd.f32 %v415, %v559
      %v561 = vpop.f32.mrb[0].mxu0
      %562 = vmatprep.mubr.bf16.mxu0 0
      %563 = vmatmul.mubr.bf16.gmra.mrb[0].mxu0 %v265
      %v564 = vpop.f32.mrb[0].mxu0
      %v565 = vadd.f32 %v420, %v564
      %v566 = vpop.f32.mrb[0].mxu0
      %v567 = vpop.f32.mrb[0].mxu0
      %v568 = vadd.f32 %v423, %v567
      %v569 = vpop.f32.mrb[0].mxu0
      %570 = vmatprep.mubr.bf16.mxu0 0
      %571 = vmatmul.mubr.bf16.gmra.mrb[0].mxu0 %v266
      %v572 = vpop.f32.mrb[0].mxu0
      %v573 = vadd.f32 %v428, %v572
      %v574 = vpop.f32.mrb[0].mxu0
      %v575 = vpop.f32.mrb[0].mxu0
      %v576 = vadd.f32 %v431, %v575
      %v577 = vpop.f32.mrb[0].mxu0
      %578 = vmatprep.mubr.bf16.mxu0 0
      %579 = vmatmul.mubr.bf16.gmra.mrb[0].mxu0 %v267
      %v580 = vpop.f32.mrb[0].mxu0
      %v581 = vadd.f32 %v436, %v580
      %v582 = vpop.f32.mrb[0].mxu0
      %v583 = vpop.f32.mrb[0].mxu0
      %v584 = vadd.f32 %v439, %v583
      %v585 = vpop.f32.mrb[0].mxu0
      %586 = vmatprep.mubr.bf16.mxu0 0
      %587 = vmatmul.mubr.bf16.gmra.mrb[0].mxu0 %v268
      %v588 = vpop.f32.mrb[0].mxu0
      %v589 = vadd.f32 %v444, %v588
      %v590 = vpop.f32.mrb[0].mxu0
      %v591 = vpop.f32.mrb[0].mxu0
      %v592 = vadd.f32 %v447, %v591
      %v593 = vpop.f32.mrb[0].mxu0
      %594 = vmatprep.mubr.bf16.mxu0 0
      %595 = vmatmul.mubr.bf16.gmra.mrb[0].mxu0 %v269
      %v596 = vpop.f32.mrb[0].mxu0
      %v597 = vadd.f32 %v452, %v596
      %v598 = vpop.f32.mrb[0].mxu0
      %v599 = vpop.f32.mrb[0].mxu0
      %v600 = vadd.f32 %v455, %v599
      %v601 = vpop.f32.mrb[0].mxu0
      %602 = vmatprep.mubr.bf16.mxu0 0
      %603 = vmatmul.mubr.bf16.gmra.mrb[0].mxu0 %v270
      %v604 = vpop.f32.mrb[0].mxu0
      %v605 = vadd.f32 %v460, %v604
      %v606 = vpop.f32.mrb[0].mxu0
      %v607 = vpop.f32.mrb[0].mxu0
      %v608 = vadd.f32 %v463, %v607
      %v609 = vpop.f32.mrb[0].mxu0
      %610 = vmatprep.mubr.bf16.mxu0 0
      %611 = vmatmul.mubr.bf16.gmra.mrb[0].mxu0 %v271
      %v612 = vpop.f32.mrb[0].mxu0
      %v613 = vadd.f32 %v468, %v612
      %v614 = vpop.f32.mrb[0].mxu0
      %v615 = vpop.f32.mrb[0].mxu0
      %v616 = vadd.f32 %v471, %v615
      %v617 = vpop.f32.mrb[0].mxu0
      %618 = vdwg.mxu0
      %v619 = vld [vmem:[%s247 + $0x2] sm:$0xff]
      %v620 = vld [vmem:[%s247 + $0xa] sm:$0xff]
      %v621 = vld [vmem:[%s247 + $0x1a] sm:$0xff]
      %v622 = vld [vmem:[%s247 + $0x22] sm:$0xff]
      %v623 = vld [vmem:[%s247 + $0x32] sm:$0xff]
      %v624 = vld [vmem:[%s247 + $0x3a] sm:$0xff]
      %v625 = vld [vmem:[%s247 + $0x4a] sm:$0xff]
      %v626 = vld [vmem:[%s247 + $0x52] sm:$0xff]
      %v627 = vld [vmem:[%s247 + $0x62] sm:$0xff]
      %v628 = vld [vmem:[%s247 + $0x6a] sm:$0xff]
      %v629 = vld [vmem:[%s247 + $0x7a] sm:$0xff]
      %v630 = vld [vmem:[%s247 + $0x82] sm:$0xff]
      %v631 = vld [vmem:[%s247 + $0x92] sm:$0xff]
      %v632 = vld [vmem:[%s247 + $0x9a] sm:$0xff]
      %v633 = vld [vmem:[%s247 + $0xaa] sm:$0xff]
      %v634 = vld [vmem:[%s247 + $0xb2] sm:$0xff]
      %v635 = vpack.c.bf16 %v620, %v619
      %v636 = vpack.c.bf16 %v622, %v621
      %v637 = vpack.c.bf16 %v624, %v623
      %v638 = vpack.c.bf16 %v626, %v625
      %v639 = vpack.c.bf16 %v628, %v627
      %v640 = vpack.c.bf16 %v630, %v629
      %v641 = vpack.c.bf16 %v632, %v631
      %v642 = vpack.c.bf16 %v634, %v633
      %s643 = scalar_lea.vmem %s1, 128
      %v644 = vld [vmem:[%s643] sm:$0xf]
      %v645 = vld [vmem:[%s643 + $0x4] sm:$0xf]
      %v646 = vld [vmem:[%s643 + $0x8] sm:$0xf]
      %v647 = vld [vmem:[%s643 + $0xc] sm:$0xf]
      %v648 = vld [vmem:[%s643 + $0x10] sm:$0xf]
      %v649 = vld [vmem:[%s643 + $0x14] sm:$0xf]
      %v650 = vld [vmem:[%s643 + $0x18] sm:$0xf]
      %v651 = vld [vmem:[%s643 + $0x1c] sm:$0xf]
      %v652 = vld [vmem:[%s643 + $0x20] sm:$0xf]
      %v653 = vld [vmem:[%s643 + $0x24] sm:$0xf]
      %v654 = vld [vmem:[%s643 + $0x28] sm:$0xf]
      %v655 = vld [vmem:[%s643 + $0x2c] sm:$0xf]
      %v656 = vld [vmem:[%s643 + $0x30] sm:$0xf]
      %v657 = vld [vmem:[%s643 + $0x34] sm:$0xf]
      %v658 = vld [vmem:[%s643 + $0x38] sm:$0xf]
      %v659 = vld [vmem:[%s643 + $0x3c] sm:$0xf]
      %v676 = vunpack.c.l.b16 %v644
      %v677 = vunpack.c.l.b16 %v645
      %v678 = vunpack.c.l.b16 %v646
      %v679 = vunpack.c.l.b16 %v647
      %v680 = vunpack.c.l.b16 %v648
      %v681 = vunpack.c.l.b16 %v649
      %v682 = vunpack.c.l.b16 %v650
      %v683 = vunpack.c.l.b16 %v651
      %v684 = vunpack.c.l.b16 %v652
      %v685 = vunpack.c.l.b16 %v653
      %v686 = vunpack.c.l.b16 %v654
      %v687 = vunpack.c.l.b16 %v655
      %v688 = vunpack.c.l.b16 %v656
      %v689 = vunpack.c.l.b16 %v657
      %v690 = vunpack.c.l.b16 %v658
      %v691 = vunpack.c.l.b16 %v659
      %v692 = vpack.c.b16 %v677, %v676
      %v693 = vpack.c.b16 %v679, %v678
      %v694 = vpack.c.b16 %v681, %v680
      %v695 = vpack.c.b16 %v683, %v682
      %v696 = vpack.c.b16 %v685, %v684
      %v697 = vpack.c.b16 %v687, %v686
      %v698 = vpack.c.b16 %v689, %v688
      %v699 = vpack.c.b16 %v691, %v690
      %708 = vmatprep.subr.bf16.mxu0 0
      %709 = vmatpush1.bf16.msra.mxu0 %v692
      %710 = vmatprep.subr.bf16.mxu0 0
      %711 = vmatpush1.bf16.msra.mxu0 %v693
      %712 = vmatprep.subr.bf16.mxu0 0
      %713 = vmatpush1.bf16.msra.mxu0 %v694
      %714 = vmatprep.subr.bf16.mxu0 0
      %715 = vmatpush1.bf16.msra.mxu0 %v695
      %716 = vmatprep.subr.bf16.mxu0 0
      %717 = vmatpush1.bf16.msra.mxu0 %v696
      %718 = vmatprep.subr.bf16.mxu0 0
      %719 = vmatpush1.bf16.msra.mxu0 %v697
      %720 = vmatprep.subr.bf16.mxu0 0
      %721 = vmatpush1.bf16.msra.mxu0 %v698
      %722 = vmatprep.subr.bf16.mxu0 0
      %723 = vmatpush1.bf16.msra.mxu0 %v699
      %724 = vmatprep.subr.bf16.mxu0 0
      %725 = vmatpush1.bf16.msra.mxu0 0
      %726 = vmatprep.subr.bf16.mxu0 0
      %727 = vmatpush1.bf16.msra.mxu0 0
      %728 = vmatprep.subr.bf16.mxu0 0
      %729 = vmatpush1.bf16.msra.mxu0 0
      %730 = vmatprep.subr.bf16.mxu0 0
      %731 = vmatpush1.bf16.msra.mxu0 0
      %732 = vmatprep.subr.bf16.mxu0 0
      %733 = vmatpush1.bf16.msra.mxu0 0
      %734 = vmatprep.subr.bf16.mxu0 0
      %735 = vmatpush1.bf16.msra.mxu0 0
      %736 = vmatprep.subr.bf16.mxu0 0
      %737 = vmatpush1.bf16.msra.mxu0 0
      %738 = vmatprep.subr.bf16.mxu0 0
      %739 = vmatpush1.bf16.msra.mxu0 0
      %740 = vmatprep.mubr.bf16.mxu0 0
      %741 = vmatmul.mubr.bf16.gmra.mrb[0].mxu0 %v635
      %v742 = vpop.f32.mrb[0].mxu0
      %v743 = vadd.f32 0.0, %v742
      %v744 = vpop.f32.mrb[0].mxu0
      %v745 = vpop.f32.mrb[0].mxu0
      %v746 = vadd.f32 0.0, %v745
      %v747 = vpop.f32.mrb[0].mxu0
      %748 = vmatprep.mubr.bf16.mxu0 0
      %749 = vmatmul.mubr.bf16.gmra.mrb[0].mxu0 %v636
      %v750 = vpop.f32.mrb[0].mxu0
      %v751 = vadd.f32 0.0, %v750
      %v752 = vpop.f32.mrb[0].mxu0
      %v753 = vpop.f32.mrb[0].mxu0
      %v754 = vadd.f32 0.0, %v753
      %v755 = vpop.f32.mrb[0].mxu0
      %756 = vmatprep.mubr.bf16.mxu0 0
      %757 = vmatmul.mubr.bf16.gmra.mrb[0].mxu0 %v637
      %v758 = vpop.f32.mrb[0].mxu0
      %v759 = vadd.f32 0.0, %v758
      %v760 = vpop.f32.mrb[0].mxu0
      %v761 = vpop.f32.mrb[0].mxu0
      %v762 = vadd.f32 0.0, %v761
      %v763 = vpop.f32.mrb[0].mxu0
      %764 = vmatprep.mubr.bf16.mxu0 0
      %765 = vmatmul.mubr.bf16.gmra.mrb[0].mxu0 %v638
      %v766 = vpop.f32.mrb[0].mxu0
      %v767 = vadd.f32 0.0, %v766
      %v768 = vpop.f32.mrb[0].mxu0
      %v769 = vpop.f32.mrb[0].mxu0
      %v770 = vadd.f32 0.0, %v769
      %v771 = vpop.f32.mrb[0].mxu0
      %772 = vmatprep.mubr.bf16.mxu0 0
      %773 = vmatmul.mubr.bf16.gmra.mrb[0].mxu0 %v639
      %v774 = vpop.f32.mrb[0].mxu0
      %v775 = vadd.f32 0.0, %v774
      %v776 = vpop.f32.mrb[0].mxu0
      %v777 = vpop.f32.mrb[0].mxu0
      %v778 = vadd.f32 0.0, %v777
      %v779 = vpop.f32.mrb[0].mxu0
      %780 = vmatprep.mubr.bf16.mxu0 0
      %781 = vmatmul.mubr.bf16.gmra.mrb[0].mxu0 %v640
      %v782 = vpop.f32.mrb[0].mxu0
      %v783 = vadd.f32 0.0, %v782
      %v784 = vpop.f32.mrb[0].mxu0
      %v785 = vpop.f32.mrb[0].mxu0
      %v786 = vadd.f32 0.0, %v785
      %v787 = vpop.f32.mrb[0].mxu0
      %788 = vmatprep.mubr.bf16.mxu0 0
      %789 = vmatmul.mubr.bf16.gmra.mrb[0].mxu0 %v641
      %v790 = vpop.f32.mrb[0].mxu0
      %v791 = vadd.f32 0.0, %v790
      %v792 = vpop.f32.mrb[0].mxu0
      %v793 = vpop.f32.mrb[0].mxu0
      %v794 = vadd.f32 0.0, %v793
      %v795 = vpop.f32.mrb[0].mxu0
      %796 = vmatprep.mubr.bf16.mxu0 0
      %797 = vmatmul.mubr.bf16.gmra.mrb[0].mxu0 %v642
      %v798 = vpop.f32.mrb[0].mxu0
      %v799 = vadd.f32 0.0, %v798
      %v800 = vpop.f32.mrb[0].mxu0
      %v801 = vpop.f32.mrb[0].mxu0
      %v802 = vadd.f32 0.0, %v801
      %v803 = vpop.f32.mrb[0].mxu0
      %804 = vdwg.mxu0
      %v805 = vadd.f32 %v557, %v743
      %v806 = vadd.f32 %v560, %v746
      %v807 = vadd.f32 %v565, %v751
      %v808 = vadd.f32 %v568, %v754
      %v809 = vadd.f32 %v573, %v759
      %v810 = vadd.f32 %v576, %v762
      %v811 = vadd.f32 %v581, %v767
      %v812 = vadd.f32 %v584, %v770
      %v813 = vadd.f32 %v589, %v775
      %v814 = vadd.f32 %v592, %v778
      %v815 = vadd.f32 %v597, %v783
      %v816 = vadd.f32 %v600, %v786
      %v817 = vadd.f32 %v605, %v791
      %v818 = vadd.f32 %v608, %v794
      %v819 = vadd.f32 %v613, %v799
      %v820 = vadd.f32 %v616, %v802
      %s821 = sadd.s32 %s245, 1
      %s822 = smul.u32 %s821, 24
      %s823 = scalar_lea.vmem %s224, %s822
      %v824 = vld [vmem:[%s823] sm:$0xff]
      %v825 = vld [vmem:[%s823 + $0x8] sm:$0xff]
      %v826 = vld [vmem:[%s823 + $0x18] sm:$0xff]
      %v827 = vld [vmem:[%s823 + $0x20] sm:$0xff]
      %v828 = vld [vmem:[%s823 + $0x30] sm:$0xff]
      %v829 = vld [vmem:[%s823 + $0x38] sm:$0xff]
      %v830 = vld [vmem:[%s823 + $0x48] sm:$0xff]
      %v831 = vld [vmem:[%s823 + $0x50] sm:$0xff]
      %v832 = vld [vmem:[%s823 + $0x60] sm:$0xff]
      %v833 = vld [vmem:[%s823 + $0x68] sm:$0xff]
      %v834 = vld [vmem:[%s823 + $0x78] sm:$0xff]
      %v835 = vld [vmem:[%s823 + $0x80] sm:$0xff]
      %v836 = vld [vmem:[%s823 + $0x90] sm:$0xff]
      %v837 = vld [vmem:[%s823 + $0x98] sm:$0xff]
      %v838 = vld [vmem:[%s823 + $0xa8] sm:$0xff]
      %v839 = vld [vmem:[%s823 + $0xb0] sm:$0xff]
      %v840 = vpack.c.bf16 %v825, %v824
      %v841 = vpack.c.bf16 %v827, %v826
      %v842 = vpack.c.bf16 %v829, %v828
      %v843 = vpack.c.bf16 %v831, %v830
      %v844 = vpack.c.bf16 %v833, %v832
      %v845 = vpack.c.bf16 %v835, %v834
      %v846 = vpack.c.bf16 %v837, %v836
      %v847 = vpack.c.bf16 %v839, %v838
      %s848 = scalar_lea.vmem %s1, 192
      %v849 = vld [vmem:[%s848] sm:$0xf]
      %v850 = vld [vmem:[%s848 + $0x4] sm:$0xf]
      %v851 = vld [vmem:[%s848 + $0x8] sm:$0xf]
      %v852 = vld [vmem:[%s848 + $0xc] sm:$0xf]
      %v853 = vld [vmem:[%s848 + $0x10] sm:$0xf]
      %v854 = vld [vmem:[%s848 + $0x14] sm:$0xf]
      %v855 = vld [vmem:[%s848 + $0x18] sm:$0xf]
      %v856 = vld [vmem:[%s848 + $0x1c] sm:$0xf]
      %v857 = vld [vmem:[%s848 + $0x20] sm:$0xf]
      %v858 = vld [vmem:[%s848 + $0x24] sm:$0xf]
      %v859 = vld [vmem:[%s848 + $0x28] sm:$0xf]
      %v860 = vld [vmem:[%s848 + $0x2c] sm:$0xf]
      %v861 = vld [vmem:[%s848 + $0x30] sm:$0xf]
      %v862 = vld [vmem:[%s848 + $0x34] sm:$0xf]
      %v863 = vld [vmem:[%s848 + $0x38] sm:$0xf]
      %v864 = vld [vmem:[%s848 + $0x3c] sm:$0xf]
      %v881 = vunpack.c.l.b16 %v849
      %v882 = vunpack.c.l.b16 %v850
      %v883 = vunpack.c.l.b16 %v851
      %v884 = vunpack.c.l.b16 %v852
      %v885 = vunpack.c.l.b16 %v853
      %v886 = vunpack.c.l.b16 %v854
      %v887 = vunpack.c.l.b16 %v855
      %v888 = vunpack.c.l.b16 %v856
      %v889 = vunpack.c.l.b16 %v857
      %v890 = vunpack.c.l.b16 %v858
      %v891 = vunpack.c.l.b16 %v859
      %v892 = vunpack.c.l.b16 %v860
      %v893 = vunpack.c.l.b16 %v861
      %v894 = vunpack.c.l.b16 %v862
      %v895 = vunpack.c.l.b16 %v863
      %v896 = vunpack.c.l.b16 %v864
      %v897 = vpack.c.b16 %v882, %v881
      %v898 = vpack.c.b16 %v884, %v883
      %v899 = vpack.c.b16 %v886, %v885
      %v900 = vpack.c.b16 %v888, %v887
      %v901 = vpack.c.b16 %v890, %v889
      %v902 = vpack.c.b16 %v892, %v891
      %v903 = vpack.c.b16 %v894, %v893
      %v904 = vpack.c.b16 %v896, %v895
      %913 = vmatprep.subr.bf16.mxu0 0
      %914 = vmatpush1.bf16.msra.mxu0 %v897
      %915 = vmatprep.subr.bf16.mxu0 0
      %916 = vmatpush1.bf16.msra.mxu0 %v898
      %917 = vmatprep.subr.bf16.mxu0 0
      %918 = vmatpush1.bf16.msra.mxu0 %v899
      %919 = vmatprep.subr.bf16.mxu0 0
      %920 = vmatpush1.bf16.msra.mxu0 %v900
      %921 = vmatprep.subr.bf16.mxu0 0
      %922 = vmatpush1.bf16.msra.mxu0 %v901
      %923 = vmatprep.subr.bf16.mxu0 0
      %924 = vmatpush1.bf16.msra.mxu0 %v902
      %925 = vmatprep.subr.bf16.mxu0 0
      %926 = vmatpush1.bf16.msra.mxu0 %v903
      %927 = vmatprep.subr.bf16.mxu0 0
      %928 = vmatpush1.bf16.msra.mxu0 %v904
      %929 = vmatprep.subr.bf16.mxu0 0
      %930 = vmatpush1.bf16.msra.mxu0 0
      %931 = vmatprep.subr.bf16.mxu0 0
      %932 = vmatpush1.bf16.msra.mxu0 0
      %933 = vmatprep.subr.bf16.mxu0 0
      %934 = vmatpush1.bf16.msra.mxu0 0
      %935 = vmatprep.subr.bf16.mxu0 0
      %936 = vmatpush1.bf16.msra.mxu0 0
      %937 = vmatprep.subr.bf16.mxu0 0
      %938 = vmatpush1.bf16.msra.mxu0 0
      %939 = vmatprep.subr.bf16.mxu0 0
      %940 = vmatpush1.bf16.msra.mxu0 0
      %941 = vmatprep.subr.bf16.mxu0 0
      %942 = vmatpush1.bf16.msra.mxu0 0
      %943 = vmatprep.subr.bf16.mxu0 0
      %944 = vmatpush1.bf16.msra.mxu0 0
      %945 = vmatprep.mubr.bf16.mxu0 0
      %946 = vmatmul.mubr.bf16.gmra.mrb[0].mxu0 %v840
      %v947 = vpop.f32.mrb[0].mxu0
      %v948 = vadd.f32 0.0, %v947
      %v949 = vpop.f32.mrb[0].mxu0
      %v950 = vpop.f32.mrb[0].mxu0
      %v951 = vadd.f32 0.0, %v950
      %v952 = vpop.f32.mrb[0].mxu0
      %953 = vmatprep.mubr.bf16.mxu0 0
      %954 = vmatmul.mubr.bf16.gmra.mrb[0].mxu0 %v841
      %v955 = vpop.f32.mrb[0].mxu0
      %v956 = vadd.f32 0.0, %v955
      %v957 = vpop.f32.mrb[0].mxu0
      %v958 = vpop.f32.mrb[0].mxu0
      %v959 = vadd.f32 0.0, %v958
      %v960 = vpop.f32.mrb[0].mxu0
      %961 = vmatprep.mubr.bf16.mxu0 0
      %962 = vmatmul.mubr.bf16.gmra.mrb[0].mxu0 %v842
      %v963 = vpop.f32.mrb[0].mxu0
      %v964 = vadd.f32 0.0, %v963
      %v965 = vpop.f32.mrb[0].mxu0
      %v966 = vpop.f32.mrb[0].mxu0
      %v967 = vadd.f32 0.0, %v966
      %v968 = vpop.f32.mrb[0].mxu0
      %969 = vmatprep.mubr.bf16.mxu0 0
      %970 = vmatmul.mubr.bf16.gmra.mrb[0].mxu0 %v843
      %v971 = vpop.f32.mrb[0].mxu0
      %v972 = vadd.f32 0.0, %v971
      %v973 = vpop.f32.mrb[0].mxu0
      %v974 = vpop.f32.mrb[0].mxu0
      %v975 = vadd.f32 0.0, %v974
      %v976 = vpop.f32.mrb[0].mxu0
      %977 = vmatprep.mubr.bf16.mxu0 0
      %978 = vmatmul.mubr.bf16.gmra.mrb[0].mxu0 %v844
      %v979 = vpop.f32.mrb[0].mxu0
      %v980 = vadd.f32 0.0, %v979
      %v981 = vpop.f32.mrb[0].mxu0
      %v982 = vpop.f32.mrb[0].mxu0
      %v983 = vadd.f32 0.0, %v982
      %v984 = vpop.f32.mrb[0].mxu0
      %985 = vmatprep.mubr.bf16.mxu0 0
      %986 = vmatmul.mubr.bf16.gmra.mrb[0].mxu0 %v845
      %v987 = vpop.f32.mrb[0].mxu0
      %v988 = vadd.f32 0.0, %v987
      %v989 = vpop.f32.mrb[0].mxu0
      %v990 = vpop.f32.mrb[0].mxu0
      %v991 = vadd.f32 0.0, %v990
      %v992 = vpop.f32.mrb[0].mxu0
      %993 = vmatprep.mubr.bf16.mxu0 0
      %994 = vmatmul.mubr.bf16.gmra.mrb[0].mxu0 %v846
      %v995 = vpop.f32.mrb[0].mxu0
      %v996 = vadd.f32 0.0, %v995
      %v997 = vpop.f32.mrb[0].mxu0
      %v998 = vpop.f32.mrb[0].mxu0
      %v999 = vadd.f32 0.0, %v998
      %v1000 = vpop.f32.mrb[0].mxu0
      %1001 = vmatprep.mubr.bf16.mxu0 0
      %1002 = vmatmul.mubr.bf16.gmra.mrb[0].mxu0 %v847
      %v1003 = vpop.f32.mrb[0].mxu0
      %v1004 = vadd.f32 0.0, %v1003
      %v1005 = vpop.f32.mrb[0].mxu0
      %v1006 = vpop.f32.mrb[0].mxu0
      %v1007 = vadd.f32 0.0, %v1006
      %v1008 = vpop.f32.mrb[0].mxu0
      %1009 = vdwg.mxu0
      %v1010 = vadd.f32 %v805, %v948
      %v1011 = vadd.f32 %v806, %v951
      %v1012 = vadd.f32 %v807, %v956
      %v1013 = vadd.f32 %v808, %v959
      %v1014 = vadd.f32 %v809, %v964
      %v1015 = vadd.f32 %v810, %v967
      %v1016 = vadd.f32 %v811, %v972
      %v1017 = vadd.f32 %v812, %v975
      %v1018 = vadd.f32 %v813, %v980
      %v1019 = vadd.f32 %v814, %v983
      %v1020 = vadd.f32 %v815, %v988
      %v1021 = vadd.f32 %v816, %v991
      %v1022 = vadd.f32 %v817, %v996
      %v1023 = vadd.f32 %v818, %v999
      %v1024 = vadd.f32 %v819, %v1004
      %v1025 = vadd.f32 %v820, %v1007
      %v1026 = vld [vmem:[%s823 + $0x1] sm:$0xff]
      %v1027 = vld [vmem:[%s823 + $0x9] sm:$0xff]
      %v1028 = vld [vmem:[%s823 + $0x19] sm:$0xff]
      %v1029 = vld [vmem:[%s823 + $0x21] sm:$0xff]
      %v1030 = vld [vmem:[%s823 + $0x31] sm:$0xff]
      %v1031 = vld [vmem:[%s823 + $0x39] sm:$0xff]
      %v1032 = vld [vmem:[%s823 + $0x49] sm:$0xff]
      %v1033 = vld [vmem:[%s823 + $0x51] sm:$0xff]
      %v1034 = vld [vmem:[%s823 + $0x61] sm:$0xff]
      %v1035 = vld [vmem:[%s823 + $0x69] sm:$0xff]
      %v1036 = vld [vmem:[%s823 + $0x79] sm:$0xff]
      %v1037 = vld [vmem:[%s823 + $0x81] sm:$0xff]
      %v1038 = vld [vmem:[%s823 + $0x91] sm:$0xff]
      %v1039 = vld [vmem:[%s823 + $0x99] sm:$0xff]
      %v1040 = vld [vmem:[%s823 + $0xa9] sm:$0xff]
      %v1041 = vld [vmem:[%s823 + $0xb1] sm:$0xff]
      %v1042 = vpack.c.bf16 %v1027, %v1026
      %v1043 = vpack.c.bf16 %v1029, %v1028
      %v1044 = vpack.c.bf16 %v1031, %v1030
      %v1045 = vpack.c.bf16 %v1033, %v1032
      %v1046 = vpack.c.bf16 %v1035, %v1034
      %v1047 = vpack.c.bf16 %v1037, %v1036
      %v1048 = vpack.c.bf16 %v1039, %v1038
      %v1049 = vpack.c.bf16 %v1041, %v1040
      %s1050 = scalar_lea.vmem %s1, 256
      %v1051 = vld [vmem:[%s1050] sm:$0xf]
      %v1052 = vld [vmem:[%s1050 + $0x4] sm:$0xf]
      %v1053 = vld [vmem:[%s1050 + $0x8] sm:$0xf]
      %v1054 = vld [vmem:[%s1050 + $0xc] sm:$0xf]
      %v1055 = vld [vmem:[%s1050 + $0x10] sm:$0xf]
      %v1056 = vld [vmem:[%s1050 + $0x14] sm:$0xf]
      %v1057 = vld [vmem:[%s1050 + $0x18] sm:$0xf]
      %v1058 = vld [vmem:[%s1050 + $0x1c] sm:$0xf]
      %v1059 = vld [vmem:[%s1050 + $0x20] sm:$0xf]
      %v1060 = vld [vmem:[%s1050 + $0x24] sm:$0xf]
      %v1061 = vld [vmem:[%s1050 + $0x28] sm:$0xf]
      %v1062 = vld [vmem:[%s1050 + $0x2c] sm:$0xf]
      %v1063 = vld [vmem:[%s1050 + $0x30] sm:$0xf]
      %v1064 = vld [vmem:[%s1050 + $0x34] sm:$0xf]
      %v1065 = vld [vmem:[%s1050 + $0x38] sm:$0xf]
      %v1066 = vld [vmem:[%s1050 + $0x3c] sm:$0xf]
      %v1083 = vunpack.c.l.b16 %v1051
      %v1084 = vunpack.c.l.b16 %v1052
      %v1085 = vunpack.c.l.b16 %v1053
      %v1086 = vunpack.c.l.b16 %v1054
      %v1087 = vunpack.c.l.b16 %v1055
      %v1088 = vunpack.c.l.b16 %v1056
      %v1089 = vunpack.c.l.b16 %v1057
      %v1090 = vunpack.c.l.b16 %v1058
      %v1091 = vunpack.c.l.b16 %v1059
      %v1092 = vunpack.c.l.b16 %v1060
      %v1093 = vunpack.c.l.b16 %v1061
      %v1094 = vunpack.c.l.b16 %v1062
      %v1095 = vunpack.c.l.b16 %v1063
      %v1096 = vunpack.c.l.b16 %v1064
      %v1097 = vunpack.c.l.b16 %v1065
      %v1098 = vunpack.c.l.b16 %v1066
      %v1099 = vpack.c.b16 %v1084, %v1083
      %v1100 = vpack.c.b16 %v1086, %v1085
      %v1101 = vpack.c.b16 %v1088, %v1087
      %v1102 = vpack.c.b16 %v1090, %v1089
      %v1103 = vpack.c.b16 %v1092, %v1091
      %v1104 = vpack.c.b16 %v1094, %v1093
      %v1105 = vpack.c.b16 %v1096, %v1095
      %v1106 = vpack.c.b16 %v1098, %v1097
      %1115 = vmatprep.subr.bf16.mxu0 0
      %1116 = vmatpush1.bf16.msra.mxu0 %v1099
      %1117 = vmatprep.subr.bf16.mxu0 0
      %1118 = vmatpush1.bf16.msra.mxu0 %v1100
      %1119 = vmatprep.subr.bf16.mxu0 0
      %1120 = vmatpush1.bf16.msra.mxu0 %v1101
      %1121 = vmatprep.subr.bf16.mxu0 0
      %1122 = vmatpush1.bf16.msra.mxu0 %v1102
      %1123 = vmatprep.subr.bf16.mxu0 0
      %1124 = vmatpush1.bf16.msra.mxu0 %v1103
      %1125 = vmatprep.subr.bf16.mxu0 0
      %1126 = vmatpush1.bf16.msra.mxu0 %v1104
      %1127 = vmatprep.subr.bf16.mxu0 0
      %1128 = vmatpush1.bf16.msra.mxu0 %v1105
      %1129 = vmatprep.subr.bf16.mxu0 0
      %1130 = vmatpush1.bf16.msra.mxu0 %v1106
      %1131 = vmatprep.subr.bf16.mxu0 0
      %1132 = vmatpush1.bf16.msra.mxu0 0
      %1133 = vmatprep.subr.bf16.mxu0 0
      %1134 = vmatpush1.bf16.msra.mxu0 0
      %1135 = vmatprep.subr.bf16.mxu0 0
      %1136 = vmatpush1.bf16.msra.mxu0 0
      %1137 = vmatprep.subr.bf16.mxu0 0
      %1138 = vmatpush1.bf16.msra.mxu0 0
      %1139 = vmatprep.subr.bf16.mxu0 0
      %1140 = vmatpush1.bf16.msra.mxu0 0
      %1141 = vmatprep.subr.bf16.mxu0 0
      %1142 = vmatpush1.bf16.msra.mxu0 0
      %1143 = vmatprep.subr.bf16.mxu0 0
      %1144 = vmatpush1.bf16.msra.mxu0 0
      %1145 = vmatprep.subr.bf16.mxu0 0
      %1146 = vmatpush1.bf16.msra.mxu0 0
      %1147 = vmatprep.mubr.bf16.mxu0 0
      %1148 = vmatmul.mubr.bf16.gmra.mrb[0].mxu0 %v1042
      %v1149 = vpop.f32.mrb[0].mxu0
      %v1150 = vadd.f32 0.0, %v1149
      %v1151 = vpop.f32.mrb[0].mxu0
      %v1152 = vpop.f32.mrb[0].mxu0
      %v1153 = vadd.f32 0.0, %v1152
      %v1154 = vpop.f32.mrb[0].mxu0
      %1155 = vmatprep.mubr.bf16.mxu0 0
      %1156 = vmatmul.mubr.bf16.gmra.mrb[0].mxu0 %v1043
      %v1157 = vpop.f32.mrb[0].mxu0
      %v1158 = vadd.f32 0.0, %v1157
      %v1159 = vpop.f32.mrb[0].mxu0
      %v1160 = vpop.f32.mrb[0].mxu0
      %v1161 = vadd.f32 0.0, %v1160
      %v1162 = vpop.f32.mrb[0].mxu0
      %1163 = vmatprep.mubr.bf16.mxu0 0
      %1164 = vmatmul.mubr.bf16.gmra.mrb[0].mxu0 %v1044
      %v1165 = vpop.f32.mrb[0].mxu0
      %v1166 = vadd.f32 0.0, %v1165
      %v1167 = vpop.f32.mrb[0].mxu0
      %v1168 = vpop.f32.mrb[0].mxu0
      %v1169 = vadd.f32 0.0, %v1168
      %v1170 = vpop.f32.mrb[0].mxu0
      %1171 = vmatprep.mubr.bf16.mxu0 0
      %1172 = vmatmul.mubr.bf16.gmra.mrb[0].mxu0 %v1045
      %v1173 = vpop.f32.mrb[0].mxu0
      %v1174 = vadd.f32 0.0, %v1173
      %v1175 = vpop.f32.mrb[0].mxu0
      %v1176 = vpop.f32.mrb[0].mxu0
      %v1177 = vadd.f32 0.0, %v1176
      %v1178 = vpop.f32.mrb[0].mxu0
      %1179 = vmatprep.mubr.bf16.mxu0 0
      %1180 = vmatmul.mubr.bf16.gmra.mrb[0].mxu0 %v1046
      %v1181 = vpop.f32.mrb[0].mxu0
      %v1182 = vadd.f32 0.0, %v1181
      %v1183 = vpop.f32.mrb[0].mxu0
      %v1184 = vpop.f32.mrb[0].mxu0
      %v1185 = vadd.f32 0.0, %v1184
      %v1186 = vpop.f32.mrb[0].mxu0
      %1187 = vmatprep.mubr.bf16.mxu0 0
      %1188 = vmatmul.mubr.bf16.gmra.mrb[0].mxu0 %v1047
      %v1189 = vpop.f32.mrb[0].mxu0
      %v1190 = vadd.f32 0.0, %v1189
      %v1191 = vpop.f32.mrb[0].mxu0
      %v1192 = vpop.f32.mrb[0].mxu0
      %v1193 = vadd.f32 0.0, %v1192
      %v1194 = vpop.f32.mrb[0].mxu0
      %1195 = vmatprep.mubr.bf16.mxu0 0
      %1196 = vmatmul.mubr.bf16.gmra.mrb[0].mxu0 %v1048
      %v1197 = vpop.f32.mrb[0].mxu0
      %v1198 = vadd.f32 0.0, %v1197
      %v1199 = vpop.f32.mrb[0].mxu0
      %v1200 = vpop.f32.mrb[0].mxu0
      %v1201 = vadd.f32 0.0, %v1200
      %v1202 = vpop.f32.mrb[0].mxu0
      %1203 = vmatprep.mubr.bf16.mxu0 0
      %1204 = vmatmul.mubr.bf16.gmra.mrb[0].mxu0 %v1049
      %v1205 = vpop.f32.mrb[0].mxu0
      %v1206 = vadd.f32 0.0, %v1205
      %v1207 = vpop.f32.mrb[0].mxu0
      %v1208 = vpop.f32.mrb[0].mxu0
      %v1209 = vadd.f32 0.0, %v1208
      %v1210 = vpop.f32.mrb[0].mxu0
      %1211 = vdwg.mxu0
      %v1212 = vadd.f32 %v1010, %v1150
      %v1213 = vadd.f32 %v1011, %v1153
      %v1214 = vadd.f32 %v1012, %v1158
      %v1215 = vadd.f32 %v1013, %v1161
      %v1216 = vadd.f32 %v1014, %v1166
      %v1217 = vadd.f32 %v1015, %v1169
      %v1218 = vadd.f32 %v1016, %v1174
      %v1219 = vadd.f32 %v1017, %v1177
      %v1220 = vadd.f32 %v1018, %v1182
      %v1221 = vadd.f32 %v1019, %v1185
      %v1222 = vadd.f32 %v1020, %v1190
      %v1223 = vadd.f32 %v1021, %v1193
      %v1224 = vadd.f32 %v1022, %v1198
      %v1225 = vadd.f32 %v1023, %v1201
      %v1226 = vadd.f32 %v1024, %v1206
      %v1227 = vadd.f32 %v1025, %v1209
      %v1228 = vld [vmem:[%s823 + $0x2] sm:$0xff]
      %v1229 = vld [vmem:[%s823 + $0xa] sm:$0xff]
      %v1230 = vld [vmem:[%s823 + $0x1a] sm:$0xff]
      %v1231 = vld [vmem:[%s823 + $0x22] sm:$0xff]
      %v1232 = vld [vmem:[%s823 + $0x32] sm:$0xff]
      %v1233 = vld [vmem:[%s823 + $0x3a] sm:$0xff]
      %v1234 = vld [vmem:[%s823 + $0x4a] sm:$0xff]
      %v1235 = vld [vmem:[%s823 + $0x52] sm:$0xff]
      %v1236 = vld [vmem:[%s823 + $0x62] sm:$0xff]
      %v1237 = vld [vmem:[%s823 + $0x6a] sm:$0xff]
      %v1238 = vld [vmem:[%s823 + $0x7a] sm:$0xff]
      %v1239 = vld [vmem:[%s823 + $0x82] sm:$0xff]
      %v1240 = vld [vmem:[%s823 + $0x92] sm:$0xff]
      %v1241 = vld [vmem:[%s823 + $0x9a] sm:$0xff]
      %v1242 = vld [vmem:[%s823 + $0xaa] sm:$0xff]
      %v1243 = vld [vmem:[%s823 + $0xb2] sm:$0xff]
      %v1244 = vpack.c.bf16 %v1229, %v1228
      %v1245 = vpack.c.bf16 %v1231, %v1230
      %v1246 = vpack.c.bf16 %v1233, %v1232
      %v1247 = vpack.c.bf16 %v1235, %v1234
      %v1248 = vpack.c.bf16 %v1237, %v1236
      %v1249 = vpack.c.bf16 %v1239, %v1238
      %v1250 = vpack.c.bf16 %v1241, %v1240
      %v1251 = vpack.c.bf16 %v1243, %v1242
      %s1252 = scalar_lea.vmem %s1, 320
      %v1253 = vld [vmem:[%s1252] sm:$0xf]
      %v1254 = vld [vmem:[%s1252 + $0x4] sm:$0xf]
      %v1255 = vld [vmem:[%s1252 + $0x8] sm:$0xf]
      %v1256 = vld [vmem:[%s1252 + $0xc] sm:$0xf]
      %v1257 = vld [vmem:[%s1252 + $0x10] sm:$0xf]
      %v1258 = vld [vmem:[%s1252 + $0x14] sm:$0xf]
      %v1259 = vld [vmem:[%s1252 + $0x18] sm:$0xf]
      %v1260 = vld [vmem:[%s1252 + $0x1c] sm:$0xf]
      %v1261 = vld [vmem:[%s1252 + $0x20] sm:$0xf]
      %v1262 = vld [vmem:[%s1252 + $0x24] sm:$0xf]
      %v1263 = vld [vmem:[%s1252 + $0x28] sm:$0xf]
      %v1264 = vld [vmem:[%s1252 + $0x2c] sm:$0xf]
      %v1265 = vld [vmem:[%s1252 + $0x30] sm:$0xf]
      %v1266 = vld [vmem:[%s1252 + $0x34] sm:$0xf]
      %v1267 = vld [vmem:[%s1252 + $0x38] sm:$0xf]
      %v1268 = vld [vmem:[%s1252 + $0x3c] sm:$0xf]
      %v1285 = vunpack.c.l.b16 %v1253
      %v1286 = vunpack.c.l.b16 %v1254
      %v1287 = vunpack.c.l.b16 %v1255
      %v1288 = vunpack.c.l.b16 %v1256
      %v1289 = vunpack.c.l.b16 %v1257
      %v1290 = vunpack.c.l.b16 %v1258
      %v1291 = vunpack.c.l.b16 %v1259
      %v1292 = vunpack.c.l.b16 %v1260
      %v1293 = vunpack.c.l.b16 %v1261
      %v1294 = vunpack.c.l.b16 %v1262
      %v1295 = vunpack.c.l.b16 %v1263
      %v1296 = vunpack.c.l.b16 %v1264
      %v1297 = vunpack.c.l.b16 %v1265
      %v1298 = vunpack.c.l.b16 %v1266
      %v1299 = vunpack.c.l.b16 %v1267
      %v1300 = vunpack.c.l.b16 %v1268
      %v1301 = vpack.c.b16 %v1286, %v1285
      %v1302 = vpack.c.b16 %v1288, %v1287
      %v1303 = vpack.c.b16 %v1290, %v1289
      %v1304 = vpack.c.b16 %v1292, %v1291
      %v1305 = vpack.c.b16 %v1294, %v1293
      %v1306 = vpack.c.b16 %v1296, %v1295
      %v1307 = vpack.c.b16 %v1298, %v1297
      %v1308 = vpack.c.b16 %v1300, %v1299
      %1317 = vmatprep.subr.bf16.mxu0 0
      %1318 = vmatpush1.bf16.msra.mxu0 %v1301
      %1319 = vmatprep.subr.bf16.mxu0 0
      %1320 = vmatpush1.bf16.msra.mxu0 %v1302
      %1321 = vmatprep.subr.bf16.mxu0 0
      %1322 = vmatpush1.bf16.msra.mxu0 %v1303
      %1323 = vmatprep.subr.bf16.mxu0 0
      %1324 = vmatpush1.bf16.msra.mxu0 %v1304
      %1325 = vmatprep.subr.bf16.mxu0 0
      %1326 = vmatpush1.bf16.msra.mxu0 %v1305
      %1327 = vmatprep.subr.bf16.mxu0 0
      %1328 = vmatpush1.bf16.msra.mxu0 %v1306
      %1329 = vmatprep.subr.bf16.mxu0 0
      %1330 = vmatpush1.bf16.msra.mxu0 %v1307
      %1331 = vmatprep.subr.bf16.mxu0 0
      %1332 = vmatpush1.bf16.msra.mxu0 %v1308
      %1333 = vmatprep.subr.bf16.mxu0 0
      %1334 = vmatpush1.bf16.msra.mxu0 0
      %1335 = vmatprep.subr.bf16.mxu0 0
      %1336 = vmatpush1.bf16.msra.mxu0 0
      %1337 = vmatprep.subr.bf16.mxu0 0
      %1338 = vmatpush1.bf16.msra.mxu0 0
      %1339 = vmatprep.subr.bf16.mxu0 0
      %1340 = vmatpush1.bf16.msra.mxu0 0
      %1341 = vmatprep.subr.bf16.mxu0 0
      %1342 = vmatpush1.bf16.msra.mxu0 0
      %1343 = vmatprep.subr.bf16.mxu0 0
      %1344 = vmatpush1.bf16.msra.mxu0 0
      %1345 = vmatprep.subr.bf16.mxu0 0
      %1346 = vmatpush1.bf16.msra.mxu0 0
      %1347 = vmatprep.subr.bf16.mxu0 0
      %1348 = vmatpush1.bf16.msra.mxu0 0
      %1349 = vmatprep.mubr.bf16.mxu0 0
      %1350 = vmatmul.mubr.bf16.gmra.mrb[0].mxu0 %v1244
      %v1351 = vpop.f32.mrb[0].mxu0
      %v1352 = vadd.f32 0.0, %v1351
      %v1353 = vpop.f32.mrb[0].mxu0
      %v1354 = vpop.f32.mrb[0].mxu0
      %v1355 = vadd.f32 0.0, %v1354
      %v1356 = vpop.f32.mrb[0].mxu0
      %1357 = vmatprep.mubr.bf16.mxu0 0
      %1358 = vmatmul.mubr.bf16.gmra.mrb[0].mxu0 %v1245
      %v1359 = vpop.f32.mrb[0].mxu0
      %v1360 = vadd.f32 0.0, %v1359
      %v1361 = vpop.f32.mrb[0].mxu0
      %v1362 = vpop.f32.mrb[0].mxu0
      %v1363 = vadd.f32 0.0, %v1362
      %v1364 = vpop.f32.mrb[0].mxu0
      %1365 = vmatprep.mubr.bf16.mxu0 0
      %1366 = vmatmul.mubr.bf16.gmra.mrb[0].mxu0 %v1246
      %v1367 = vpop.f32.mrb[0].mxu0
      %v1368 = vadd.f32 0.0, %v1367
      %v1369 = vpop.f32.mrb[0].mxu0
      %v1370 = vpop.f32.mrb[0].mxu0
      %v1371 = vadd.f32 0.0, %v1370
      %v1372 = vpop.f32.mrb[0].mxu0
      %1373 = vmatprep.mubr.bf16.mxu0 0
      %1374 = vmatmul.mubr.bf16.gmra.mrb[0].mxu0 %v1247
      %v1375 = vpop.f32.mrb[0].mxu0
      %v1376 = vadd.f32 0.0, %v1375
      %v1377 = vpop.f32.mrb[0].mxu0
      %v1378 = vpop.f32.mrb[0].mxu0
      %v1379 = vadd.f32 0.0, %v1378
      %v1380 = vpop.f32.mrb[0].mxu0
      %1381 = vmatprep.mubr.bf16.mxu0 0
      %1382 = vmatmul.mubr.bf16.gmra.mrb[0].mxu0 %v1248
      %v1383 = vpop.f32.mrb[0].mxu0
      %v1384 = vadd.f32 0.0, %v1383
      %v1385 = vpop.f32.mrb[0].mxu0
      %v1386 = vpop.f32.mrb[0].mxu0
      %v1387 = vadd.f32 0.0, %v1386
      %v1388 = vpop.f32.mrb[0].mxu0
      %1389 = vmatprep.mubr.bf16.mxu0 0
      %1390 = vmatmul.mubr.bf16.gmra.mrb[0].mxu0 %v1249
      %v1391 = vpop.f32.mrb[0].mxu0
      %v1392 = vadd.f32 0.0, %v1391
      %v1393 = vpop.f32.mrb[0].mxu0
      %v1394 = vpop.f32.mrb[0].mxu0
      %v1395 = vadd.f32 0.0, %v1394
      %v1396 = vpop.f32.mrb[0].mxu0
      %1397 = vmatprep.mubr.bf16.mxu0 0
      %1398 = vmatmul.mubr.bf16.gmra.mrb[0].mxu0 %v1250
      %v1399 = vpop.f32.mrb[0].mxu0
      %v1400 = vadd.f32 0.0, %v1399
      %v1401 = vpop.f32.mrb[0].mxu0
      %v1402 = vpop.f32.mrb[0].mxu0
      %v1403 = vadd.f32 0.0, %v1402
      %v1404 = vpop.f32.mrb[0].mxu0
      %1405 = vmatprep.mubr.bf16.mxu0 0
      %1406 = vmatmul.mubr.bf16.gmra.mrb[0].mxu0 %v1251
      %v1407 = vpop.f32.mrb[0].mxu0
      %v1408 = vadd.f32 0.0, %v1407
      %v1409 = vpop.f32.mrb[0].mxu0
      %v1410 = vpop.f32.mrb[0].mxu0
      %v1411 = vadd.f32 0.0, %v1410
      %v1412 = vpop.f32.mrb[0].mxu0
      %1413 = vdwg.mxu0
      %v1414 = vadd.f32 %v1212, %v1352
      %v1415 = vadd.f32 %v1213, %v1355
      %v1416 = vadd.f32 %v1214, %v1360
      %v1417 = vadd.f32 %v1215, %v1363
      %v1418 = vadd.f32 %v1216, %v1368
      %v1419 = vadd.f32 %v1217, %v1371
      %v1420 = vadd.f32 %v1218, %v1376
      %v1421 = vadd.f32 %v1219, %v1379
      %v1422 = vadd.f32 %v1220, %v1384
      %v1423 = vadd.f32 %v1221, %v1387
      %v1424 = vadd.f32 %v1222, %v1392
      %v1425 = vadd.f32 %v1223, %v1395
      %v1426 = vadd.f32 %v1224, %v1400
      %v1427 = vadd.f32 %v1225, %v1403
      %v1428 = vadd.f32 %v1226, %v1408
      %v1429 = vadd.f32 %v1227, %v1411
      %s1430 = sadd.s32 %s245, 2
      %s1431 = smul.u32 %s1430, 24
      %s1432 = scalar_lea.vmem %s224, %s1431
      %v1433 = vld [vmem:[%s1432] sm:$0xff]
      %v1434 = vld [vmem:[%s1432 + $0x8] sm:$0xff]
      %v1435 = vld [vmem:[%s1432 + $0x18] sm:$0xff]
      %v1436 = vld [vmem:[%s1432 + $0x20] sm:$0xff]
      %v1437 = vld [vmem:[%s1432 + $0x30] sm:$0xff]
      %v1438 = vld [vmem:[%s1432 + $0x38] sm:$0xff]
      %v1439 = vld [vmem:[%s1432 + $0x48] sm:$0xff]
      %v1440 = vld [vmem:[%s1432 + $0x50] sm:$0xff]
      %v1441 = vld [vmem:[%s1432 + $0x60] sm:$0xff]
      %v1442 = vld [vmem:[%s1432 + $0x68] sm:$0xff]
      %v1443 = vld [vmem:[%s1432 + $0x78] sm:$0xff]
      %v1444 = vld [vmem:[%s1432 + $0x80] sm:$0xff]
      %v1445 = vld [vmem:[%s1432 + $0x90] sm:$0xff]
      %v1446 = vld [vmem:[%s1432 + $0x98] sm:$0xff]
      %v1447 = vld [vmem:[%s1432 + $0xa8] sm:$0xff]
      %v1448 = vld [vmem:[%s1432 + $0xb0] sm:$0xff]
      %v1449 = vpack.c.bf16 %v1434, %v1433
      %v1450 = vpack.c.bf16 %v1436, %v1435
      %v1451 = vpack.c.bf16 %v1438, %v1437
      %v1452 = vpack.c.bf16 %v1440, %v1439
      %v1453 = vpack.c.bf16 %v1442, %v1441
      %v1454 = vpack.c.bf16 %v1444, %v1443
      %v1455 = vpack.c.bf16 %v1446, %v1445
      %v1456 = vpack.c.bf16 %v1448, %v1447
      %s1457 = scalar_lea.vmem %s1, 384
      %v1458 = vld [vmem:[%s1457] sm:$0xf]
      %v1459 = vld [vmem:[%s1457 + $0x4] sm:$0xf]
      %v1460 = vld [vmem:[%s1457 + $0x8] sm:$0xf]
      %v1461 = vld [vmem:[%s1457 + $0xc] sm:$0xf]
      %v1462 = vld [vmem:[%s1457 + $0x10] sm:$0xf]
      %v1463 = vld [vmem:[%s1457 + $0x14] sm:$0xf]
      %v1464 = vld [vmem:[%s1457 + $0x18] sm:$0xf]
      %v1465 = vld [vmem:[%s1457 + $0x1c] sm:$0xf]
      %v1466 = vld [vmem:[%s1457 + $0x20] sm:$0xf]
      %v1467 = vld [vmem:[%s1457 + $0x24] sm:$0xf]
      %v1468 = vld [vmem:[%s1457 + $0x28] sm:$0xf]
      %v1469 = vld [vmem:[%s1457 + $0x2c] sm:$0xf]
      %v1470 = vld [vmem:[%s1457 + $0x30] sm:$0xf]
      %v1471 = vld [vmem:[%s1457 + $0x34] sm:$0xf]
      %v1472 = vld [vmem:[%s1457 + $0x38] sm:$0xf]
      %v1473 = vld [vmem:[%s1457 + $0x3c] sm:$0xf]
      %v1490 = vunpack.c.l.b16 %v1458
      %v1491 = vunpack.c.l.b16 %v1459
      %v1492 = vunpack.c.l.b16 %v1460
      %v1493 = vunpack.c.l.b16 %v1461
      %v1494 = vunpack.c.l.b16 %v1462
      %v1495 = vunpack.c.l.b16 %v1463
      %v1496 = vunpack.c.l.b16 %v1464
      %v1497 = vunpack.c.l.b16 %v1465
      %v1498 = vunpack.c.l.b16 %v1466
      %v1499 = vunpack.c.l.b16 %v1467
      %v1500 = vunpack.c.l.b16 %v1468
      %v1501 = vunpack.c.l.b16 %v1469
      %v1502 = vunpack.c.l.b16 %v1470
      %v1503 = vunpack.c.l.b16 %v1471
      %v1504 = vunpack.c.l.b16 %v1472
      %v1505 = vunpack.c.l.b16 %v1473
      %v1506 = vpack.c.b16 %v1491, %v1490
      %v1507 = vpack.c.b16 %v1493, %v1492
      %v1508 = vpack.c.b16 %v1495, %v1494
      %v1509 = vpack.c.b16 %v1497, %v1496
      %v1510 = vpack.c.b16 %v1499, %v1498
      %v1511 = vpack.c.b16 %v1501, %v1500
      %v1512 = vpack.c.b16 %v1503, %v1502
      %v1513 = vpack.c.b16 %v1505, %v1504
      %1522 = vmatprep.subr.bf16.mxu0 0
      %1523 = vmatpush1.bf16.msra.mxu0 %v1506
      %1524 = vmatprep.subr.bf16.mxu0 0
      %1525 = vmatpush1.bf16.msra.mxu0 %v1507
      %1526 = vmatprep.subr.bf16.mxu0 0
      %1527 = vmatpush1.bf16.msra.mxu0 %v1508
      %1528 = vmatprep.subr.bf16.mxu0 0
      %1529 = vmatpush1.bf16.msra.mxu0 %v1509
      %1530 = vmatprep.subr.bf16.mxu0 0
      %1531 = vmatpush1.bf16.msra.mxu0 %v1510
      %1532 = vmatprep.subr.bf16.mxu0 0
      %1533 = vmatpush1.bf16.msra.mxu0 %v1511
      %1534 = vmatprep.subr.bf16.mxu0 0
      %1535 = vmatpush1.bf16.msra.mxu0 %v1512
      %1536 = vmatprep.subr.bf16.mxu0 0
      %1537 = vmatpush1.bf16.msra.mxu0 %v1513
      %1538 = vmatprep.subr.bf16.mxu0 0
      %1539 = vmatpush1.bf16.msra.mxu0 0
      %1540 = vmatprep.subr.bf16.mxu0 0
      %1541 = vmatpush1.bf16.msra.mxu0 0
      %1542 = vmatprep.subr.bf16.mxu0 0
      %1543 = vmatpush1.bf16.msra.mxu0 0
      %1544 = vmatprep.subr.bf16.mxu0 0
      %1545 = vmatpush1.bf16.msra.mxu0 0
      %1546 = vmatprep.subr.bf16.mxu0 0
      %1547 = vmatpush1.bf16.msra.mxu0 0
      %1548 = vmatprep.subr.bf16.mxu0 0
      %1549 = vmatpush1.bf16.msra.mxu0 0
      %1550 = vmatprep.subr.bf16.mxu0 0
      %1551 = vmatpush1.bf16.msra.mxu0 0
      %1552 = vmatprep.subr.bf16.mxu0 0
      %1553 = vmatpush1.bf16.msra.mxu0 0
      %1554 = vmatprep.mubr.bf16.mxu0 0
      %1555 = vmatmul.mubr.bf16.gmra.mrb[0].mxu0 %v1449
      %v1556 = vpop.f32.mrb[0].mxu0
      %v1557 = vadd.f32 0.0, %v1556
      %v1558 = vpop.f32.mrb[0].mxu0
      %v1559 = vpop.f32.mrb[0].mxu0
      %v1560 = vadd.f32 0.0, %v1559
      %v1561 = vpop.f32.mrb[0].mxu0
      %1562 = vmatprep.mubr.bf16.mxu0 0
      %1563 = vmatmul.mubr.bf16.gmra.mrb[0].mxu0 %v1450
      %v1564 = vpop.f32.mrb[0].mxu0
      %v1565 = vadd.f32 0.0, %v1564
      %v1566 = vpop.f32.mrb[0].mxu0
      %v1567 = vpop.f32.mrb[0].mxu0
      %v1568 = vadd.f32 0.0, %v1567
      %v1569 = vpop.f32.mrb[0].mxu0
      %1570 = vmatprep.mubr.bf16.mxu0 0
      %1571 = vmatmul.mubr.bf16.gmra.mrb[0].mxu0 %v1451
      %v1572 = vpop.f32.mrb[0].mxu0
      %v1573 = vadd.f32 0.0, %v1572
      %v1574 = vpop.f32.mrb[0].mxu0
      %v1575 = vpop.f32.mrb[0].mxu0
      %v1576 = vadd.f32 0.0, %v1575
      %v1577 = vpop.f32.mrb[0].mxu0
      %1578 = vmatprep.mubr.bf16.mxu0 0
      %1579 = vmatmul.mubr.bf16.gmra.mrb[0].mxu0 %v1452
      %v1580 = vpop.f32.mrb[0].mxu0
      %v1581 = vadd.f32 0.0, %v1580
      %v1582 = vpop.f32.mrb[0].mxu0
      %v1583 = vpop.f32.mrb[0].mxu0
      %v1584 = vadd.f32 0.0, %v1583
      %v1585 = vpop.f32.mrb[0].mxu0
      %1586 = vmatprep.mubr.bf16.mxu0 0
      %1587 = vmatmul.mubr.bf16.gmra.mrb[0].mxu0 %v1453
      %v1588 = vpop.f32.mrb[0].mxu0
      %v1589 = vadd.f32 0.0, %v1588
      %v1590 = vpop.f32.mrb[0].mxu0
      %v1591 = vpop.f32.mrb[0].mxu0
      %v1592 = vadd.f32 0.0, %v1591
      %v1593 = vpop.f32.mrb[0].mxu0
      %1594 = vmatprep.mubr.bf16.mxu0 0
      %1595 = vmatmul.mubr.bf16.gmra.mrb[0].mxu0 %v1454
      %v1596 = vpop.f32.mrb[0].mxu0
      %v1597 = vadd.f32 0.0, %v1596
      %v1598 = vpop.f32.mrb[0].mxu0
      %v1599 = vpop.f32.mrb[0].mxu0
      %v1600 = vadd.f32 0.0, %v1599
      %v1601 = vpop.f32.mrb[0].mxu0
      %1602 = vmatprep.mubr.bf16.mxu0 0
      %1603 = vmatmul.mubr.bf16.gmra.mrb[0].mxu0 %v1455
      %v1604 = vpop.f32.mrb[0].mxu0
      %v1605 = vadd.f32 0.0, %v1604
      %v1606 = vpop.f32.mrb[0].mxu0
      %v1607 = vpop.f32.mrb[0].mxu0
      %v1608 = vadd.f32 0.0, %v1607
      %v1609 = vpop.f32.mrb[0].mxu0
      %1610 = vmatprep.mubr.bf16.mxu0 0
      %1611 = vmatmul.mubr.bf16.gmra.mrb[0].mxu0 %v1456
      %v1612 = vpop.f32.mrb[0].mxu0
      %v1613 = vadd.f32 0.0, %v1612
      %v1614 = vpop.f32.mrb[0].mxu0
      %v1615 = vpop.f32.mrb[0].mxu0
      %v1616 = vadd.f32 0.0, %v1615
      %v1617 = vpop.f32.mrb[0].mxu0
      %1618 = vdwg.mxu0
      %v1619 = vadd.f32 %v1414, %v1557
      %v1620 = vadd.f32 %v1415, %v1560
      %v1621 = vadd.f32 %v1416, %v1565
      %v1622 = vadd.f32 %v1417, %v1568
      %v1623 = vadd.f32 %v1418, %v1573
      %v1624 = vadd.f32 %v1419, %v1576
      %v1625 = vadd.f32 %v1420, %v1581
      %v1626 = vadd.f32 %v1421, %v1584
      %v1627 = vadd.f32 %v1422, %v1589
      %v1628 = vadd.f32 %v1423, %v1592
      %v1629 = vadd.f32 %v1424, %v1597
      %v1630 = vadd.f32 %v1425, %v1600
      %v1631 = vadd.f32 %v1426, %v1605
      %v1632 = vadd.f32 %v1427, %v1608
      %v1633 = vadd.f32 %v1428, %v1613
      %v1634 = vadd.f32 %v1429, %v1616
      %v1635 = vld [vmem:[%s1432 + $0x1] sm:$0xff]
      %v1636 = vld [vmem:[%s1432 + $0x9] sm:$0xff]
      %v1637 = vld [vmem:[%s1432 + $0x19] sm:$0xff]
      %v1638 = vld [vmem:[%s1432 + $0x21] sm:$0xff]
      %v1639 = vld [vmem:[%s1432 + $0x31] sm:$0xff]
      %v1640 = vld [vmem:[%s1432 + $0x39] sm:$0xff]
      %v1641 = vld [vmem:[%s1432 + $0x49] sm:$0xff]
      %v1642 = vld [vmem:[%s1432 + $0x51] sm:$0xff]
      %v1643 = vld [vmem:[%s1432 + $0x61] sm:$0xff]
      %v1644 = vld [vmem:[%s1432 + $0x69] sm:$0xff]
      %v1645 = vld [vmem:[%s1432 + $0x79] sm:$0xff]
      %v1646 = vld [vmem:[%s1432 + $0x81] sm:$0xff]
      %v1647 = vld [vmem:[%s1432 + $0x91] sm:$0xff]
      %v1648 = vld [vmem:[%s1432 + $0x99] sm:$0xff]
      %v1649 = vld [vmem:[%s1432 + $0xa9] sm:$0xff]
      %v1650 = vld [vmem:[%s1432 + $0xb1] sm:$0xff]
      %v1651 = vpack.c.bf16 %v1636, %v1635
      %v1652 = vpack.c.bf16 %v1638, %v1637
      %v1653 = vpack.c.bf16 %v1640, %v1639
      %v1654 = vpack.c.bf16 %v1642, %v1641
      %v1655 = vpack.c.bf16 %v1644, %v1643
      %v1656 = vpack.c.bf16 %v1646, %v1645
      %v1657 = vpack.c.bf16 %v1648, %v1647
      %v1658 = vpack.c.bf16 %v1650, %v1649
      %s1659 = scalar_lea.vmem %s1, 448
      %v1660 = vld [vmem:[%s1659] sm:$0xf]
      %v1661 = vld [vmem:[%s1659 + $0x4] sm:$0xf]
      %v1662 = vld [vmem:[%s1659 + $0x8] sm:$0xf]
      %v1663 = vld [vmem:[%s1659 + $0xc] sm:$0xf]
      %v1664 = vld [vmem:[%s1659 + $0x10] sm:$0xf]
      %v1665 = vld [vmem:[%s1659 + $0x14] sm:$0xf]
      %v1666 = vld [vmem:[%s1659 + $0x18] sm:$0xf]
      %v1667 = vld [vmem:[%s1659 + $0x1c] sm:$0xf]
      %v1668 = vld [vmem:[%s1659 + $0x20] sm:$0xf]
      %v1669 = vld [vmem:[%s1659 + $0x24] sm:$0xf]
      %v1670 = vld [vmem:[%s1659 + $0x28] sm:$0xf]
      %v1671 = vld [vmem:[%s1659 + $0x2c] sm:$0xf]
      %v1672 = vld [vmem:[%s1659 + $0x30] sm:$0xf]
      %v1673 = vld [vmem:[%s1659 + $0x34] sm:$0xf]
      %v1674 = vld [vmem:[%s1659 + $0x38] sm:$0xf]
      %v1675 = vld [vmem:[%s1659 + $0x3c] sm:$0xf]
      %v1692 = vunpack.c.l.b16 %v1660
      %v1693 = vunpack.c.l.b16 %v1661
      %v1694 = vunpack.c.l.b16 %v1662
      %v1695 = vunpack.c.l.b16 %v1663
      %v1696 = vunpack.c.l.b16 %v1664
      %v1697 = vunpack.c.l.b16 %v1665
      %v1698 = vunpack.c.l.b16 %v1666
      %v1699 = vunpack.c.l.b16 %v1667
      %v1700 = vunpack.c.l.b16 %v1668
      %v1701 = vunpack.c.l.b16 %v1669
      %v1702 = vunpack.c.l.b16 %v1670
      %v1703 = vunpack.c.l.b16 %v1671
      %v1704 = vunpack.c.l.b16 %v1672
      %v1705 = vunpack.c.l.b16 %v1673
      %v1706 = vunpack.c.l.b16 %v1674
      %v1707 = vunpack.c.l.b16 %v1675
      %v1708 = vpack.c.b16 %v1693, %v1692
      %v1709 = vpack.c.b16 %v1695, %v1694
      %v1710 = vpack.c.b16 %v1697, %v1696
      %v1711 = vpack.c.b16 %v1699, %v1698
      %v1712 = vpack.c.b16 %v1701, %v1700
      %v1713 = vpack.c.b16 %v1703, %v1702
      %v1714 = vpack.c.b16 %v1705, %v1704
      %v1715 = vpack.c.b16 %v1707, %v1706
      %1724 = vmatprep.subr.bf16.mxu0 0
      %1725 = vmatpush1.bf16.msra.mxu0 %v1708
      %1726 = vmatprep.subr.bf16.mxu0 0
      %1727 = vmatpush1.bf16.msra.mxu0 %v1709
      %1728 = vmatprep.subr.bf16.mxu0 0
      %1729 = vmatpush1.bf16.msra.mxu0 %v1710
      %1730 = vmatprep.subr.bf16.mxu0 0
      %1731 = vmatpush1.bf16.msra.mxu0 %v1711
      %1732 = vmatprep.subr.bf16.mxu0 0
      %1733 = vmatpush1.bf16.msra.mxu0 %v1712
      %1734 = vmatprep.subr.bf16.mxu0 0
      %1735 = vmatpush1.bf16.msra.mxu0 %v1713
      %1736 = vmatprep.subr.bf16.mxu0 0
      %1737 = vmatpush1.bf16.msra.mxu0 %v1714
      %1738 = vmatprep.subr.bf16.mxu0 0
      %1739 = vmatpush1.bf16.msra.mxu0 %v1715
      %1740 = vmatprep.subr.bf16.mxu0 0
      %1741 = vmatpush1.bf16.msra.mxu0 0
      %1742 = vmatprep.subr.bf16.mxu0 0
      %1743 = vmatpush1.bf16.msra.mxu0 0
      %1744 = vmatprep.subr.bf16.mxu0 0
      %1745 = vmatpush1.bf16.msra.mxu0 0
      %1746 = vmatprep.subr.bf16.mxu0 0
      %1747 = vmatpush1.bf16.msra.mxu0 0
      %1748 = vmatprep.subr.bf16.mxu0 0
      %1749 = vmatpush1.bf16.msra.mxu0 0
      %1750 = vmatprep.subr.bf16.mxu0 0
      %1751 = vmatpush1.bf16.msra.mxu0 0
      %1752 = vmatprep.subr.bf16.mxu0 0
      %1753 = vmatpush1.bf16.msra.mxu0 0
      %1754 = vmatprep.subr.bf16.mxu0 0
      %1755 = vmatpush1.bf16.msra.mxu0 0
      %1756 = vmatprep.mubr.bf16.mxu0 0
      %1757 = vmatmul.mubr.bf16.gmra.mrb[0].mxu0 %v1651
      %v1758 = vpop.f32.mrb[0].mxu0
      %v1759 = vadd.f32 0.0, %v1758
      %v1760 = vpop.f32.mrb[0].mxu0
      %v1761 = vpop.f32.mrb[0].mxu0
      %v1762 = vadd.f32 0.0, %v1761
      %v1763 = vpop.f32.mrb[0].mxu0
      %1764 = vmatprep.mubr.bf16.mxu0 0
      %1765 = vmatmul.mubr.bf16.gmra.mrb[0].mxu0 %v1652
      %v1766 = vpop.f32.mrb[0].mxu0
      %v1767 = vadd.f32 0.0, %v1766
      %v1768 = vpop.f32.mrb[0].mxu0
      %v1769 = vpop.f32.mrb[0].mxu0
      %v1770 = vadd.f32 0.0, %v1769
      %v1771 = vpop.f32.mrb[0].mxu0
      %1772 = vmatprep.mubr.bf16.mxu0 0
      %1773 = vmatmul.mubr.bf16.gmra.mrb[0].mxu0 %v1653
      %v1774 = vpop.f32.mrb[0].mxu0
      %v1775 = vadd.f32 0.0, %v1774
      %v1776 = vpop.f32.mrb[0].mxu0
      %v1777 = vpop.f32.mrb[0].mxu0
      %v1778 = vadd.f32 0.0, %v1777
      %v1779 = vpop.f32.mrb[0].mxu0
      %1780 = vmatprep.mubr.bf16.mxu0 0
      %1781 = vmatmul.mubr.bf16.gmra.mrb[0].mxu0 %v1654
      %v1782 = vpop.f32.mrb[0].mxu0
      %v1783 = vadd.f32 0.0, %v1782
      %v1784 = vpop.f32.mrb[0].mxu0
      %v1785 = vpop.f32.mrb[0].mxu0
      %v1786 = vadd.f32 0.0, %v1785
      %v1787 = vpop.f32.mrb[0].mxu0
      %1788 = vmatprep.mubr.bf16.mxu0 0
      %1789 = vmatmul.mubr.bf16.gmra.mrb[0].mxu0 %v1655
      %v1790 = vpop.f32.mrb[0].mxu0
      %v1791 = vadd.f32 0.0, %v1790
      %v1792 = vpop.f32.mrb[0].mxu0
      %v1793 = vpop.f32.mrb[0].mxu0
      %v1794 = vadd.f32 0.0, %v1793
      %v1795 = vpop.f32.mrb[0].mxu0
      %1796 = vmatprep.mubr.bf16.mxu0 0
      %1797 = vmatmul.mubr.bf16.gmra.mrb[0].mxu0 %v1656
      %v1798 = vpop.f32.mrb[0].mxu0
      %v1799 = vadd.f32 0.0, %v1798
      %v1800 = vpop.f32.mrb[0].mxu0
      %v1801 = vpop.f32.mrb[0].mxu0
      %v1802 = vadd.f32 0.0, %v1801
      %v1803 = vpop.f32.mrb[0].mxu0
      %1804 = vmatprep.mubr.bf16.mxu0 0
      %1805 = vmatmul.mubr.bf16.gmra.mrb[0].mxu0 %v1657
      %v1806 = vpop.f32.mrb[0].mxu0
      %v1807 = vadd.f32 0.0, %v1806
      %v1808 = vpop.f32.mrb[0].mxu0
      %v1809 = vpop.f32.mrb[0].mxu0
      %v1810 = vadd.f32 0.0, %v1809
      %v1811 = vpop.f32.mrb[0].mxu0
      %1812 = vmatprep.mubr.bf16.mxu0 0
      %1813 = vmatmul.mubr.bf16.gmra.mrb[0].mxu0 %v1658
      %v1814 = vpop.f32.mrb[0].mxu0
      %v1815 = vadd.f32 0.0, %v1814
      %v1816 = vpop.f32.mrb[0].mxu0
      %v1817 = vpop.f32.mrb[0].mxu0
      %v1818 = vadd.f32 0.0, %v1817
      %v1819 = vpop.f32.mrb[0].mxu0
      %1820 = vdwg.mxu0
      %v1821 = vadd.f32 %v1619, %v1759
      %v1822 = vadd.f32 %v1620, %v1762
      %v1823 = vadd.f32 %v1621, %v1767
      %v1824 = vadd.f32 %v1622, %v1770
      %v1825 = vadd.f32 %v1623, %v1775
      %v1826 = vadd.f32 %v1624, %v1778
      %v1827 = vadd.f32 %v1625, %v1783
      %v1828 = vadd.f32 %v1626, %v1786
      %v1829 = vadd.f32 %v1627, %v1791
      %v1830 = vadd.f32 %v1628, %v1794
      %v1831 = vadd.f32 %v1629, %v1799
      %v1832 = vadd.f32 %v1630, %v1802
      %v1833 = vadd.f32 %v1631, %v1807
      %v1834 = vadd.f32 %v1632, %v1810
      %v1835 = vadd.f32 %v1633, %v1815
      %v1836 = vadd.f32 %v1634, %v1818
      %v1837 = vld [vmem:[%s1432 + $0x2] sm:$0xff]
      %v1838 = vld [vmem:[%s1432 + $0xa] sm:$0xff]
      %v1839 = vld [vmem:[%s1432 + $0x1a] sm:$0xff]
      %v1840 = vld [vmem:[%s1432 + $0x22] sm:$0xff]
      %v1841 = vld [vmem:[%s1432 + $0x32] sm:$0xff]
      %v1842 = vld [vmem:[%s1432 + $0x3a] sm:$0xff]
      %v1843 = vld [vmem:[%s1432 + $0x4a] sm:$0xff]
      %v1844 = vld [vmem:[%s1432 + $0x52] sm:$0xff]
      %v1845 = vld [vmem:[%s1432 + $0x62] sm:$0xff]
      %v1846 = vld [vmem:[%s1432 + $0x6a] sm:$0xff]
      %v1847 = vld [vmem:[%s1432 + $0x7a] sm:$0xff]
      %v1848 = vld [vmem:[%s1432 + $0x82] sm:$0xff]
      %v1849 = vld [vmem:[%s1432 + $0x92] sm:$0xff]
      %v1850 = vld [vmem:[%s1432 + $0x9a] sm:$0xff]
      %v1851 = vld [vmem:[%s1432 + $0xaa] sm:$0xff]
      %v1852 = vld [vmem:[%s1432 + $0xb2] sm:$0xff]
      %v1853 = vpack.c.bf16 %v1838, %v1837
      %v1854 = vpack.c.bf16 %v1840, %v1839
      %v1855 = vpack.c.bf16 %v1842, %v1841
      %v1856 = vpack.c.bf16 %v1844, %v1843
      %v1857 = vpack.c.bf16 %v1846, %v1845
      %v1858 = vpack.c.bf16 %v1848, %v1847
      %v1859 = vpack.c.bf16 %v1850, %v1849
      %v1860 = vpack.c.bf16 %v1852, %v1851
      %s1861 = scalar_lea.vmem %s1, 512
      %v1862 = vld [vmem:[%s1861] sm:$0xf]
      %v1863 = vld [vmem:[%s1861 + $0x4] sm:$0xf]
      %v1864 = vld [vmem:[%s1861 + $0x8] sm:$0xf]
      %v1865 = vld [vmem:[%s1861 + $0xc] sm:$0xf]
      %v1866 = vld [vmem:[%s1861 + $0x10] sm:$0xf]
      %v1867 = vld [vmem:[%s1861 + $0x14] sm:$0xf]
      %v1868 = vld [vmem:[%s1861 + $0x18] sm:$0xf]
      %v1869 = vld [vmem:[%s1861 + $0x1c] sm:$0xf]
      %v1870 = vld [vmem:[%s1861 + $0x20] sm:$0xf]
      %v1871 = vld [vmem:[%s1861 + $0x24] sm:$0xf]
      %v1872 = vld [vmem:[%s1861 + $0x28] sm:$0xf]
      %v1873 = vld [vmem:[%s1861 + $0x2c] sm:$0xf]
      %v1874 = vld [vmem:[%s1861 + $0x30] sm:$0xf]
      %v1875 = vld [vmem:[%s1861 + $0x34] sm:$0xf]
      %v1876 = vld [vmem:[%s1861 + $0x38] sm:$0xf]
      %v1877 = vld [vmem:[%s1861 + $0x3c] sm:$0xf]
      %v1894 = vunpack.c.l.b16 %v1862
      %v1895 = vunpack.c.l.b16 %v1863
      %v1896 = vunpack.c.l.b16 %v1864
      %v1897 = vunpack.c.l.b16 %v1865
      %v1898 = vunpack.c.l.b16 %v1866
      %v1899 = vunpack.c.l.b16 %v1867
      %v1900 = vunpack.c.l.b16 %v1868
      %v1901 = vunpack.c.l.b16 %v1869
      %v1902 = vunpack.c.l.b16 %v1870
      %v1903 = vunpack.c.l.b16 %v1871
      %v1904 = vunpack.c.l.b16 %v1872
      %v1905 = vunpack.c.l.b16 %v1873
      %v1906 = vunpack.c.l.b16 %v1874
      %v1907 = vunpack.c.l.b16 %v1875
      %v1908 = vunpack.c.l.b16 %v1876
      %v1909 = vunpack.c.l.b16 %v1877
      %v1910 = vpack.c.b16 %v1895, %v1894
      %v1911 = vpack.c.b16 %v1897, %v1896
      %v1912 = vpack.c.b16 %v1899, %v1898
      %v1913 = vpack.c.b16 %v1901, %v1900
      %v1914 = vpack.c.b16 %v1903, %v1902
      %v1915 = vpack.c.b16 %v1905, %v1904
      %v1916 = vpack.c.b16 %v1907, %v1906
      %v1917 = vpack.c.b16 %v1909, %v1908
      %1926 = vmatprep.subr.bf16.mxu0 0
      %1927 = vmatpush1.bf16.msra.mxu0 %v1910
      %1928 = vmatprep.subr.bf16.mxu0 0
      %1929 = vmatpush1.bf16.msra.mxu0 %v1911
      %1930 = vmatprep.subr.bf16.mxu0 0
      %1931 = vmatpush1.bf16.msra.mxu0 %v1912
      %1932 = vmatprep.subr.bf16.mxu0 0
      %1933 = vmatpush1.bf16.msra.mxu0 %v1913
      %1934 = vmatprep.subr.bf16.mxu0 0
      %1935 = vmatpush1.bf16.msra.mxu0 %v1914
      %1936 = vmatprep.subr.bf16.mxu0 0
      %1937 = vmatpush1.bf16.msra.mxu0 %v1915
      %1938 = vmatprep.subr.bf16.mxu0 0
      %1939 = vmatpush1.bf16.msra.mxu0 %v1916
      %1940 = vmatprep.subr.bf16.mxu0 0
      %1941 = vmatpush1.bf16.msra.mxu0 %v1917
      %1942 = vmatprep.subr.bf16.mxu0 0
      %1943 = vmatpush1.bf16.msra.mxu0 0
      %1944 = vmatprep.subr.bf16.mxu0 0
      %1945 = vmatpush1.bf16.msra.mxu0 0
      %1946 = vmatprep.subr.bf16.mxu0 0
      %1947 = vmatpush1.bf16.msra.mxu0 0
      %1948 = vmatprep.subr.bf16.mxu0 0
      %1949 = vmatpush1.bf16.msra.mxu0 0
      %1950 = vmatprep.subr.bf16.mxu0 0
      %1951 = vmatpush1.bf16.msra.mxu0 0
      %1952 = vmatprep.subr.bf16.mxu0 0
      %1953 = vmatpush1.bf16.msra.mxu0 0
      %1954 = vmatprep.subr.bf16.mxu0 0
      %1955 = vmatpush1.bf16.msra.mxu0 0
      %1956 = vmatprep.subr.bf16.mxu0 0
      %1957 = vmatpush1.bf16.msra.mxu0 0
      %1958 = vmatprep.mubr.bf16.mxu0 0
      %1959 = vmatmul.mubr.bf16.gmra.mrb[0].mxu0 %v1853
      %v1960 = vpop.f32.mrb[0].mxu0
      %v1961 = vadd.f32 0.0, %v1960
      %v1962 = vpop.f32.mrb[0].mxu0
      %v1963 = vpop.f32.mrb[0].mxu0
      %v1964 = vadd.f32 0.0, %v1963
      %v1965 = vpop.f32.mrb[0].mxu0
      %1966 = vmatprep.mubr.bf16.mxu0 0
      %1967 = vmatmul.mubr.bf16.gmra.mrb[0].mxu0 %v1854
      %v1968 = vpop.f32.mrb[0].mxu0
      %v1969 = vadd.f32 0.0, %v1968
      %v1970 = vpop.f32.mrb[0].mxu0
      %v1971 = vpop.f32.mrb[0].mxu0
      %v1972 = vadd.f32 0.0, %v1971
      %v1973 = vpop.f32.mrb[0].mxu0
      %1974 = vmatprep.mubr.bf16.mxu0 0
      %1975 = vmatmul.mubr.bf16.gmra.mrb[0].mxu0 %v1855
      %v1976 = vpop.f32.mrb[0].mxu0
      %v1977 = vadd.f32 0.0, %v1976
      %v1978 = vpop.f32.mrb[0].mxu0
      %v1979 = vpop.f32.mrb[0].mxu0
      %v1980 = vadd.f32 0.0, %v1979
      %v1981 = vpop.f32.mrb[0].mxu0
      %1982 = vmatprep.mubr.bf16.mxu0 0
      %1983 = vmatmul.mubr.bf16.gmra.mrb[0].mxu0 %v1856
      %v1984 = vpop.f32.mrb[0].mxu0
      %v1985 = vadd.f32 0.0, %v1984
      %v1986 = vpop.f32.mrb[0].mxu0
      %v1987 = vpop.f32.mrb[0].mxu0
      %v1988 = vadd.f32 0.0, %v1987
      %v1989 = vpop.f32.mrb[0].mxu0
      %1990 = vmatprep.mubr.bf16.mxu0 0
      %1991 = vmatmul.mubr.bf16.gmra.mrb[0].mxu0 %v1857
      %v1992 = vpop.f32.mrb[0].mxu0
      %v1993 = vadd.f32 0.0, %v1992
      %v1994 = vpop.f32.mrb[0].mxu0
      %v1995 = vpop.f32.mrb[0].mxu0
      %v1996 = vadd.f32 0.0, %v1995
      %v1997 = vpop.f32.mrb[0].mxu0
      %1998 = vmatprep.mubr.bf16.mxu0 0
      %1999 = vmatmul.mubr.bf16.gmra.mrb[0].mxu0 %v1858
      %v2000 = vpop.f32.mrb[0].mxu0
      %v2001 = vadd.f32 0.0, %v2000
      %v2002 = vpop.f32.mrb[0].mxu0
      %v2003 = vpop.f32.mrb[0].mxu0
      %v2004 = vadd.f32 0.0, %v2003
      %v2005 = vpop.f32.mrb[0].mxu0
      %2006 = vmatprep.mubr.bf16.mxu0 0
      %2007 = vmatmul.mubr.bf16.gmra.mrb[0].mxu0 %v1859
      %v2008 = vpop.f32.mrb[0].mxu0
      %v2009 = vadd.f32 0.0, %v2008
      %v2010 = vpop.f32.mrb[0].mxu0
      %v2011 = vpop.f32.mrb[0].mxu0
      %v2012 = vadd.f32 0.0, %v2011
      %v2013 = vpop.f32.mrb[0].mxu0
      %2014 = vmatprep.mubr.bf16.mxu0 0
      %2015 = vmatmul.mubr.bf16.gmra.mrb[0].mxu0 %v1860
      %v2016 = vpop.f32.mrb[0].mxu0
      %v2017 = vadd.f32 0.0, %v2016
      %v2018 = vpop.f32.mrb[0].mxu0
      %v2019 = vpop.f32.mrb[0].mxu0
      %v2020 = vadd.f32 0.0, %v2019
      %v2021 = vpop.f32.mrb[0].mxu0
      %2022 = vdwg.mxu0
      %v2023 = vadd.f32 %v1821, %v1961
      %v2024 = vadd.f32 %v1822, %v1964
      %v2025 = vadd.f32 %v1823, %v1969
      %v2026 = vadd.f32 %v1824, %v1972
      %v2027 = vadd.f32 %v1825, %v1977
      %v2028 = vadd.f32 %v1826, %v1980
      %v2029 = vadd.f32 %v1827, %v1985
      %v2030 = vadd.f32 %v1828, %v1988
      %v2031 = vadd.f32 %v1829, %v1993
      %v2032 = vadd.f32 %v1830, %v1996
      %v2033 = vadd.f32 %v1831, %v2001
      %v2034 = vadd.f32 %v1832, %v2004
      %v2035 = vadd.f32 %v1833, %v2009
      %v2036 = vadd.f32 %v1834, %v2012
      %v2037 = vadd.f32 %v1835, %v2017
      %v2038 = vadd.f32 %v1836, %v2020
      %v2039 = vld [vmem:[%s2] sm:$0x1]
      %v2041 = vlaneseq
      %v2042 = vshrl.u32 %v2041, 7
      %v2043 = vsub.s32 0, %v2042
      %v2044 = vrot.slane %v2039, %v2043
      %v2046 = vadd.f32 %v2023, %v2044
      %v2047 = vadd.f32 %v2024, %v2044
      %v2048 = vadd.f32 %v2025, %v2044
      %v2049 = vadd.f32 %v2026, %v2044
      %v2050 = vadd.f32 %v2027, %v2044
      %v2051 = vadd.f32 %v2028, %v2044
      %v2052 = vadd.f32 %v2029, %v2044
      %v2053 = vadd.f32 %v2030, %v2044
      %v2054 = vadd.f32 %v2031, %v2044
      %v2055 = vadd.f32 %v2032, %v2044
      %v2056 = vadd.f32 %v2033, %v2044
      %v2057 = vadd.f32 %v2034, %v2044
      %v2058 = vadd.f32 %v2035, %v2044
      %v2059 = vadd.f32 %v2036, %v2044
      %v2060 = vadd.f32 %v2037, %v2044
      %v2061 = vadd.f32 %v2038, %v2044
      %2062 = vst [vmem:[%s234] sm:$0xff] %v2046
      %2063 = vst [vmem:[%s234 + $0x8] sm:$0xff] %v2047
      %2064 = vst [vmem:[%s234 + $0x10] sm:$0xff] %v2048
      %2065 = vst [vmem:[%s234 + $0x18] sm:$0xff] %v2049
      %2066 = vst [vmem:[%s234 + $0x20] sm:$0xff] %v2050
      %2067 = vst [vmem:[%s234 + $0x28] sm:$0xff] %v2051
      %2068 = vst [vmem:[%s234 + $0x30] sm:$0xff] %v2052
      %2069 = vst [vmem:[%s234 + $0x38] sm:$0xff] %v2053
      %2070 = vst [vmem:[%s234 + $0x40] sm:$0xff] %v2054
      %2071 = vst [vmem:[%s234 + $0x48] sm:$0xff] %v2055
      %2072 = vst [vmem:[%s234 + $0x50] sm:$0xff] %v2056
      %2073 = vst [vmem:[%s234 + $0x58] sm:$0xff] %v2057
      %2074 = vst [vmem:[%s234 + $0x60] sm:$0xff] %v2058
      %2075 = vst [vmem:[%s234 + $0x68] sm:$0xff] %v2059
      %2076 = vst [vmem:[%s234 + $0x70] sm:$0xff] %v2060
      %2077 = vst [vmem:[%s234 + $0x78] sm:$0xff] %v2061
      %v2078 = vadd.f32 %v2046, %v2047
      %v2079 = vadd.f32 %v2078, %v2048
      %v2080 = vadd.f32 %v2079, %v2049
      %v2081 = vadd.f32 %v2080, %v2050
      %v2082 = vadd.f32 %v2081, %v2051
      %v2083 = vadd.f32 %v2082, %v2052
      %v2084 = vadd.f32 %v2083, %v2053
      %v2085 = vadd.f32 %v2084, %v2054
      %v2086 = vadd.f32 %v2085, %v2055
      %v2087 = vadd.f32 %v2086, %v2056
      %v2088 = vadd.f32 %v2087, %v2057
      %v2089 = vadd.f32 %v2088, %v2058
      %v2090 = vadd.f32 %v2089, %v2059
      %v2091 = vadd.f32 %v2090, %v2060
      %v2092 = vadd.f32 %v2091, %v2061
      %v2093 = vrot.slane %v2092, 4
      %v2094 = vadd.f32 %v2092, %v2093
      %v2095 = vrot.slane %v2094, 2
      %v2096 = vadd.f32 %v2094, %v2095
      %v2097 = vrot.slane %v2096, 1
      %v2098 = vadd.f32 %v2096, %v2097
      %2099 = vst [vmem:[%s243] sm:$0x1] %v2098
      %v2100 = vmul.f32 %v2046, %v2046
      %v2101 = vmul.f32 %v2047, %v2047
      %v2102 = vmul.f32 %v2048, %v2048
      %v2103 = vmul.f32 %v2049, %v2049
      %v2104 = vmul.f32 %v2050, %v2050
      %v2105 = vmul.f32 %v2051, %v2051
      %v2106 = vmul.f32 %v2052, %v2052
      %v2107 = vmul.f32 %v2053, %v2053
      %v2108 = vmul.f32 %v2054, %v2054
      %v2109 = vmul.f32 %v2055, %v2055
      %v2110 = vmul.f32 %v2056, %v2056
      %v2111 = vmul.f32 %v2057, %v2057
      %v2112 = vmul.f32 %v2058, %v2058
      %v2113 = vmul.f32 %v2059, %v2059
      %v2114 = vmul.f32 %v2060, %v2060
      %v2115 = vmul.f32 %v2061, %v2061
      %v2116 = vadd.f32 %v2100, %v2101
      %v2117 = vadd.f32 %v2116, %v2102
      %v2118 = vadd.f32 %v2117, %v2103
      %v2119 = vadd.f32 %v2118, %v2104
      %v2120 = vadd.f32 %v2119, %v2105
      %v2121 = vadd.f32 %v2120, %v2106
      %v2122 = vadd.f32 %v2121, %v2107
      %v2123 = vadd.f32 %v2122, %v2108
      %v2124 = vadd.f32 %v2123, %v2109
      %v2125 = vadd.f32 %v2124, %v2110
      %v2126 = vadd.f32 %v2125, %v2111
      %v2127 = vadd.f32 %v2126, %v2112
      %v2128 = vadd.f32 %v2127, %v2113
      %v2129 = vadd.f32 %v2128, %v2114
      %v2130 = vadd.f32 %v2129, %v2115
      %v2131 = vrot.slane %v2130, 4
      %v2132 = vadd.f32 %v2130, %v2131
      %v2133 = vrot.slane %v2132, 2
      %v2134 = vadd.f32 %v2132, %v2133
      %v2135 = vrot.slane %v2134, 1
      %v2136 = vadd.f32 %v2134, %v2135
      %2137 = vst [vmem:[%s243 + $0x1] sm:$0x1] %v2136
      %s2138 = smul.u32 8, %s21
      %p2139 = scmp.lt.s32.totalorder %s20, 1
      %s2140 = scalar_select %p2139, %s20, 1
      %p2141 = scmp.lt.s32.totalorder %s2138, 15
      %s2142 = scalar_select %p2141, %s2138, 15
      %s2143 = smul.addr %s2142, 2
      %s2144 = smul.addr %s2140, 32
      %s2145 = sadd.s32 %s2143, %s2144
      %s2146 = smul.addr %s2145, 8
      %s2147 = scalar_lea.vmem %s3, %s2146
      %p2148 = scmp.lt.s32.totalorder %s20, 1
      %s2149 = scalar_select %p2148, %s20, 1
      %p2150 = scmp.lt.s32.totalorder %s21, 1
      %s2151 = scalar_select %p2150, %s21, 1
      %s2152 = smul.addr %s2149, 2
      %s2153 = sadd.s32 %s2151, %s2152
      %s2154 = smul.addr %s2153, 2
      %s2155 = scalar_lea.vmem %s4, %s2154
      // Predicated region
      $region33: #{residual_block_pallas.6} parent=31 // pred_check
        %p2156 = pneg %p116
      $region34: #{residual_block_pallas.6} parent=31 // pred_check_branch
        %2158 = sbr.rel (%p2156) target = $region36
      $region35: #{residual_block_pallas.6} parent=31 // pred_region
        %s2159 = smul.u32 8, %s21
      $region36: #{residual_block_pallas.6} parent=31 // pred_fallthru
        _
      // Predicated region
      $region37: #{residual_block_pallas.6} parent=31 // pred_check
        %p2160 = pneg %p144
      $region38: #{residual_block_pallas.6} parent=31 // pred_check_branch
        %2162 = sbr.rel (%p2160) target = $region40
      $region39: #{residual_block_pallas.6} parent=31 // pred_region
        _
      $region40: #{residual_block_pallas.6} parent=31 // pred_fallthru
        _
    $region32: #{residual_block_pallas.6} parent=5 // pred_fallthru
      _
    %p2163 = scmp.le.s32.totalorder 2, %s11
    // Predicated region
    $region41: #{residual_block_pallas.6} parent=5 // pred_check
      %p2164 = pneg %p2163
    $region42: #{residual_block_pallas.6} parent=5 // pred_check_branch
      %2166 = sbr.rel (%p2164) target = $region44
    $region43: #{residual_block_pallas.6} parent=5 // pred_region
      %s2167 = ssub.s32 %s11, 2
      // Predicated region
      $region45: #{residual_block_pallas.6} parent=43 // pred_check
        %p2168 = pneg %p122
      $region46: #{residual_block_pallas.6} parent=43 // pred_check_branch
        %2170 = sbr.rel (%p2168) target = $region48
      $region47: #{residual_block_pallas.6} parent=43 // pred_region
        %s2171 = smul.u32 8, %s23
        %p2172 = scmp.lt.s32.totalorder %s22, 1
        %s2173 = scalar_select %p2172, %s22, 1
        %p2174 = scmp.lt.s32.totalorder %s2171, 15
        %s2175 = scalar_select %p2174, %s2171, 15
        %s2176 = smul.addr %s2175, 2
        %s2177 = smul.addr %s2173, 32
        %s2178 = sadd.s32 %s2176, %s2177
        %s2179 = smul.addr %s2178, 8
        %s2180 = scalar_lea.vmem %s3, %s2179
      $region48: #{residual_block_pallas.6} parent=43 // pred_fallthru
        _
      // Predicated region
      $region49: #{residual_block_pallas.6} parent=43 // pred_check
        %p2181 = pneg %p150
      $region50: #{residual_block_pallas.6} parent=43 // pred_check_branch
        %2183 = sbr.rel (%p2181) target = $region52
      $region51: #{residual_block_pallas.6} parent=43 // pred_region
        %p2184 = scmp.lt.s32.totalorder %s22, 1
        %s2185 = scalar_select %p2184, %s22, 1
        %p2186 = scmp.lt.s32.totalorder %s23, 1
        %s2187 = scalar_select %p2186, %s23, 1
        %s2188 = smul.addr %s2185, 2
        %s2189 = sadd.s32 %s2187, %s2188
        %s2190 = smul.addr %s2189, 2
        %s2191 = scalar_lea.vmem %s4, %s2190
      $region52: #{residual_block_pallas.6} parent=43 // pred_fallthru
        _
    $region44: #{residual_block_pallas.6} parent=5 // pred_fallthru
      _
  $region6: #{residual_block_pallas.6} parent=0 // loop_footer
    %s15 = sadd.s32 1, %s11
  $region7: #{residual_block_pallas.6} parent=0 // loop_footer_branch
    %10 = sbr.rel target = $region3
  $region8: #{residual_block_pallas.6} parent=0 // loop_exit
    _

</llo_original>
